<compile_context>
chip_gen: v6e
topology: v6e:2x2x1
jax: 0.10.0
libtpu: 0.0.40
codegen_flags: <defaults>
</compile_context>

<pallas_src>
import jax
import jax.numpy as jnp
from jax.experimental import pallas as pl
from jax.experimental.pallas import tpu as pltpu

DATA_DIM = 192
HIDDEN_DIM = 100
BATCH = 64

N_STEPS = 4              # linspace(0, 1, 5) -> 4 fixed RK4 steps
DT = 1.0 / N_STEPS       # 0.25
THIRD = 1.0 / 3.0
DT8 = DT * 0.125         # dt/8


def _rk4_step(y, f):
    """One 3/8-rule RK4 step (torchdiffeq rk4_alt_step_func).

    k1..k3 are folded into the output accumulator *before* the k4 matmuls so
    only (acc, arg4) stay live across them (cuts peak vreg liveness)."""
    k1 = f(y)
    k2 = f(y + (DT * THIRD) * k1)
    k3 = f(y + DT * (k2 - THIRD * k1))
    acc = y + DT8 * (k1 + 3.0 * (k2 + k3))     # everything except the k4 term
    arg4 = y + DT * (k1 - k2 + k3)
    k4 = f(arg4)
    return acc + DT8 * k4


def _rk4_step_pair(ya, yb, f):
    """Same step on two independent batch halves, interleaved per k-stage so
    the VLIW packer can overlap one half's matmul with the other's VPU work."""
    k1a = f(ya)
    k1b = f(yb)
    k2a = f(ya + (DT * THIRD) * k1a)
    k2b = f(yb + (DT * THIRD) * k1b)
    k3a = f(ya + DT * (k2a - THIRD * k1a))
    k3b = f(yb + DT * (k2b - THIRD * k1b))
    acca = ya + DT8 * (k1a + 3.0 * (k2a + k3a))
    accb = yb + DT8 * (k1b + 3.0 * (k2b + k3b))
    arg4a = ya + DT * (k1a - k2a + k3a)
    arg4b = yb + DT * (k1b - k2b + k3b)
    k4a = f(arg4a)
    k4b = f(arg4b)
    return acca + DT8 * k4a, accb + DT8 * k4b


def odenet_kernel(x_ref, w1_ref, b1_ref, w3_ref, b3_ref, o_ref):
    """Runs the full RK4 integration (4 steps x 4 ODEFunc evals) in-kernel."""
    tb, d = x_ref.shape
    hp = w1_ref.shape[1]

    # Weights stay resident (constant index maps); already bf16 from wrapper.
    w1 = w1_ref[...]
    w3 = w3_ref[...]

    def make_f(m):
        if tb <= 64:
            # Small tile: hoist the bias broadcasts once out of the 16 evals
            # (cheap vreg cost at m <= 64; JAX does not CSE broadcast_in_dim).
            b1 = jnp.broadcast_to(b1_ref[...], (m, hp))
            b3 = jnp.broadcast_to(b3_ref[...], (m, d))

            def f(y):
                # ODEFunc.forward: fc1 -> ReLU -> fc3 (fc2 unused in forward).
                # bf16 MXU operands, f32 accumulation; bias/ReLU in f32 (VPU).
                h = jnp.dot(y.astype(jnp.bfloat16), w1,
                            preferred_element_type=jnp.float32) + b1
                h = jnp.maximum(h, 0.0)
                return jnp.dot(h.astype(jnp.bfloat16), w3,
                               preferred_element_type=jnp.float32) + b3
        else:
            # Large tile: per-eval sublane-broadcast strided reads land on the
            # under-used vld slot instead of pinning (m,Hp)/(m,D) of vregs.
            def f(y):
                h = (jnp.dot(y.astype(jnp.bfloat16), w1,
                             preferred_element_type=jnp.float32)
                     + b1_ref[pl.ds(0, m, stride=0), :])
                h = jnp.maximum(h, 0.0)
                return (jnp.dot(h.astype(jnp.bfloat16), w3,
                                preferred_element_type=jnp.float32)
                        + b3_ref[pl.ds(0, m, stride=0), :])
        return f

    # Two independent half-tiles give the packer ILP (one half's MXU drain /
    # VPU epilogue hides under the other half's matmul).  Needs half % 8 == 0.
    if tb >= 16 and tb % 16 == 0:
        half = tb // 2
        f = make_f(half)
        ya = x_ref[pl.ds(0, half), :].astype(jnp.float32)
        yb = x_ref[pl.ds(half, half), :].astype(jnp.float32)
        # Short fixed trip count: keep the Python unroll (full LLO visibility).
        for _ in range(N_STEPS):
            ya, yb = _rk4_step_pair(ya, yb, f)
        o_ref[pl.ds(0, half), :] = ya.astype(o_ref.dtype)
        o_ref[pl.ds(half, half), :] = yb.astype(o_ref.dtype)
    else:
        f = make_f(tb)
        y = x_ref[...].astype(jnp.float32)
        for _ in range(N_STEPS):
            y = _rk4_step(y, f)
        o_ref[...] = y.astype(o_ref.dtype)


def _round_up(n, m):
    return ((n + m - 1) // m) * m


def _pad_axis(a, axis, new_size):
    if a.shape[axis] == new_size:
        return a
    pad = [(0, 0)] * a.ndim
    pad[axis] = (0, new_size - a.shape[axis])
    return jnp.pad(a, pad)


def _pick_batch_tile(bp):
    """Batch-tile heuristic (perf-review fix).

    * bp < 256  -> single program: splitting only adds ~0.35us/program of
      serial grid overhead on v5e/v6e, and a <128-row per-core tile does not
      pay for the v7x megacore split.
    * bp >= 256 -> 128- or 256-row tiles (whichever pads less), so every v7x
      TensorCore sees >= 128 rows and the MXU stays well fed.
    """
    if bp < 256:
        return bp
    waste128 = (-bp) % 128
    waste256 = (-bp) % 256
    return 128 if waste128 < waste256 else 256


def odenet_forward(x, w1, b1, w3, b3, *, batch_tile=None):
    """Pallas wrapper. x: (B, D) f32 -> (B, D) f32 == ODEBlock(ODEFunc)(x)."""
    B, D = x.shape
    H = w1.shape[1]
    assert w1.shape == (D, H) and b1.shape == (1, H)
    assert w3.shape == (H, D) and b3.shape == (1, D)

    # Zero-pad hidden dim to a lane-dense multiple of 128 (bit-identical math:
    # padded hidden units are ReLU(0 + 0) = 0 against zero rows of W3).
    Hp = _round_up(H, 128)
    w1p = _pad_axis(w1, 1, Hp).astype(jnp.bfloat16)   # MXU operands: bf16 once
    w3p = _pad_axis(w3, 0, Hp).astype(jnp.bfloat16)
    b1p = _pad_axis(b1, 1, Hp).astype(jnp.float32)    # biases stay f32
    b3p = b3.astype(jnp.float32)

    # Pad batch to a sublane multiple, pick the tile, then pad batch up to a
    # multiple of the tile (zero rows are bit-identical and trimmed below).
    Bp = _round_up(B, 8)
    tb = _pick_batch_tile(Bp) if batch_tile is None else batch_tile
    Bp = _round_up(Bp, tb)
    xp = _pad_axis(x.astype(jnp.float32), 0, Bp)

    # VMEM footprint (resident bf16 weights + double-buffered x/out tiles) is
    # well under the scoped default on v5e/v6e/v7x at any tile <= 256.
    out = pl.pallas_call(
        odenet_kernel,
        out_shape=jax.ShapeDtypeStruct((Bp, D), jnp.float32),
        grid=(Bp // tb,),
        in_specs=[
            pl.BlockSpec((tb, D), lambda i: (i, 0)),   # x tile over batch
            pl.BlockSpec((D, Hp), lambda i: (0, 0)),   # W1 (resident, bf16)
            pl.BlockSpec((1, Hp), lambda i: (0, 0)),   # b1
            pl.BlockSpec((Hp, D), lambda i: (0, 0)),   # W3 (resident, bf16)
            pl.BlockSpec((1, D), lambda i: (0, 0)),    # b3
        ],
        out_specs=pl.BlockSpec((tb, D), lambda i: (i, 0)),
        compiler_params=pltpu.CompilerParams(
            dimension_semantics=("parallel",)),        # shards tiles on v7x
    )(xp, w1p, b1p, w3p, b3p)

    return out[:B] if Bp != B else out


def odenet_reference(x, w1, b1, w3, b3, *, mxu_dtype=jnp.float32):
    """Pure-JAX reference. mxu_dtype=bfloat16 mirrors the kernel's MXU ops."""
    w1c = w1.astype(mxu_dtype)
    w3c = w3.astype(mxu_dtype)

    def f(y):
        h = jnp.dot(y.astype(mxu_dtype), w1c,
                    preferred_element_type=jnp.float32) + b1
        h = jnp.maximum(h, 0.0)
        return jnp.dot(h.astype(mxu_dtype), w3c,
                       preferred_element_type=jnp.float32) + b3

    y = x.astype(jnp.float32)
    for _ in range(N_STEPS):
        y = _rk4_step(y, f)
    return y


def init_params(key, data_dim, hidden_dim):
    """Deterministic init mimicking nn.Linear's U(-1/sqrt(fan_in), +...)."""
    k1, k2, k3, k4 = jax.random.split(key, 4)
    bound1 = 1.0 / jnp.sqrt(data_dim)
    bound3 = 1.0 / jnp.sqrt(hidden_dim)
    w1 = jax.random.uniform(k1, (data_dim, hidden_dim), jnp.float32,
                            -bound1, bound1)
    b1 = jax.random.uniform(k2, (1, hidden_dim), jnp.float32, -bound1, bound1)
    w3 = jax.random.uniform(k3, (hidden_dim, data_dim), jnp.float32,
                            -bound3, bound3)
    b3 = jax.random.uniform(k4, (1, data_dim), jnp.float32, -bound3, bound3)
    # TODO(synk): fc2 (hidden->hidden) is initialized in ODEFunc.__init__ but
    # never used in its forward pass, so it is intentionally omitted here.
    return w1, b1, w3, b3


if __name__ == "__main__":
    key = jax.random.PRNGKey(0)
    kx, kp = jax.random.split(key)

    x = jax.random.normal(kx, (BATCH, DATA_DIM), jnp.float32)
    w1, b1, w3, b3 = init_params(kp, DATA_DIM, HIDDEN_DIM)

    out = jax.block_until_ready(odenet_forward(x, w1, b1, w3, b3))
    assert out.shape == (BATCH, DATA_DIM)

    # Tight check vs. a reference that mirrors the kernel's bf16 MXU operands;
    # loose check vs. pure-f32 math (bf16 operand rounding is amplified over
    # the 16 chained ODEFunc evaluations).
    ref_bf16 = odenet_reference(x, w1, b1, w3, b3, mxu_dtype=jnp.bfloat16)
    ref_f32 = odenet_reference(x, w1, b1, w3, b3, mxu_dtype=jnp.float32)
    assert jnp.allclose(out, ref_bf16, atol=1e-2, rtol=1e-2), "mismatch vs bf16 ref"
    assert jnp.allclose(out, ref_f32, atol=5e-2, rtol=5e-2), "mismatch vs f32 ref"

    print("KERNEL_OK")
</pallas_src>

<mosaic_0001>
module attributes {stable_mosaic.version = 11 : i64} {
  func.func @odenet_kernel(%arg0: i32, %arg1: memref<64x192xf32, #tpu.memory_space<vmem>>, %arg2: memref<192x128xbf16, #tpu.memory_space<vmem>>, %arg3: memref<1x128xf32, #tpu.memory_space<vmem>>, %arg4: memref<128x192xbf16, #tpu.memory_space<vmem>>, %arg5: memref<1x192xf32, #tpu.memory_space<vmem>>, %arg6: memref<64x192xf32, #tpu.memory_space<vmem>>) attributes {dimension_semantics = [#tpu.dimension_semantics<parallel>], iteration_bounds = array<i64: 1>, scalar_prefetch = 0 : i64, scratch_operands = 0 : i64, tpu.core_type = #tpu.core_type<tc>, window_params = [{transform_indices = @transform_0, window_bounds = array<i64: 64, 192>}, {pipeline_mode = #tpu.pipeline_mode<synchronous>, transform_indices = @transform_1, window_bounds = array<i64: 192, 128>}, {pipeline_mode = #tpu.pipeline_mode<synchronous>, transform_indices = @transform_2, window_bounds = array<i64: 1, 128>}, {pipeline_mode = #tpu.pipeline_mode<synchronous>, transform_indices = @transform_3, window_bounds = array<i64: 128, 192>}, {pipeline_mode = #tpu.pipeline_mode<synchronous>, transform_indices = @transform_4, window_bounds = array<i64: 1, 192>}, {transform_indices = @transform_5, window_bounds = array<i64: 64, 192>}]} {
    %c0 = arith.constant 0 : index
    %c0_0 = arith.constant 0 : index
    %0 = vector.load %arg2[%c0, %c0_0] : memref<192x128xbf16, #tpu.memory_space<vmem>>, vector<192x128xbf16>
    %c0_1 = arith.constant 0 : index
    %c0_2 = arith.constant 0 : index
    %1 = vector.load %arg4[%c0_1, %c0_2] : memref<128x192xbf16, #tpu.memory_space<vmem>>, vector<128x192xbf16>
    %c0_3 = arith.constant 0 : index
    %c0_4 = arith.constant 0 : index
    %2 = vector.load %arg3[%c0_3, %c0_4] : memref<1x128xf32, #tpu.memory_space<vmem>>, vector<1x128xf32>
    %3 = vector.shape_cast %2 : vector<1x128xf32> to vector<1x128xf32>
    %4 = vector.broadcast %3 : vector<1x128xf32> to vector<32x128xf32>
    %c0_5 = arith.constant 0 : index
    %c0_6 = arith.constant 0 : index
    %5 = vector.load %arg5[%c0_5, %c0_6] : memref<1x192xf32, #tpu.memory_space<vmem>>, vector<1x192xf32>
    %6 = vector.shape_cast %5 : vector<1x192xf32> to vector<1x192xf32>
    %7 = vector.broadcast %6 : vector<1x192xf32> to vector<32x192xf32>
    %c0_7 = arith.constant 0 : index
    %c0_8 = arith.constant 0 : index
    %8 = vector.load %arg1[%c0_7, %c0_8] : memref<64x192xf32, #tpu.memory_space<vmem>>, vector<32x192xf32>
    %c32 = arith.constant 32 : index
    %c0_9 = arith.constant 0 : index
    %9 = vector.load %arg1[%c32, %c0_9] : memref<64x192xf32, #tpu.memory_space<vmem>>, vector<32x192xf32>
    %10 = arith.truncf %8 : vector<32x192xf32> to vector<32x192xbf16>
    %cst = arith.constant dense<0.000000e+00> : vector<32x128xf32>
    %11 = tpu.matmul %10, %0, %cst {dimension_numbers = #tpu.dot_dimension_numbers<[1], [0], [0], [1], [0, 0, 1, 1], [], []>} : vector<32x192xbf16>, vector<192x128xbf16>, vector<32x128xf32> -> vector<32x128xf32>
    %12 = arith.addf %11, %4 : vector<32x128xf32>
    %cst_10 = arith.constant 0.000000e+00 : f32
    %13 = vector.broadcast %cst_10 : f32 to vector<32x128xf32>
    %14 = arith.maximumf %12, %13 : vector<32x128xf32>
    %15 = arith.truncf %14 : vector<32x128xf32> to vector<32x128xbf16>
    %cst_11 = arith.constant dense<0.000000e+00> : vector<32x192xf32>
    %16 = tpu.matmul %15, %1, %cst_11 {dimension_numbers = #tpu.dot_dimension_numbers<[1], [0], [0], [1], [0, 0, 1, 1], [], []>} : vector<32x128xbf16>, vector<128x192xbf16>, vector<32x192xf32> -> vector<32x192xf32>
    %17 = arith.addf %16, %7 : vector<32x192xf32>
    %18 = arith.truncf %9 : vector<32x192xf32> to vector<32x192xbf16>
    %cst_12 = arith.constant dense<0.000000e+00> : vector<32x128xf32>
    %19 = tpu.matmul %18, %0, %cst_12 {dimension_numbers = #tpu.dot_dimension_numbers<[1], [0], [0], [1], [0, 0, 1, 1], [], []>} : vector<32x192xbf16>, vector<192x128xbf16>, vector<32x128xf32> -> vector<32x128xf32>
    %20 = arith.addf %19, %4 : vector<32x128xf32>
    %cst_13 = arith.constant 0.000000e+00 : f32
    %21 = vector.broadcast %cst_13 : f32 to vector<32x128xf32>
    %22 = arith.maximumf %20, %21 : vector<32x128xf32>
    %23 = arith.truncf %22 : vector<32x128xf32> to vector<32x128xbf16>
    %cst_14 = arith.constant dense<0.000000e+00> : vector<32x192xf32>
    %24 = tpu.matmul %23, %1, %cst_14 {dimension_numbers = #tpu.dot_dimension_numbers<[1], [0], [0], [1], [0, 0, 1, 1], [], []>} : vector<32x128xbf16>, vector<128x192xbf16>, vector<32x192xf32> -> vector<32x192xf32>
    %25 = arith.addf %24, %7 : vector<32x192xf32>
    %cst_15 = arith.constant 0.0833333358 : f32
    %26 = vector.broadcast %cst_15 : f32 to vector<32x192xf32>
    %27 = arith.mulf %26, %17 : vector<32x192xf32>
    %28 = arith.addf %8, %27 : vector<32x192xf32>
    %29 = arith.truncf %28 : vector<32x192xf32> to vector<32x192xbf16>
    %cst_16 = arith.constant dense<0.000000e+00> : vector<32x128xf32>
    %30 = tpu.matmul %29, %0, %cst_16 {dimension_numbers = #tpu.dot_dimension_numbers<[1], [0], [0], [1], [0, 0, 1, 1], [], []>} : vector<32x192xbf16>, vector<192x128xbf16>, vector<32x128xf32> -> vector<32x128xf32>
    %31 = arith.addf %30, %4 : vector<32x128xf32>
    %cst_17 = arith.constant 0.000000e+00 : f32
    %32 = vector.broadcast %cst_17 : f32 to vector<32x128xf32>
    %33 = arith.maximumf %31, %32 : vector<32x128xf32>
    %34 = arith.truncf %33 : vector<32x128xf32> to vector<32x128xbf16>
    %cst_18 = arith.constant dense<0.000000e+00> : vector<32x192xf32>
    %35 = tpu.matmul %34, %1, %cst_18 {dimension_numbers = #tpu.dot_dimension_numbers<[1], [0], [0], [1], [0, 0, 1, 1], [], []>} : vector<32x128xbf16>, vector<128x192xbf16>, vector<32x192xf32> -> vector<32x192xf32>
    %36 = arith.addf %35, %7 : vector<32x192xf32>
    %cst_19 = arith.constant 0.0833333358 : f32
    %37 = vector.broadcast %cst_19 : f32 to vector<32x192xf32>
    %38 = arith.mulf %37, %25 : vector<32x192xf32>
    %39 = arith.addf %9, %38 : vector<32x192xf32>
    %40 = arith.truncf %39 : vector<32x192xf32> to vector<32x192xbf16>
    %cst_20 = arith.constant dense<0.000000e+00> : vector<32x128xf32>
    %41 = tpu.matmul %40, %0, %cst_20 {dimension_numbers = #tpu.dot_dimension_numbers<[1], [0], [0], [1], [0, 0, 1, 1], [], []>} : vector<32x192xbf16>, vector<192x128xbf16>, vector<32x128xf32> -> vector<32x128xf32>
    %42 = arith.addf %41, %4 : vector<32x128xf32>
    %cst_21 = arith.constant 0.000000e+00 : f32
    %43 = vector.broadcast %cst_21 : f32 to vector<32x128xf32>
    %44 = arith.maximumf %42, %43 : vector<32x128xf32>
    %45 = arith.truncf %44 : vector<32x128xf32> to vector<32x128xbf16>
    %cst_22 = arith.constant dense<0.000000e+00> : vector<32x192xf32>
    %46 = tpu.matmul %45, %1, %cst_22 {dimension_numbers = #tpu.dot_dimension_numbers<[1], [0], [0], [1], [0, 0, 1, 1], [], []>} : vector<32x128xbf16>, vector<128x192xbf16>, vector<32x192xf32> -> vector<32x192xf32>
    %47 = arith.addf %46, %7 : vector<32x192xf32>
    %cst_23 = arith.constant 0.333333343 : f32
    %48 = vector.broadcast %cst_23 : f32 to vector<32x192xf32>
    %49 = arith.mulf %48, %17 : vector<32x192xf32>
    %50 = arith.subf %36, %49 : vector<32x192xf32>
    %cst_24 = arith.constant 2.500000e-01 : f32
    %51 = vector.broadcast %cst_24 : f32 to vector<32x192xf32>
    %52 = arith.mulf %51, %50 : vector<32x192xf32>
    %53 = arith.addf %8, %52 : vector<32x192xf32>
    %54 = arith.truncf %53 : vector<32x192xf32> to vector<32x192xbf16>
    %cst_25 = arith.constant dense<0.000000e+00> : vector<32x128xf32>
    %55 = tpu.matmul %54, %0, %cst_25 {dimension_numbers = #tpu.dot_dimension_numbers<[1], [0], [0], [1], [0, 0, 1, 1], [], []>} : vector<32x192xbf16>, vector<192x128xbf16>, vector<32x128xf32> -> vector<32x128xf32>
    %56 = arith.addf %55, %4 : vector<32x128xf32>
    %cst_26 = arith.constant 0.000000e+00 : f32
    %57 = vector.broadcast %cst_26 : f32 to vector<32x128xf32>
    %58 = arith.maximumf %56, %57 : vector<32x128xf32>
    %59 = arith.truncf %58 : vector<32x128xf32> to vector<32x128xbf16>
    %cst_27 = arith.constant dense<0.000000e+00> : vector<32x192xf32>
    %60 = tpu.matmul %59, %1, %cst_27 {dimension_numbers = #tpu.dot_dimension_numbers<[1], [0], [0], [1], [0, 0, 1, 1], [], []>} : vector<32x128xbf16>, vector<128x192xbf16>, vector<32x192xf32> -> vector<32x192xf32>
    %61 = arith.addf %60, %7 : vector<32x192xf32>
    %cst_28 = arith.constant 0.333333343 : f32
    %62 = vector.broadcast %cst_28 : f32 to vector<32x192xf32>
    %63 = arith.mulf %62, %25 : vector<32x192xf32>
    %64 = arith.subf %47, %63 : vector<32x192xf32>
    %cst_29 = arith.constant 2.500000e-01 : f32
    %65 = vector.broadcast %cst_29 : f32 to vector<32x192xf32>
    %66 = arith.mulf %65, %64 : vector<32x192xf32>
    %67 = arith.addf %9, %66 : vector<32x192xf32>
    %68 = arith.truncf %67 : vector<32x192xf32> to vector<32x192xbf16>
    %cst_30 = arith.constant dense<0.000000e+00> : vector<32x128xf32>
    %69 = tpu.matmul %68, %0, %cst_30 {dimension_numbers = #tpu.dot_dimension_numbers<[1], [0], [0], [1], [0, 0, 1, 1], [], []>} : vector<32x192xbf16>, vector<192x128xbf16>, vector<32x128xf32> -> vector<32x128xf32>
    %70 = arith.addf %69, %4 : vector<32x128xf32>
    %cst_31 = arith.constant 0.000000e+00 : f32
    %71 = vector.broadcast %cst_31 : f32 to vector<32x128xf32>
    %72 = arith.maximumf %70, %71 : vector<32x128xf32>
    %73 = arith.truncf %72 : vector<32x128xf32> to vector<32x128xbf16>
    %cst_32 = arith.constant dense<0.000000e+00> : vector<32x192xf32>
    %74 = tpu.matmul %73, %1, %cst_32 {dimension_numbers = #tpu.dot_dimension_numbers<[1], [0], [0], [1], [0, 0, 1, 1], [], []>} : vector<32x128xbf16>, vector<128x192xbf16>, vector<32x192xf32> -> vector<32x192xf32>
    %75 = arith.addf %74, %7 : vector<32x192xf32>
    %76 = arith.addf %36, %61 : vector<32x192xf32>
    %cst_33 = arith.constant 3.000000e+00 : f32
    %77 = vector.broadcast %cst_33 : f32 to vector<32x192xf32>
    %78 = arith.mulf %77, %76 : vector<32x192xf32>
    %79 = arith.addf %17, %78 : vector<32x192xf32>
    %cst_34 = arith.constant 3.125000e-02 : f32
    %80 = vector.broadcast %cst_34 : f32 to vector<32x192xf32>
    %81 = arith.mulf %80, %79 : vector<32x192xf32>
    %82 = arith.addf %8, %81 : vector<32x192xf32>
    %83 = arith.addf %47, %75 : vector<32x192xf32>
    %cst_35 = arith.constant 3.000000e+00 : f32
    %84 = vector.broadcast %cst_35 : f32 to vector<32x192xf32>
    %85 = arith.mulf %84, %83 : vector<32x192xf32>
    %86 = arith.addf %25, %85 : vector<32x192xf32>
    %cst_36 = arith.constant 3.125000e-02 : f32
    %87 = vector.broadcast %cst_36 : f32 to vector<32x192xf32>
    %88 = arith.mulf %87, %86 : vector<32x192xf32>
    %89 = arith.addf %9, %88 : vector<32x192xf32>
    %90 = arith.subf %17, %36 : vector<32x192xf32>
    %91 = arith.addf %90, %61 : vector<32x192xf32>
    %cst_37 = arith.constant 2.500000e-01 : f32
    %92 = vector.broadcast %cst_37 : f32 to vector<32x192xf32>
    %93 = arith.mulf %92, %91 : vector<32x192xf32>
    %94 = arith.addf %8, %93 : vector<32x192xf32>
    %95 = arith.subf %25, %47 : vector<32x192xf32>
    %96 = arith.addf %95, %75 : vector<32x192xf32>
    %cst_38 = arith.constant 2.500000e-01 : f32
    %97 = vector.broadcast %cst_38 : f32 to vector<32x192xf32>
    %98 = arith.mulf %97, %96 : vector<32x192xf32>
    %99 = arith.addf %9, %98 : vector<32x192xf32>
    %100 = arith.truncf %94 : vector<32x192xf32> to vector<32x192xbf16>
    %cst_39 = arith.constant dense<0.000000e+00> : vector<32x128xf32>
    %101 = tpu.matmul %100, %0, %cst_39 {dimension_numbers = #tpu.dot_dimension_numbers<[1], [0], [0], [1], [0, 0, 1, 1], [], []>} : vector<32x192xbf16>, vector<192x128xbf16>, vector<32x128xf32> -> vector<32x128xf32>
    %102 = arith.addf %101, %4 : vector<32x128xf32>
    %cst_40 = arith.constant 0.000000e+00 : f32
    %103 = vector.broadcast %cst_40 : f32 to vector<32x128xf32>
    %104 = arith.maximumf %102, %103 : vector<32x128xf32>
    %105 = arith.truncf %104 : vector<32x128xf32> to vector<32x128xbf16>
    %cst_41 = arith.constant dense<0.000000e+00> : vector<32x192xf32>
    %106 = tpu.matmul %105, %1, %cst_41 {dimension_numbers = #tpu.dot_dimension_numbers<[1], [0], [0], [1], [0, 0, 1, 1], [], []>} : vector<32x128xbf16>, vector<128x192xbf16>, vector<32x192xf32> -> vector<32x192xf32>
    %107 = arith.addf %106, %7 : vector<32x192xf32>
    %108 = arith.truncf %99 : vector<32x192xf32> to vector<32x192xbf16>
    %cst_42 = arith.constant dense<0.000000e+00> : vector<32x128xf32>
    %109 = tpu.matmul %108, %0, %cst_42 {dimension_numbers = #tpu.dot_dimension_numbers<[1], [0], [0], [1], [0, 0, 1, 1], [], []>} : vector<32x192xbf16>, vector<192x128xbf16>, vector<32x128xf32> -> vector<32x128xf32>
    %110 = arith.addf %109, %4 : vector<32x128xf32>
    %cst_43 = arith.constant 0.000000e+00 : f32
    %111 = vector.broadcast %cst_43 : f32 to vector<32x128xf32>
    %112 = arith.maximumf %110, %111 : vector<32x128xf32>
    %113 = arith.truncf %112 : vector<32x128xf32> to vector<32x128xbf16>
    %cst_44 = arith.constant dense<0.000000e+00> : vector<32x192xf32>
    %114 = tpu.matmul %113, %1, %cst_44 {dimension_numbers = #tpu.dot_dimension_numbers<[1], [0], [0], [1], [0, 0, 1, 1], [], []>} : vector<32x128xbf16>, vector<128x192xbf16>, vector<32x192xf32> -> vector<32x192xf32>
    %115 = arith.addf %114, %7 : vector<32x192xf32>
    %cst_45 = arith.constant 3.125000e-02 : f32
    %116 = vector.broadcast %cst_45 : f32 to vector<32x192xf32>
    %117 = arith.mulf %116, %107 : vector<32x192xf32>
    %118 = arith.addf %82, %117 : vector<32x192xf32>
    %cst_46 = arith.constant 3.125000e-02 : f32
    %119 = vector.broadcast %cst_46 : f32 to vector<32x192xf32>
    %120 = arith.mulf %119, %115 : vector<32x192xf32>
    %121 = arith.addf %89, %120 : vector<32x192xf32>
    %122 = arith.truncf %118 : vector<32x192xf32> to vector<32x192xbf16>
    %cst_47 = arith.constant dense<0.000000e+00> : vector<32x128xf32>
    %123 = tpu.matmul %122, %0, %cst_47 {dimension_numbers = #tpu.dot_dimension_numbers<[1], [0], [0], [1], [0, 0, 1, 1], [], []>} : vector<32x192xbf16>, vector<192x128xbf16>, vector<32x128xf32> -> vector<32x128xf32>
    %124 = arith.addf %123, %4 : vector<32x128xf32>
    %cst_48 = arith.constant 0.000000e+00 : f32
    %125 = vector.broadcast %cst_48 : f32 to vector<32x128xf32>
    %126 = arith.maximumf %124, %125 : vector<32x128xf32>
    %127 = arith.truncf %126 : vector<32x128xf32> to vector<32x128xbf16>
    %cst_49 = arith.constant dense<0.000000e+00> : vector<32x192xf32>
    %128 = tpu.matmul %127, %1, %cst_49 {dimension_numbers = #tpu.dot_dimension_numbers<[1], [0], [0], [1], [0, 0, 1, 1], [], []>} : vector<32x128xbf16>, vector<128x192xbf16>, vector<32x192xf32> -> vector<32x192xf32>
    %129 = arith.addf %128, %7 : vector<32x192xf32>
    %130 = arith.truncf %121 : vector<32x192xf32> to vector<32x192xbf16>
    %cst_50 = arith.constant dense<0.000000e+00> : vector<32x128xf32>
    %131 = tpu.matmul %130, %0, %cst_50 {dimension_numbers = #tpu.dot_dimension_numbers<[1], [0], [0], [1], [0, 0, 1, 1], [], []>} : vector<32x192xbf16>, vector<192x128xbf16>, vector<32x128xf32> -> vector<32x128xf32>
    %132 = arith.addf %131, %4 : vector<32x128xf32>
    %cst_51 = arith.constant 0.000000e+00 : f32
    %133 = vector.broadcast %cst_51 : f32 to vector<32x128xf32>
    %134 = arith.maximumf %132, %133 : vector<32x128xf32>
    %135 = arith.truncf %134 : vector<32x128xf32> to vector<32x128xbf16>
    %cst_52 = arith.constant dense<0.000000e+00> : vector<32x192xf32>
    %136 = tpu.matmul %135, %1, %cst_52 {dimension_numbers = #tpu.dot_dimension_numbers<[1], [0], [0], [1], [0, 0, 1, 1], [], []>} : vector<32x128xbf16>, vector<128x192xbf16>, vector<32x192xf32> -> vector<32x192xf32>
    %137 = arith.addf %136, %7 : vector<32x192xf32>
    %cst_53 = arith.constant 0.0833333358 : f32
    %138 = vector.broadcast %cst_53 : f32 to vector<32x192xf32>
    %139 = arith.mulf %138, %129 : vector<32x192xf32>
    %140 = arith.addf %118, %139 : vector<32x192xf32>
    %141 = arith.truncf %140 : vector<32x192xf32> to vector<32x192xbf16>
    %cst_54 = arith.constant dense<0.000000e+00> : vector<32x128xf32>
    %142 = tpu.matmul %141, %0, %cst_54 {dimension_numbers = #tpu.dot_dimension_numbers<[1], [0], [0], [1], [0, 0, 1, 1], [], []>} : vector<32x192xbf16>, vector<192x128xbf16>, vector<32x128xf32> -> vector<32x128xf32>
    %143 = arith.addf %142, %4 : vector<32x128xf32>
    %cst_55 = arith.constant 0.000000e+00 : f32
    %144 = vector.broadcast %cst_55 : f32 to vector<32x128xf32>
    %145 = arith.maximumf %143, %144 : vector<32x128xf32>
    %146 = arith.truncf %145 : vector<32x128xf32> to vector<32x128xbf16>
    %cst_56 = arith.constant dense<0.000000e+00> : vector<32x192xf32>
    %147 = tpu.matmul %146, %1, %cst_56 {dimension_numbers = #tpu.dot_dimension_numbers<[1], [0], [0], [1], [0, 0, 1, 1], [], []>} : vector<32x128xbf16>, vector<128x192xbf16>, vector<32x192xf32> -> vector<32x192xf32>
    %148 = arith.addf %147, %7 : vector<32x192xf32>
    %cst_57 = arith.constant 0.0833333358 : f32
    %149 = vector.broadcast %cst_57 : f32 to vector<32x192xf32>
    %150 = arith.mulf %149, %137 : vector<32x192xf32>
    %151 = arith.addf %121, %150 : vector<32x192xf32>
    %152 = arith.truncf %151 : vector<32x192xf32> to vector<32x192xbf16>
    %cst_58 = arith.constant dense<0.000000e+00> : vector<32x128xf32>
    %153 = tpu.matmul %152, %0, %cst_58 {dimension_numbers = #tpu.dot_dimension_numbers<[1], [0], [0], [1], [0, 0, 1, 1], [], []>} : vector<32x192xbf16>, vector<192x128xbf16>, vector<32x128xf32> -> vector<32x128xf32>
    %154 = arith.addf %153, %4 : vector<32x128xf32>
    %cst_59 = arith.constant 0.000000e+00 : f32
    %155 = vector.broadcast %cst_59 : f32 to vector<32x128xf32>
    %156 = arith.maximumf %154, %155 : vector<32x128xf32>
    %157 = arith.truncf %156 : vector<32x128xf32> to vector<32x128xbf16>
    %cst_60 = arith.constant dense<0.000000e+00> : vector<32x192xf32>
    %158 = tpu.matmul %157, %1, %cst_60 {dimension_numbers = #tpu.dot_dimension_numbers<[1], [0], [0], [1], [0, 0, 1, 1], [], []>} : vector<32x128xbf16>, vector<128x192xbf16>, vector<32x192xf32> -> vector<32x192xf32>
    %159 = arith.addf %158, %7 : vector<32x192xf32>
    %cst_61 = arith.constant 0.333333343 : f32
    %160 = vector.broadcast %cst_61 : f32 to vector<32x192xf32>
    %161 = arith.mulf %160, %129 : vector<32x192xf32>
    %162 = arith.subf %148, %161 : vector<32x192xf32>
    %cst_62 = arith.constant 2.500000e-01 : f32
    %163 = vector.broadcast %cst_62 : f32 to vector<32x192xf32>
    %164 = arith.mulf %163, %162 : vector<32x192xf32>
    %165 = arith.addf %118, %164 : vector<32x192xf32>
    %166 = arith.truncf %165 : vector<32x192xf32> to vector<32x192xbf16>
    %cst_63 = arith.constant dense<0.000000e+00> : vector<32x128xf32>
    %167 = tpu.matmul %166, %0, %cst_63 {dimension_numbers = #tpu.dot_dimension_numbers<[1], [0], [0], [1], [0, 0, 1, 1], [], []>} : vector<32x192xbf16>, vector<192x128xbf16>, vector<32x128xf32> -> vector<32x128xf32>
    %168 = arith.addf %167, %4 : vector<32x128xf32>
    %cst_64 = arith.constant 0.000000e+00 : f32
    %169 = vector.broadcast %cst_64 : f32 to vector<32x128xf32>
    %170 = arith.maximumf %168, %169 : vector<32x128xf32>
    %171 = arith.truncf %170 : vector<32x128xf32> to vector<32x128xbf16>
    %cst_65 = arith.constant dense<0.000000e+00> : vector<32x192xf32>
    %172 = tpu.matmul %171, %1, %cst_65 {dimension_numbers = #tpu.dot_dimension_numbers<[1], [0], [0], [1], [0, 0, 1, 1], [], []>} : vector<32x128xbf16>, vector<128x192xbf16>, vector<32x192xf32> -> vector<32x192xf32>
    %173 = arith.addf %172, %7 : vector<32x192xf32>
    %cst_66 = arith.constant 0.333333343 : f32
    %174 = vector.broadcast %cst_66 : f32 to vector<32x192xf32>
    %175 = arith.mulf %174, %137 : vector<32x192xf32>
    %176 = arith.subf %159, %175 : vector<32x192xf32>
    %cst_67 = arith.constant 2.500000e-01 : f32
    %177 = vector.broadcast %cst_67 : f32 to vector<32x192xf32>
    %178 = arith.mulf %177, %176 : vector<32x192xf32>
    %179 = arith.addf %121, %178 : vector<32x192xf32>
    %180 = arith.truncf %179 : vector<32x192xf32> to vector<32x192xbf16>
    %cst_68 = arith.constant dense<0.000000e+00> : vector<32x128xf32>
    %181 = tpu.matmul %180, %0, %cst_68 {dimension_numbers = #tpu.dot_dimension_numbers<[1], [0], [0], [1], [0, 0, 1, 1], [], []>} : vector<32x192xbf16>, vector<192x128xbf16>, vector<32x128xf32> -> vector<32x128xf32>
    %182 = arith.addf %181, %4 : vector<32x128xf32>
    %cst_69 = arith.constant 0.000000e+00 : f32
    %183 = vector.broadcast %cst_69 : f32 to vector<32x128xf32>
    %184 = arith.maximumf %182, %183 : vector<32x128xf32>
    %185 = arith.truncf %184 : vector<32x128xf32> to vector<32x128xbf16>
    %cst_70 = arith.constant dense<0.000000e+00> : vector<32x192xf32>
    %186 = tpu.matmul %185, %1, %cst_70 {dimension_numbers = #tpu.dot_dimension_numbers<[1], [0], [0], [1], [0, 0, 1, 1], [], []>} : vector<32x128xbf16>, vector<128x192xbf16>, vector<32x192xf32> -> vector<32x192xf32>
    %187 = arith.addf %186, %7 : vector<32x192xf32>
    %188 = arith.addf %148, %173 : vector<32x192xf32>
    %cst_71 = arith.constant 3.000000e+00 : f32
    %189 = vector.broadcast %cst_71 : f32 to vector<32x192xf32>
    %190 = arith.mulf %189, %188 : vector<32x192xf32>
    %191 = arith.addf %129, %190 : vector<32x192xf32>
    %cst_72 = arith.constant 3.125000e-02 : f32
    %192 = vector.broadcast %cst_72 : f32 to vector<32x192xf32>
    %193 = arith.mulf %192, %191 : vector<32x192xf32>
    %194 = arith.addf %118, %193 : vector<32x192xf32>
    %195 = arith.addf %159, %187 : vector<32x192xf32>
    %cst_73 = arith.constant 3.000000e+00 : f32
    %196 = vector.broadcast %cst_73 : f32 to vector<32x192xf32>
    %197 = arith.mulf %196, %195 : vector<32x192xf32>
    %198 = arith.addf %137, %197 : vector<32x192xf32>
    %cst_74 = arith.constant 3.125000e-02 : f32
    %199 = vector.broadcast %cst_74 : f32 to vector<32x192xf32>
    %200 = arith.mulf %199, %198 : vector<32x192xf32>
    %201 = arith.addf %121, %200 : vector<32x192xf32>
    %202 = arith.subf %129, %148 : vector<32x192xf32>
    %203 = arith.addf %202, %173 : vector<32x192xf32>
    %cst_75 = arith.constant 2.500000e-01 : f32
    %204 = vector.broadcast %cst_75 : f32 to vector<32x192xf32>
    %205 = arith.mulf %204, %203 : vector<32x192xf32>
    %206 = arith.addf %118, %205 : vector<32x192xf32>
    %207 = arith.subf %137, %159 : vector<32x192xf32>
    %208 = arith.addf %207, %187 : vector<32x192xf32>
    %cst_76 = arith.constant 2.500000e-01 : f32
    %209 = vector.broadcast %cst_76 : f32 to vector<32x192xf32>
    %210 = arith.mulf %209, %208 : vector<32x192xf32>
    %211 = arith.addf %121, %210 : vector<32x192xf32>
    %212 = arith.truncf %206 : vector<32x192xf32> to vector<32x192xbf16>
    %cst_77 = arith.constant dense<0.000000e+00> : vector<32x128xf32>
    %213 = tpu.matmul %212, %0, %cst_77 {dimension_numbers = #tpu.dot_dimension_numbers<[1], [0], [0], [1], [0, 0, 1, 1], [], []>} : vector<32x192xbf16>, vector<192x128xbf16>, vector<32x128xf32> -> vector<32x128xf32>
    %214 = arith.addf %213, %4 : vector<32x128xf32>
    %cst_78 = arith.constant 0.000000e+00 : f32
    %215 = vector.broadcast %cst_78 : f32 to vector<32x128xf32>
    %216 = arith.maximumf %214, %215 : vector<32x128xf32>
    %217 = arith.truncf %216 : vector<32x128xf32> to vector<32x128xbf16>
    %cst_79 = arith.constant dense<0.000000e+00> : vector<32x192xf32>
    %218 = tpu.matmul %217, %1, %cst_79 {dimension_numbers = #tpu.dot_dimension_numbers<[1], [0], [0], [1], [0, 0, 1, 1], [], []>} : vector<32x128xbf16>, vector<128x192xbf16>, vector<32x192xf32> -> vector<32x192xf32>
    %219 = arith.addf %218, %7 : vector<32x192xf32>
    %220 = arith.truncf %211 : vector<32x192xf32> to vector<32x192xbf16>
    %cst_80 = arith.constant dense<0.000000e+00> : vector<32x128xf32>
    %221 = tpu.matmul %220, %0, %cst_80 {dimension_numbers = #tpu.dot_dimension_numbers<[1], [0], [0], [1], [0, 0, 1, 1], [], []>} : vector<32x192xbf16>, vector<192x128xbf16>, vector<32x128xf32> -> vector<32x128xf32>
    %222 = arith.addf %221, %4 : vector<32x128xf32>
    %cst_81 = arith.constant 0.000000e+00 : f32
    %223 = vector.broadcast %cst_81 : f32 to vector<32x128xf32>
    %224 = arith.maximumf %222, %223 : vector<32x128xf32>
    %225 = arith.truncf %224 : vector<32x128xf32> to vector<32x128xbf16>
    %cst_82 = arith.constant dense<0.000000e+00> : vector<32x192xf32>
    %226 = tpu.matmul %225, %1, %cst_82 {dimension_numbers = #tpu.dot_dimension_numbers<[1], [0], [0], [1], [0, 0, 1, 1], [], []>} : vector<32x128xbf16>, vector<128x192xbf16>, vector<32x192xf32> -> vector<32x192xf32>
    %227 = arith.addf %226, %7 : vector<32x192xf32>
    %cst_83 = arith.constant 3.125000e-02 : f32
    %228 = vector.broadcast %cst_83 : f32 to vector<32x192xf32>
    %229 = arith.mulf %228, %219 : vector<32x192xf32>
    %230 = arith.addf %194, %229 : vector<32x192xf32>
    %cst_84 = arith.constant 3.125000e-02 : f32
    %231 = vector.broadcast %cst_84 : f32 to vector<32x192xf32>
    %232 = arith.mulf %231, %227 : vector<32x192xf32>
    %233 = arith.addf %201, %232 : vector<32x192xf32>
    %234 = arith.truncf %230 : vector<32x192xf32> to vector<32x192xbf16>
    %cst_85 = arith.constant dense<0.000000e+00> : vector<32x128xf32>
    %235 = tpu.matmul %234, %0, %cst_85 {dimension_numbers = #tpu.dot_dimension_numbers<[1], [0], [0], [1], [0, 0, 1, 1], [], []>} : vector<32x192xbf16>, vector<192x128xbf16>, vector<32x128xf32> -> vector<32x128xf32>
    %236 = arith.addf %235, %4 : vector<32x128xf32>
    %cst_86 = arith.constant 0.000000e+00 : f32
    %237 = vector.broadcast %cst_86 : f32 to vector<32x128xf32>
    %238 = arith.maximumf %236, %237 : vector<32x128xf32>
    %239 = arith.truncf %238 : vector<32x128xf32> to vector<32x128xbf16>
    %cst_87 = arith.constant dense<0.000000e+00> : vector<32x192xf32>
    %240 = tpu.matmul %239, %1, %cst_87 {dimension_numbers = #tpu.dot_dimension_numbers<[1], [0], [0], [1], [0, 0, 1, 1], [], []>} : vector<32x128xbf16>, vector<128x192xbf16>, vector<32x192xf32> -> vector<32x192xf32>
    %241 = arith.addf %240, %7 : vector<32x192xf32>
    %242 = arith.truncf %233 : vector<32x192xf32> to vector<32x192xbf16>
    %cst_88 = arith.constant dense<0.000000e+00> : vector<32x128xf32>
    %243 = tpu.matmul %242, %0, %cst_88 {dimension_numbers = #tpu.dot_dimension_numbers<[1], [0], [0], [1], [0, 0, 1, 1], [], []>} : vector<32x192xbf16>, vector<192x128xbf16>, vector<32x128xf32> -> vector<32x128xf32>
    %244 = arith.addf %243, %4 : vector<32x128xf32>
    %cst_89 = arith.constant 0.000000e+00 : f32
    %245 = vector.broadcast %cst_89 : f32 to vector<32x128xf32>
    %246 = arith.maximumf %244, %245 : vector<32x128xf32>
    %247 = arith.truncf %246 : vector<32x128xf32> to vector<32x128xbf16>
    %cst_90 = arith.constant dense<0.000000e+00> : vector<32x192xf32>
    %248 = tpu.matmul %247, %1, %cst_90 {dimension_numbers = #tpu.dot_dimension_numbers<[1], [0], [0], [1], [0, 0, 1, 1], [], []>} : vector<32x128xbf16>, vector<128x192xbf16>, vector<32x192xf32> -> vector<32x192xf32>
    %249 = arith.addf %248, %7 : vector<32x192xf32>
    %cst_91 = arith.constant 0.0833333358 : f32
    %250 = vector.broadcast %cst_91 : f32 to vector<32x192xf32>
    %251 = arith.mulf %250, %241 : vector<32x192xf32>
    %252 = arith.addf %230, %251 : vector<32x192xf32>
    %253 = arith.truncf %252 : vector<32x192xf32> to vector<32x192xbf16>
    %cst_92 = arith.constant dense<0.000000e+00> : vector<32x128xf32>
    %254 = tpu.matmul %253, %0, %cst_92 {dimension_numbers = #tpu.dot_dimension_numbers<[1], [0], [0], [1], [0, 0, 1, 1], [], []>} : vector<32x192xbf16>, vector<192x128xbf16>, vector<32x128xf32> -> vector<32x128xf32>
    %255 = arith.addf %254, %4 : vector<32x128xf32>
    %cst_93 = arith.constant 0.000000e+00 : f32
    %256 = vector.broadcast %cst_93 : f32 to vector<32x128xf32>
    %257 = arith.maximumf %255, %256 : vector<32x128xf32>
    %258 = arith.truncf %257 : vector<32x128xf32> to vector<32x128xbf16>
    %cst_94 = arith.constant dense<0.000000e+00> : vector<32x192xf32>
    %259 = tpu.matmul %258, %1, %cst_94 {dimension_numbers = #tpu.dot_dimension_numbers<[1], [0], [0], [1], [0, 0, 1, 1], [], []>} : vector<32x128xbf16>, vector<128x192xbf16>, vector<32x192xf32> -> vector<32x192xf32>
    %260 = arith.addf %259, %7 : vector<32x192xf32>
    %cst_95 = arith.constant 0.0833333358 : f32
    %261 = vector.broadcast %cst_95 : f32 to vector<32x192xf32>
    %262 = arith.mulf %261, %249 : vector<32x192xf32>
    %263 = arith.addf %233, %262 : vector<32x192xf32>
    %264 = arith.truncf %263 : vector<32x192xf32> to vector<32x192xbf16>
    %cst_96 = arith.constant dense<0.000000e+00> : vector<32x128xf32>
    %265 = tpu.matmul %264, %0, %cst_96 {dimension_numbers = #tpu.dot_dimension_numbers<[1], [0], [0], [1], [0, 0, 1, 1], [], []>} : vector<32x192xbf16>, vector<192x128xbf16>, vector<32x128xf32> -> vector<32x128xf32>
    %266 = arith.addf %265, %4 : vector<32x128xf32>
    %cst_97 = arith.constant 0.000000e+00 : f32
    %267 = vector.broadcast %cst_97 : f32 to vector<32x128xf32>
    %268 = arith.maximumf %266, %267 : vector<32x128xf32>
    %269 = arith.truncf %268 : vector<32x128xf32> to vector<32x128xbf16>
    %cst_98 = arith.constant dense<0.000000e+00> : vector<32x192xf32>
    %270 = tpu.matmul %269, %1, %cst_98 {dimension_numbers = #tpu.dot_dimension_numbers<[1], [0], [0], [1], [0, 0, 1, 1], [], []>} : vector<32x128xbf16>, vector<128x192xbf16>, vector<32x192xf32> -> vector<32x192xf32>
    %271 = arith.addf %270, %7 : vector<32x192xf32>
    %cst_99 = arith.constant 0.333333343 : f32
    %272 = vector.broadcast %cst_99 : f32 to vector<32x192xf32>
    %273 = arith.mulf %272, %241 : vector<32x192xf32>
    %274 = arith.subf %260, %273 : vector<32x192xf32>
    %cst_100 = arith.constant 2.500000e-01 : f32
    %275 = vector.broadcast %cst_100 : f32 to vector<32x192xf32>
    %276 = arith.mulf %275, %274 : vector<32x192xf32>
    %277 = arith.addf %230, %276 : vector<32x192xf32>
    %278 = arith.truncf %277 : vector<32x192xf32> to vector<32x192xbf16>
    %cst_101 = arith.constant dense<0.000000e+00> : vector<32x128xf32>
    %279 = tpu.matmul %278, %0, %cst_101 {dimension_numbers = #tpu.dot_dimension_numbers<[1], [0], [0], [1], [0, 0, 1, 1], [], []>} : vector<32x192xbf16>, vector<192x128xbf16>, vector<32x128xf32> -> vector<32x128xf32>
    %280 = arith.addf %279, %4 : vector<32x128xf32>
    %cst_102 = arith.constant 0.000000e+00 : f32
    %281 = vector.broadcast %cst_102 : f32 to vector<32x128xf32>
    %282 = arith.maximumf %280, %281 : vector<32x128xf32>
    %283 = arith.truncf %282 : vector<32x128xf32> to vector<32x128xbf16>
    %cst_103 = arith.constant dense<0.000000e+00> : vector<32x192xf32>
    %284 = tpu.matmul %283, %1, %cst_103 {dimension_numbers = #tpu.dot_dimension_numbers<[1], [0], [0], [1], [0, 0, 1, 1], [], []>} : vector<32x128xbf16>, vector<128x192xbf16>, vector<32x192xf32> -> vector<32x192xf32>
    %285 = arith.addf %284, %7 : vector<32x192xf32>
    %cst_104 = arith.constant 0.333333343 : f32
    %286 = vector.broadcast %cst_104 : f32 to vector<32x192xf32>
    %287 = arith.mulf %286, %249 : vector<32x192xf32>
    %288 = arith.subf %271, %287 : vector<32x192xf32>
    %cst_105 = arith.constant 2.500000e-01 : f32
    %289 = vector.broadcast %cst_105 : f32 to vector<32x192xf32>
    %290 = arith.mulf %289, %288 : vector<32x192xf32>
    %291 = arith.addf %233, %290 : vector<32x192xf32>
    %292 = arith.truncf %291 : vector<32x192xf32> to vector<32x192xbf16>
    %cst_106 = arith.constant dense<0.000000e+00> : vector<32x128xf32>
    %293 = tpu.matmul %292, %0, %cst_106 {dimension_numbers = #tpu.dot_dimension_numbers<[1], [0], [0], [1], [0, 0, 1, 1], [], []>} : vector<32x192xbf16>, vector<192x128xbf16>, vector<32x128xf32> -> vector<32x128xf32>
    %294 = arith.addf %293, %4 : vector<32x128xf32>
    %cst_107 = arith.constant 0.000000e+00 : f32
    %295 = vector.broadcast %cst_107 : f32 to vector<32x128xf32>
    %296 = arith.maximumf %294, %295 : vector<32x128xf32>
    %297 = arith.truncf %296 : vector<32x128xf32> to vector<32x128xbf16>
    %cst_108 = arith.constant dense<0.000000e+00> : vector<32x192xf32>
    %298 = tpu.matmul %297, %1, %cst_108 {dimension_numbers = #tpu.dot_dimension_numbers<[1], [0], [0], [1], [0, 0, 1, 1], [], []>} : vector<32x128xbf16>, vector<128x192xbf16>, vector<32x192xf32> -> vector<32x192xf32>
    %299 = arith.addf %298, %7 : vector<32x192xf32>
    %300 = arith.addf %260, %285 : vector<32x192xf32>
    %cst_109 = arith.constant 3.000000e+00 : f32
    %301 = vector.broadcast %cst_109 : f32 to vector<32x192xf32>
    %302 = arith.mulf %301, %300 : vector<32x192xf32>
    %303 = arith.addf %241, %302 : vector<32x192xf32>
    %cst_110 = arith.constant 3.125000e-02 : f32
    %304 = vector.broadcast %cst_110 : f32 to vector<32x192xf32>
    %305 = arith.mulf %304, %303 : vector<32x192xf32>
    %306 = arith.addf %230, %305 : vector<32x192xf32>
    %307 = arith.addf %271, %299 : vector<32x192xf32>
    %cst_111 = arith.constant 3.000000e+00 : f32
    %308 = vector.broadcast %cst_111 : f32 to vector<32x192xf32>
    %309 = arith.mulf %308, %307 : vector<32x192xf32>
    %310 = arith.addf %249, %309 : vector<32x192xf32>
    %cst_112 = arith.constant 3.125000e-02 : f32
    %311 = vector.broadcast %cst_112 : f32 to vector<32x192xf32>
    %312 = arith.mulf %311, %310 : vector<32x192xf32>
    %313 = arith.addf %233, %312 : vector<32x192xf32>
    %314 = arith.subf %241, %260 : vector<32x192xf32>
    %315 = arith.addf %314, %285 : vector<32x192xf32>
    %cst_113 = arith.constant 2.500000e-01 : f32
    %316 = vector.broadcast %cst_113 : f32 to vector<32x192xf32>
    %317 = arith.mulf %316, %315 : vector<32x192xf32>
    %318 = arith.addf %230, %317 : vector<32x192xf32>
    %319 = arith.subf %249, %271 : vector<32x192xf32>
    %320 = arith.addf %319, %299 : vector<32x192xf32>
    %cst_114 = arith.constant 2.500000e-01 : f32
    %321 = vector.broadcast %cst_114 : f32 to vector<32x192xf32>
    %322 = arith.mulf %321, %320 : vector<32x192xf32>
    %323 = arith.addf %233, %322 : vector<32x192xf32>
    %324 = arith.truncf %318 : vector<32x192xf32> to vector<32x192xbf16>
    %cst_115 = arith.constant dense<0.000000e+00> : vector<32x128xf32>
    %325 = tpu.matmul %324, %0, %cst_115 {dimension_numbers = #tpu.dot_dimension_numbers<[1], [0], [0], [1], [0, 0, 1, 1], [], []>} : vector<32x192xbf16>, vector<192x128xbf16>, vector<32x128xf32> -> vector<32x128xf32>
    %326 = arith.addf %325, %4 : vector<32x128xf32>
    %cst_116 = arith.constant 0.000000e+00 : f32
    %327 = vector.broadcast %cst_116 : f32 to vector<32x128xf32>
    %328 = arith.maximumf %326, %327 : vector<32x128xf32>
    %329 = arith.truncf %328 : vector<32x128xf32> to vector<32x128xbf16>
    %cst_117 = arith.constant dense<0.000000e+00> : vector<32x192xf32>
    %330 = tpu.matmul %329, %1, %cst_117 {dimension_numbers = #tpu.dot_dimension_numbers<[1], [0], [0], [1], [0, 0, 1, 1], [], []>} : vector<32x128xbf16>, vector<128x192xbf16>, vector<32x192xf32> -> vector<32x192xf32>
    %331 = arith.addf %330, %7 : vector<32x192xf32>
    %332 = arith.truncf %323 : vector<32x192xf32> to vector<32x192xbf16>
    %cst_118 = arith.constant dense<0.000000e+00> : vector<32x128xf32>
    %333 = tpu.matmul %332, %0, %cst_118 {dimension_numbers = #tpu.dot_dimension_numbers<[1], [0], [0], [1], [0, 0, 1, 1], [], []>} : vector<32x192xbf16>, vector<192x128xbf16>, vector<32x128xf32> -> vector<32x128xf32>
    %334 = arith.addf %333, %4 : vector<32x128xf32>
    %cst_119 = arith.constant 0.000000e+00 : f32
    %335 = vector.broadcast %cst_119 : f32 to vector<32x128xf32>
    %336 = arith.maximumf %334, %335 : vector<32x128xf32>
    %337 = arith.truncf %336 : vector<32x128xf32> to vector<32x128xbf16>
    %cst_120 = arith.constant dense<0.000000e+00> : vector<32x192xf32>
    %338 = tpu.matmul %337, %1, %cst_120 {dimension_numbers = #tpu.dot_dimension_numbers<[1], [0], [0], [1], [0, 0, 1, 1], [], []>} : vector<32x128xbf16>, vector<128x192xbf16>, vector<32x192xf32> -> vector<32x192xf32>
    %339 = arith.addf %338, %7 : vector<32x192xf32>
    %cst_121 = arith.constant 3.125000e-02 : f32
    %340 = vector.broadcast %cst_121 : f32 to vector<32x192xf32>
    %341 = arith.mulf %340, %331 : vector<32x192xf32>
    %342 = arith.addf %306, %341 : vector<32x192xf32>
    %cst_122 = arith.constant 3.125000e-02 : f32
    %343 = vector.broadcast %cst_122 : f32 to vector<32x192xf32>
    %344 = arith.mulf %343, %339 : vector<32x192xf32>
    %345 = arith.addf %313, %344 : vector<32x192xf32>
    %346 = arith.truncf %342 : vector<32x192xf32> to vector<32x192xbf16>
    %cst_123 = arith.constant dense<0.000000e+00> : vector<32x128xf32>
    %347 = tpu.matmul %346, %0, %cst_123 {dimension_numbers = #tpu.dot_dimension_numbers<[1], [0], [0], [1], [0, 0, 1, 1], [], []>} : vector<32x192xbf16>, vector<192x128xbf16>, vector<32x128xf32> -> vector<32x128xf32>
    %348 = arith.addf %347, %4 : vector<32x128xf32>
    %cst_124 = arith.constant 0.000000e+00 : f32
    %349 = vector.broadcast %cst_124 : f32 to vector<32x128xf32>
    %350 = arith.maximumf %348, %349 : vector<32x128xf32>
    %351 = arith.truncf %350 : vector<32x128xf32> to vector<32x128xbf16>
    %cst_125 = arith.constant dense<0.000000e+00> : vector<32x192xf32>
    %352 = tpu.matmul %351, %1, %cst_125 {dimension_numbers = #tpu.dot_dimension_numbers<[1], [0], [0], [1], [0, 0, 1, 1], [], []>} : vector<32x128xbf16>, vector<128x192xbf16>, vector<32x192xf32> -> vector<32x192xf32>
    %353 = arith.addf %352, %7 : vector<32x192xf32>
    %354 = arith.truncf %345 : vector<32x192xf32> to vector<32x192xbf16>
    %cst_126 = arith.constant dense<0.000000e+00> : vector<32x128xf32>
    %355 = tpu.matmul %354, %0, %cst_126 {dimension_numbers = #tpu.dot_dimension_numbers<[1], [0], [0], [1], [0, 0, 1, 1], [], []>} : vector<32x192xbf16>, vector<192x128xbf16>, vector<32x128xf32> -> vector<32x128xf32>
    %356 = arith.addf %355, %4 : vector<32x128xf32>
    %cst_127 = arith.constant 0.000000e+00 : f32
    %357 = vector.broadcast %cst_127 : f32 to vector<32x128xf32>
    %358 = arith.maximumf %356, %357 : vector<32x128xf32>
    %359 = arith.truncf %358 : vector<32x128xf32> to vector<32x128xbf16>
    %cst_128 = arith.constant dense<0.000000e+00> : vector<32x192xf32>
    %360 = tpu.matmul %359, %1, %cst_128 {dimension_numbers = #tpu.dot_dimension_numbers<[1], [0], [0], [1], [0, 0, 1, 1], [], []>} : vector<32x128xbf16>, vector<128x192xbf16>, vector<32x192xf32> -> vector<32x192xf32>
    %361 = arith.addf %360, %7 : vector<32x192xf32>
    %cst_129 = arith.constant 0.0833333358 : f32
    %362 = vector.broadcast %cst_129 : f32 to vector<32x192xf32>
    %363 = arith.mulf %362, %353 : vector<32x192xf32>
    %364 = arith.addf %342, %363 : vector<32x192xf32>
    %365 = arith.truncf %364 : vector<32x192xf32> to vector<32x192xbf16>
    %cst_130 = arith.constant dense<0.000000e+00> : vector<32x128xf32>
    %366 = tpu.matmul %365, %0, %cst_130 {dimension_numbers = #tpu.dot_dimension_numbers<[1], [0], [0], [1], [0, 0, 1, 1], [], []>} : vector<32x192xbf16>, vector<192x128xbf16>, vector<32x128xf32> -> vector<32x128xf32>
    %367 = arith.addf %366, %4 : vector<32x128xf32>
    %cst_131 = arith.constant 0.000000e+00 : f32
    %368 = vector.broadcast %cst_131 : f32 to vector<32x128xf32>
    %369 = arith.maximumf %367, %368 : vector<32x128xf32>
    %370 = arith.truncf %369 : vector<32x128xf32> to vector<32x128xbf16>
    %cst_132 = arith.constant dense<0.000000e+00> : vector<32x192xf32>
    %371 = tpu.matmul %370, %1, %cst_132 {dimension_numbers = #tpu.dot_dimension_numbers<[1], [0], [0], [1], [0, 0, 1, 1], [], []>} : vector<32x128xbf16>, vector<128x192xbf16>, vector<32x192xf32> -> vector<32x192xf32>
    %372 = arith.addf %371, %7 : vector<32x192xf32>
    %cst_133 = arith.constant 0.0833333358 : f32
    %373 = vector.broadcast %cst_133 : f32 to vector<32x192xf32>
    %374 = arith.mulf %373, %361 : vector<32x192xf32>
    %375 = arith.addf %345, %374 : vector<32x192xf32>
    %376 = arith.truncf %375 : vector<32x192xf32> to vector<32x192xbf16>
    %cst_134 = arith.constant dense<0.000000e+00> : vector<32x128xf32>
    %377 = tpu.matmul %376, %0, %cst_134 {dimension_numbers = #tpu.dot_dimension_numbers<[1], [0], [0], [1], [0, 0, 1, 1], [], []>} : vector<32x192xbf16>, vector<192x128xbf16>, vector<32x128xf32> -> vector<32x128xf32>
    %378 = arith.addf %377, %4 : vector<32x128xf32>
    %cst_135 = arith.constant 0.000000e+00 : f32
    %379 = vector.broadcast %cst_135 : f32 to vector<32x128xf32>
    %380 = arith.maximumf %378, %379 : vector<32x128xf32>
    %381 = arith.truncf %380 : vector<32x128xf32> to vector<32x128xbf16>
    %cst_136 = arith.constant dense<0.000000e+00> : vector<32x192xf32>
    %382 = tpu.matmul %381, %1, %cst_136 {dimension_numbers = #tpu.dot_dimension_numbers<[1], [0], [0], [1], [0, 0, 1, 1], [], []>} : vector<32x128xbf16>, vector<128x192xbf16>, vector<32x192xf32> -> vector<32x192xf32>
    %383 = arith.addf %382, %7 : vector<32x192xf32>
    %cst_137 = arith.constant 0.333333343 : f32
    %384 = vector.broadcast %cst_137 : f32 to vector<32x192xf32>
    %385 = arith.mulf %384, %353 : vector<32x192xf32>
    %386 = arith.subf %372, %385 : vector<32x192xf32>
    %cst_138 = arith.constant 2.500000e-01 : f32
    %387 = vector.broadcast %cst_138 : f32 to vector<32x192xf32>
    %388 = arith.mulf %387, %386 : vector<32x192xf32>
    %389 = arith.addf %342, %388 : vector<32x192xf32>
    %390 = arith.truncf %389 : vector<32x192xf32> to vector<32x192xbf16>
    %cst_139 = arith.constant dense<0.000000e+00> : vector<32x128xf32>
    %391 = tpu.matmul %390, %0, %cst_139 {dimension_numbers = #tpu.dot_dimension_numbers<[1], [0], [0], [1], [0, 0, 1, 1], [], []>} : vector<32x192xbf16>, vector<192x128xbf16>, vector<32x128xf32> -> vector<32x128xf32>
    %392 = arith.addf %391, %4 : vector<32x128xf32>
    %cst_140 = arith.constant 0.000000e+00 : f32
    %393 = vector.broadcast %cst_140 : f32 to vector<32x128xf32>
    %394 = arith.maximumf %392, %393 : vector<32x128xf32>
    %395 = arith.truncf %394 : vector<32x128xf32> to vector<32x128xbf16>
    %cst_141 = arith.constant dense<0.000000e+00> : vector<32x192xf32>
    %396 = tpu.matmul %395, %1, %cst_141 {dimension_numbers = #tpu.dot_dimension_numbers<[1], [0], [0], [1], [0, 0, 1, 1], [], []>} : vector<32x128xbf16>, vector<128x192xbf16>, vector<32x192xf32> -> vector<32x192xf32>
    %397 = arith.addf %396, %7 : vector<32x192xf32>
    %cst_142 = arith.constant 0.333333343 : f32
    %398 = vector.broadcast %cst_142 : f32 to vector<32x192xf32>
    %399 = arith.mulf %398, %361 : vector<32x192xf32>
    %400 = arith.subf %383, %399 : vector<32x192xf32>
    %cst_143 = arith.constant 2.500000e-01 : f32
    %401 = vector.broadcast %cst_143 : f32 to vector<32x192xf32>
    %402 = arith.mulf %401, %400 : vector<32x192xf32>
    %403 = arith.addf %345, %402 : vector<32x192xf32>
    %404 = arith.truncf %403 : vector<32x192xf32> to vector<32x192xbf16>
    %cst_144 = arith.constant dense<0.000000e+00> : vector<32x128xf32>
    %405 = tpu.matmul %404, %0, %cst_144 {dimension_numbers = #tpu.dot_dimension_numbers<[1], [0], [0], [1], [0, 0, 1, 1], [], []>} : vector<32x192xbf16>, vector<192x128xbf16>, vector<32x128xf32> -> vector<32x128xf32>
    %406 = arith.addf %405, %4 : vector<32x128xf32>
    %cst_145 = arith.constant 0.000000e+00 : f32
    %407 = vector.broadcast %cst_145 : f32 to vector<32x128xf32>
    %408 = arith.maximumf %406, %407 : vector<32x128xf32>
    %409 = arith.truncf %408 : vector<32x128xf32> to vector<32x128xbf16>
    %cst_146 = arith.constant dense<0.000000e+00> : vector<32x192xf32>
    %410 = tpu.matmul %409, %1, %cst_146 {dimension_numbers = #tpu.dot_dimension_numbers<[1], [0], [0], [1], [0, 0, 1, 1], [], []>} : vector<32x128xbf16>, vector<128x192xbf16>, vector<32x192xf32> -> vector<32x192xf32>
    %411 = arith.addf %410, %7 : vector<32x192xf32>
    %412 = arith.addf %372, %397 : vector<32x192xf32>
    %cst_147 = arith.constant 3.000000e+00 : f32
    %413 = vector.broadcast %cst_147 : f32 to vector<32x192xf32>
    %414 = arith.mulf %413, %412 : vector<32x192xf32>
    %415 = arith.addf %353, %414 : vector<32x192xf32>
    %cst_148 = arith.constant 3.125000e-02 : f32
    %416 = vector.broadcast %cst_148 : f32 to vector<32x192xf32>
    %417 = arith.mulf %416, %415 : vector<32x192xf32>
    %418 = arith.addf %342, %417 : vector<32x192xf32>
    %419 = arith.addf %383, %411 : vector<32x192xf32>
    %cst_149 = arith.constant 3.000000e+00 : f32
    %420 = vector.broadcast %cst_149 : f32 to vector<32x192xf32>
    %421 = arith.mulf %420, %419 : vector<32x192xf32>
    %422 = arith.addf %361, %421 : vector<32x192xf32>
    %cst_150 = arith.constant 3.125000e-02 : f32
    %423 = vector.broadcast %cst_150 : f32 to vector<32x192xf32>
    %424 = arith.mulf %423, %422 : vector<32x192xf32>
    %425 = arith.addf %345, %424 : vector<32x192xf32>
    %426 = arith.subf %353, %372 : vector<32x192xf32>
    %427 = arith.addf %426, %397 : vector<32x192xf32>
    %cst_151 = arith.constant 2.500000e-01 : f32
    %428 = vector.broadcast %cst_151 : f32 to vector<32x192xf32>
    %429 = arith.mulf %428, %427 : vector<32x192xf32>
    %430 = arith.addf %342, %429 : vector<32x192xf32>
    %431 = arith.subf %361, %383 : vector<32x192xf32>
    %432 = arith.addf %431, %411 : vector<32x192xf32>
    %cst_152 = arith.constant 2.500000e-01 : f32
    %433 = vector.broadcast %cst_152 : f32 to vector<32x192xf32>
    %434 = arith.mulf %433, %432 : vector<32x192xf32>
    %435 = arith.addf %345, %434 : vector<32x192xf32>
    %436 = arith.truncf %430 : vector<32x192xf32> to vector<32x192xbf16>
    %cst_153 = arith.constant dense<0.000000e+00> : vector<32x128xf32>
    %437 = tpu.matmul %436, %0, %cst_153 {dimension_numbers = #tpu.dot_dimension_numbers<[1], [0], [0], [1], [0, 0, 1, 1], [], []>} : vector<32x192xbf16>, vector<192x128xbf16>, vector<32x128xf32> -> vector<32x128xf32>
    %438 = arith.addf %437, %4 : vector<32x128xf32>
    %cst_154 = arith.constant 0.000000e+00 : f32
    %439 = vector.broadcast %cst_154 : f32 to vector<32x128xf32>
    %440 = arith.maximumf %438, %439 : vector<32x128xf32>
    %441 = arith.truncf %440 : vector<32x128xf32> to vector<32x128xbf16>
    %cst_155 = arith.constant dense<0.000000e+00> : vector<32x192xf32>
    %442 = tpu.matmul %441, %1, %cst_155 {dimension_numbers = #tpu.dot_dimension_numbers<[1], [0], [0], [1], [0, 0, 1, 1], [], []>} : vector<32x128xbf16>, vector<128x192xbf16>, vector<32x192xf32> -> vector<32x192xf32>
    %443 = arith.addf %442, %7 : vector<32x192xf32>
    %444 = arith.truncf %435 : vector<32x192xf32> to vector<32x192xbf16>
    %cst_156 = arith.constant dense<0.000000e+00> : vector<32x128xf32>
    %445 = tpu.matmul %444, %0, %cst_156 {dimension_numbers = #tpu.dot_dimension_numbers<[1], [0], [0], [1], [0, 0, 1, 1], [], []>} : vector<32x192xbf16>, vector<192x128xbf16>, vector<32x128xf32> -> vector<32x128xf32>
    %446 = arith.addf %445, %4 : vector<32x128xf32>
    %cst_157 = arith.constant 0.000000e+00 : f32
    %447 = vector.broadcast %cst_157 : f32 to vector<32x128xf32>
    %448 = arith.maximumf %446, %447 : vector<32x128xf32>
    %449 = arith.truncf %448 : vector<32x128xf32> to vector<32x128xbf16>
    %cst_158 = arith.constant dense<0.000000e+00> : vector<32x192xf32>
    %450 = tpu.matmul %449, %1, %cst_158 {dimension_numbers = #tpu.dot_dimension_numbers<[1], [0], [0], [1], [0, 0, 1, 1], [], []>} : vector<32x128xbf16>, vector<128x192xbf16>, vector<32x192xf32> -> vector<32x192xf32>
    %451 = arith.addf %450, %7 : vector<32x192xf32>
    %cst_159 = arith.constant 3.125000e-02 : f32
    %452 = vector.broadcast %cst_159 : f32 to vector<32x192xf32>
    %453 = arith.mulf %452, %443 : vector<32x192xf32>
    %454 = arith.addf %418, %453 : vector<32x192xf32>
    %cst_160 = arith.constant 3.125000e-02 : f32
    %455 = vector.broadcast %cst_160 : f32 to vector<32x192xf32>
    %456 = arith.mulf %455, %451 : vector<32x192xf32>
    %457 = arith.addf %425, %456 : vector<32x192xf32>
    %c0_161 = arith.constant 0 : index
    %c0_162 = arith.constant 0 : index
    %458 = vector.load %arg6[%c0_161, %c0_162] : memref<64x192xf32, #tpu.memory_space<vmem>>, vector<32x192xf32>
    tpu.vector_store %arg6[%c0_161, %c0_162], %454 {strides = array<i32>} : memref<64x192xf32, #tpu.memory_space<vmem>>, vector<32x192xf32>,
    %c32_163 = arith.constant 32 : index
    %c0_164 = arith.constant 0 : index
    %459 = vector.load %arg6[%c32_163, %c0_164] : memref<64x192xf32, #tpu.memory_space<vmem>>, vector<32x192xf32>
    tpu.vector_store %arg6[%c32_163, %c0_164], %457 {strides = array<i32>} : memref<64x192xf32, #tpu.memory_space<vmem>>, vector<32x192xf32>,
    return
  }
  func.func @transform_0(%arg0: i32) -> (i32, i32) {
    %c0_i32 = arith.constant 0 : i32
    %c0_i32_0 = arith.constant 0 : i32
    return %arg0, %c0_i32 : i32, i32
  }
  func.func @transform_1(%arg0: i32) -> (i32, i32) {
    %c0_i32 = arith.constant 0 : i32
    %c0_i32_0 = arith.constant 0 : i32
    %c0_i32_1 = arith.constant 0 : i32
    return %c0_i32, %c0_i32_0 : i32, i32
  }
  func.func @transform_2(%arg0: i32) -> (i32, i32) {
    %c0_i32 = arith.constant 0 : i32
    %c0_i32_0 = arith.constant 0 : i32
    %c0_i32_1 = arith.constant 0 : i32
    return %c0_i32, %c0_i32_0 : i32, i32
  }
  func.func @transform_3(%arg0: i32) -> (i32, i32) {
    %c0_i32 = arith.constant 0 : i32
    %c0_i32_0 = arith.constant 0 : i32
    %c0_i32_1 = arith.constant 0 : i32
    return %c0_i32, %c0_i32_0 : i32, i32
  }
  func.func @transform_4(%arg0: i32) -> (i32, i32) {
    %c0_i32 = arith.constant 0 : i32
    %c0_i32_0 = arith.constant 0 : i32
    %c0_i32_1 = arith.constant 0 : i32
    return %c0_i32, %c0_i32_0 : i32, i32
  }
  func.func @transform_5(%arg0: i32) -> (i32, i32) {
    %c0_i32 = arith.constant 0 : i32
    %c0_i32_0 = arith.constant 0 : i32
    return %arg0, %c0_i32 : i32, i32
  }
}

</mosaic_0001>

<llo_original>
// kernel: tpu_custom_call.1
$region0: #{tpu_custom_call.1}
  #allocation0 [shape = 'u32[]', space=smem, size = 0x4, offset = 0x4, fixed_abs, tag = 'smem constant byte address 0x4 - core index']
  #allocation1 [shape = 'u32[144,128]{1,0:T(1,128)}', space=vmem, size = 0x12000, scoped, tag = 'internal scratch']
  %s0 = inlined_call_operand.vmem [shape: f32[64,192], index: 0, kind: input, shape index: {}]
  %s1 = inlined_call_operand.vmem [shape: bf16[192,128], index: 1, kind: input, shape index: {}]
  %s2 = inlined_call_operand.vmem [shape: f32[1,128], index: 2, kind: input, shape index: {}]
  %s3 = inlined_call_operand.vmem [shape: bf16[128,192], index: 3, kind: input, shape index: {}]
  %s4 = inlined_call_operand.vmem [shape: f32[1,192], index: 4, kind: input, shape index: {}]
  %s5 = inlined_call_operand.hbm [shape: f32[64,192], index: 5, kind: output, shape index: {}]
  %s6 = sld [smem:[#allocation0]]
  $region30: #{tpu_custom_call.1} parent=0
    _
  %s8 = ssub.s32 1, %s6
  %s9 = scalar_select 0, %s8, %s6
  $region1: #{tpu_custom_call.1} parent=0
    #allocation2 [shape = 'u8[65536]{0}', space=vmem, size = 0x10000, scoped, tag = 'output window, operand 0, single buffered']
    #allocation3 [shape = 's32[1]{0}', space=sflag, size = 0x4, scoped, tag = 'scoped memory for tpu_custom_call.1']
    %10 = vsyncpa [#allocation3], 0
    // Predicated region
    $region2: #{tpu_custom_call.1} parent=1 // pred_check
      _
    $region3: #{tpu_custom_call.1} parent=1 // pred_check_branch
      %12 = sbr.rel (0) target = $region5
    $region4: #{tpu_custom_call.1} parent=1 // pred_region
      _
    $region5: #{tpu_custom_call.1} parent=1 // pred_fallthru
      _
    // Predicated region
    $region6: #{tpu_custom_call.1} parent=1 // pred_check
      _
    $region7: #{tpu_custom_call.1} parent=1 // pred_check_branch
      %14 = sbr.rel (0) target = $region9
    $region8: #{tpu_custom_call.1} parent=1 // pred_region
      _
    $region9: #{tpu_custom_call.1} parent=1 // pred_fallthru
      _
    // Predicated region
    $region10: #{tpu_custom_call.1} parent=1 // pred_check
      _
    $region11: #{tpu_custom_call.1} parent=1 // pred_check_branch
      %16 = sbr.rel (0) target = $region13
    $region12: #{tpu_custom_call.1} parent=1 // pred_region
      _
    $region13: #{tpu_custom_call.1} parent=1 // pred_fallthru
      _
    // Predicated region
    $region14: #{tpu_custom_call.1} parent=1 // pred_check
      _
    $region15: #{tpu_custom_call.1} parent=1 // pred_check_branch
      %18 = sbr.rel (0) target = $region17
    $region16: #{tpu_custom_call.1} parent=1 // pred_region
      _
    $region17: #{tpu_custom_call.1} parent=1 // pred_fallthru
      _
    // Predicated region
    $region18: #{tpu_custom_call.1} parent=1 // pred_check
      _
    $region19: #{tpu_custom_call.1} parent=1 // pred_check_branch
      %20 = sbr.rel (0) target = $region21
    $region20: #{tpu_custom_call.1} parent=1 // pred_region
      _
    $region21: #{tpu_custom_call.1} parent=1 // pred_fallthru
      _
    %v22 = vld [vmem:[%s1] sm:$0xf]
    %v23 = vld [vmem:[%s1 + $0x4] sm:$0xf]
    %v24 = vld [vmem:[%s1 + $0x8] sm:$0xf]
    %v25 = vld [vmem:[%s1 + $0xc] sm:$0xf]
    %v26 = vld [vmem:[%s1 + $0x10] sm:$0xf]
    %v27 = vld [vmem:[%s1 + $0x14] sm:$0xf]
    %v28 = vld [vmem:[%s1 + $0x18] sm:$0xf]
    %v29 = vld [vmem:[%s1 + $0x1c] sm:$0xf]
    %v30 = vld [vmem:[%s1 + $0x20] sm:$0xf]
    %v31 = vld [vmem:[%s1 + $0x24] sm:$0xf]
    %v32 = vld [vmem:[%s1 + $0x28] sm:$0xf]
    %v33 = vld [vmem:[%s1 + $0x2c] sm:$0xf]
    %v34 = vld [vmem:[%s1 + $0x30] sm:$0xf]
    %v35 = vld [vmem:[%s1 + $0x34] sm:$0xf]
    %v36 = vld [vmem:[%s1 + $0x38] sm:$0xf]
    %v37 = vld [vmem:[%s1 + $0x3c] sm:$0xf]
    %v38 = vld [vmem:[%s1 + $0x40] sm:$0xf]
    %v39 = vld [vmem:[%s1 + $0x44] sm:$0xf]
    %v40 = vld [vmem:[%s1 + $0x48] sm:$0xf]
    %v41 = vld [vmem:[%s1 + $0x4c] sm:$0xf]
    %v42 = vld [vmem:[%s1 + $0x50] sm:$0xf]
    %v43 = vld [vmem:[%s1 + $0x54] sm:$0xf]
    %v44 = vld [vmem:[%s1 + $0x58] sm:$0xf]
    %v45 = vld [vmem:[%s1 + $0x5c] sm:$0xf]
    %v46 = vld [vmem:[%s3] sm:$0xff]
    %v47 = vld [vmem:[%s3 + $0x8] sm:$0xff]
    %v48 = vld [vmem:[%s3 + $0x10] sm:$0xff]
    %v49 = vld [vmem:[%s3 + $0x18] sm:$0xff]
    %v50 = vld [vmem:[%s3 + $0x20] sm:$0xff]
    %v51 = vld [vmem:[%s3 + $0x28] sm:$0xff]
    %v52 = vld [vmem:[%s3 + $0x30] sm:$0xff]
    %v53 = vld [vmem:[%s3 + $0x38] sm:$0xff]
    %v54 = vld [vmem:[%s3 + $0x40] sm:$0xff]
    %v55 = vld [vmem:[%s3 + $0x48] sm:$0xff]
    %v56 = vld [vmem:[%s3 + $0x50] sm:$0xff]
    %v57 = vld [vmem:[%s3 + $0x58] sm:$0xff]
    %v58 = vld [vmem:[%s3 + $0x60] sm:$0xff]
    %v59 = vld [vmem:[%s3 + $0x68] sm:$0xff]
    %v60 = vld [vmem:[%s3 + $0x70] sm:$0xff]
    %v61 = vld [vmem:[%s3 + $0x78] sm:$0xff]
    %v62 = vld [vmem:[%s2] sm:$0x1]
    %v64 = vlaneseq
    %v65 = vshrl.u32 %v64, 7
    %v66 = vsub.s32 0, %v65
    %v67 = vrot.slane %v62, %v66
    %v69 = vld [vmem:[%s4] sm:$0x3]
    %v71 = vlaneseq
    %v72 = vshrl.u32 %v71, 7
    %v73 = vsub.s32 0, %v72
    %v74 = vrot.slane %v69, %v73
    %v75 = vlaneseq
    %v76 = vshrl.u32 %v75, 7
    %v77 = vsub.s32 1, %v76
    %v78 = vrot.slane %v69, %v77
    %v81 = vld [vmem:[%s0] sm:$0xff]
    %v82 = vld [vmem:[%s0 + $0x8] sm:$0xff]
    %v83 = vld [vmem:[%s0 + $0x10] sm:$0xff]
    %v84 = vld [vmem:[%s0 + $0x18] sm:$0xff]
    %v85 = vld [vmem:[%s0 + $0x20] sm:$0xff]
    %v86 = vld [vmem:[%s0 + $0x28] sm:$0xff]
    %v87 = vld [vmem:[%s0 + $0x30] sm:$0xff]
    %v88 = vld [vmem:[%s0 + $0x38] sm:$0xff]
    %v89 = vld [vmem:[%s0 + $0x40] sm:$0xff]
    %v90 = vld [vmem:[%s0 + $0x48] sm:$0xff]
    %v91 = vld [vmem:[%s0 + $0x50] sm:$0xff]
    %v92 = vld [vmem:[%s0 + $0x58] sm:$0xff]
    %v93 = vld [vmem:[%s0 + $0x60] sm:$0xff]
    %v94 = vld [vmem:[%s0 + $0x68] sm:$0xff]
    %v95 = vld [vmem:[%s0 + $0x70] sm:$0xff]
    %v96 = vld [vmem:[%s0 + $0x78] sm:$0xff]
    %v97 = vpack.c.bf16 %v83, %v81
    %v98 = vpack.c.bf16 %v84, %v82
    %v99 = vpack.c.bf16 %v87, %v85
    %v100 = vpack.c.bf16 %v88, %v86
    %v125 = vunpack.c.l.b16 %v22
    %v126 = vunpack.c.l.b16 %v23
    %v127 = vunpack.c.l.b16 %v24
    %v128 = vunpack.c.l.b16 %v25
    %v129 = vunpack.c.l.b16 %v26
    %v130 = vunpack.c.l.b16 %v27
    %v131 = vunpack.c.l.b16 %v28
    %v132 = vunpack.c.l.b16 %v29
    %v133 = vunpack.c.l.b16 %v30
    %v134 = vunpack.c.l.b16 %v31
    %v135 = vunpack.c.l.b16 %v32
    %v136 = vunpack.c.l.b16 %v33
    %v137 = vunpack.c.l.b16 %v34
    %v138 = vunpack.c.l.b16 %v35
    %v139 = vunpack.c.l.b16 %v36
    %v140 = vunpack.c.l.b16 %v37
    %v141 = vunpack.c.l.b16 %v38
    %v142 = vunpack.c.l.b16 %v39
    %v143 = vunpack.c.l.b16 %v40
    %v144 = vunpack.c.l.b16 %v41
    %v145 = vunpack.c.l.b16 %v42
    %v146 = vunpack.c.l.b16 %v43
    %v147 = vunpack.c.l.b16 %v44
    %v148 = vunpack.c.l.b16 %v45
    %v149 = vpack.c.b16 %v126, %v125
    %v150 = vpack.c.b16 %v128, %v127
    %v151 = vpack.c.b16 %v130, %v129
    %v152 = vpack.c.b16 %v132, %v131
    %v153 = vpack.c.b16 %v134, %v133
    %v154 = vpack.c.b16 %v136, %v135
    %v155 = vpack.c.b16 %v138, %v137
    %v156 = vpack.c.b16 %v140, %v139
    %v157 = vpack.c.b16 %v142, %v141
    %v158 = vpack.c.b16 %v144, %v143
    %v159 = vpack.c.b16 %v146, %v145
    %v160 = vpack.c.b16 %v148, %v147
    %vm173 = vcmask 523264
    %v175 = vsel %vm173, %v98, 0
    %v178 = vsel %vm173, %v100, 0
    %180 = vmatprep.subr.bf16.mxu0 0
    %181 = vmatpush1.bf16.msra.mxu0 %v156
    %182 = vmatprep.subr.bf16.mxu0 0
    %183 = vmatpush1.bf16.msra.mxu0 %v155
    %184 = vmatprep.subr.bf16.mxu0 0
    %185 = vmatpush1.bf16.msra.mxu0 %v154
    %186 = vmatprep.subr.bf16.mxu0 0
    %187 = vmatpush1.bf16.msra.mxu0 %v153
    %188 = vmatprep.subr.bf16.mxu0 0
    %189 = vmatpush1.bf16.msra.mxu0 %v152
    %190 = vmatprep.subr.bf16.mxu0 0
    %191 = vmatpush1.bf16.msra.mxu0 %v151
    %192 = vmatprep.subr.bf16.mxu0 0
    %193 = vmatpush1.bf16.msra.mxu0 %v150
    %194 = vmatprep.subr.bf16.mxu0 0
    %195 = vmatpush1.bf16.msra.mxu0 %v149
    %196 = vmatprep.subr.bf16.mxu0 0
    %197 = vmatpush2.bf16.msra.mxu0 0
    %198 = vmatprep.subr.bf16.mxu0 0
    %199 = vmatpush2.bf16.msra.mxu0 0
    %200 = vmatprep.subr.bf16.mxu0 0
    %201 = vmatpush2.bf16.msra.mxu0 0
    %202 = vmatprep.subr.bf16.mxu0 0
    %203 = vmatpush2.bf16.msra.mxu0 0
    %204 = vmatprep.subr.bf16.mxu0 0
    %205 = vmatpush2.bf16.msra.mxu0 %v160
    %206 = vmatprep.subr.bf16.mxu0 0
    %207 = vmatpush2.bf16.msra.mxu0 %v159
    %208 = vmatprep.subr.bf16.mxu0 0
    %209 = vmatpush2.bf16.msra.mxu0 %v158
    %210 = vmatprep.subr.bf16.mxu0 0
    %211 = vmatpush2.bf16.msra.mxu0 %v157
    %212 = vmatprep.mubr.bf16.mxu0 %v175
    %213 = vmatmul.mubr.bf16.gmra.mxu0 %v97
    %v214 = vpop.f32.mrf.mxu0
    %v215 = vadd.f32 %v67, %v214
    %v216 = vpop.f32.mrf.mxu0
    %v217 = vpop.f32.mrf.mxu0
    %v218 = vadd.f32 %v67, %v217
    %v219 = vpop.f32.mrf.mxu0
    %220 = vmatprep.mubr.bf16.mxu0 %v178
    %221 = vmatmul.mubr.bf16.gmra.mxu0 %v99
    %v222 = vpop.f32.mrf.mxu0
    %v223 = vadd.f32 %v67, %v222
    %v224 = vpop.f32.mrf.mxu0
    %v225 = vpop.f32.mrf.mxu0
    %v226 = vadd.f32 %v67, %v225
    %v227 = vpop.f32.mrf.mxu0
    %228 = vdwg.mxu0
    %v229 = vmax.f32 %v215, 0.0
    %v230 = vmax.f32 %v218, 0.0
    %v231 = vmax.f32 %v223, 0.0
    %v232 = vmax.f32 %v226, 0.0
    %v233 = vpack.c.bf16 %v230, %v229
    %v234 = vpack.c.bf16 %v232, %v231
    %v251 = vunpack.c.l.b16 %v46
    %v252 = vunpack.c.h.b16 %v46
    %v253 = vunpack.c.l.b16 %v47
    %v254 = vunpack.c.h.b16 %v47
    %v255 = vunpack.c.l.b16 %v48
    %v256 = vunpack.c.h.b16 %v48
    %v257 = vunpack.c.l.b16 %v49
    %v258 = vunpack.c.h.b16 %v49
    %v259 = vunpack.c.l.b16 %v50
    %v260 = vunpack.c.h.b16 %v50
    %v261 = vunpack.c.l.b16 %v51
    %v262 = vunpack.c.h.b16 %v51
    %v263 = vunpack.c.l.b16 %v52
    %v264 = vunpack.c.h.b16 %v52
    %v265 = vunpack.c.l.b16 %v53
    %v266 = vunpack.c.h.b16 %v53
    %v267 = vunpack.c.l.b16 %v54
    %v268 = vunpack.c.h.b16 %v54
    %v269 = vunpack.c.l.b16 %v55
    %v270 = vunpack.c.h.b16 %v55
    %v271 = vunpack.c.l.b16 %v56
    %v272 = vunpack.c.h.b16 %v56
    %v273 = vunpack.c.l.b16 %v57
    %v274 = vunpack.c.h.b16 %v57
    %v275 = vunpack.c.l.b16 %v58
    %v276 = vunpack.c.h.b16 %v58
    %v277 = vunpack.c.l.b16 %v59
    %v278 = vunpack.c.h.b16 %v59
    %v279 = vunpack.c.l.b16 %v60
    %v280 = vunpack.c.h.b16 %v60
    %v281 = vunpack.c.l.b16 %v61
    %v282 = vunpack.c.h.b16 %v61
    %v283 = vpack.c.b16 %v253, %v251
    %v284 = vpack.c.b16 %v254, %v252
    %v285 = vpack.c.b16 %v257, %v255
    %v286 = vpack.c.b16 %v258, %v256
    %v287 = vpack.c.b16 %v261, %v259
    %v288 = vpack.c.b16 %v262, %v260
    %v289 = vpack.c.b16 %v265, %v263
    %v290 = vpack.c.b16 %v266, %v264
    %v291 = vpack.c.b16 %v269, %v267
    %v292 = vpack.c.b16 %v270, %v268
    %v293 = vpack.c.b16 %v273, %v271
    %v294 = vpack.c.b16 %v274, %v272
    %v295 = vpack.c.b16 %v277, %v275
    %v296 = vpack.c.b16 %v278, %v276
    %v297 = vpack.c.b16 %v281, %v279
    %v298 = vpack.c.b16 %v282, %v280
    %315 = vmatprep.subr.bf16.mxu0 %v298
    %316 = vmatpush1.bf16.msra.mxu0 %v297
    %317 = vmatprep.subr.bf16.mxu0 %v296
    %318 = vmatpush1.bf16.msra.mxu0 %v295
    %319 = vmatprep.subr.bf16.mxu0 %v294
    %320 = vmatpush1.bf16.msra.mxu0 %v293
    %321 = vmatprep.subr.bf16.mxu0 %v292
    %322 = vmatpush1.bf16.msra.mxu0 %v291
    %323 = vmatprep.subr.bf16.mxu0 %v290
    %324 = vmatpush1.bf16.msra.mxu0 %v289
    %325 = vmatprep.subr.bf16.mxu0 %v288
    %326 = vmatpush1.bf16.msra.mxu0 %v287
    %327 = vmatprep.subr.bf16.mxu0 %v286
    %328 = vmatpush1.bf16.msra.mxu0 %v285
    %329 = vmatprep.subr.bf16.mxu0 %v284
    %330 = vmatpush1.bf16.msra.mxu0 %v283
    %331 = vmatprep.subr.bf16.mxu0 0
    %332 = vmatpush2.bf16.msra.mxu0 0
    %333 = vmatprep.subr.bf16.mxu0 0
    %334 = vmatpush2.bf16.msra.mxu0 0
    %335 = vmatprep.subr.bf16.mxu0 0
    %336 = vmatpush2.bf16.msra.mxu0 0
    %337 = vmatprep.subr.bf16.mxu0 0
    %338 = vmatpush2.bf16.msra.mxu0 0
    %339 = vmatprep.subr.bf16.mxu0 0
    %340 = vmatpush2.bf16.msra.mxu0 0
    %341 = vmatprep.subr.bf16.mxu0 0
    %342 = vmatpush2.bf16.msra.mxu0 0
    %343 = vmatprep.subr.bf16.mxu0 0
    %344 = vmatpush2.bf16.msra.mxu0 0
    %345 = vmatprep.subr.bf16.mxu0 0
    %346 = vmatpush2.bf16.msra.mxu0 0
    %347 = vmatprep.mubr.bf16.mxu0 0
    %348 = vmatmul.mubr.bf16.gmra.mxu0 %v233
    %v349 = vpop.f32.mrf.mxu0
    %v350 = vadd.f32 %v74, %v349
    %v351 = vpop.f32.mrf.mxu0
    %v352 = vadd.f32 %v78, %v351
    %v353 = vpop.f32.mrf.mxu0
    %v354 = vadd.f32 %v74, %v353
    %v355 = vpop.f32.mrf.mxu0
    %v356 = vadd.f32 %v78, %v355
    %357 = vmatprep.mubr.bf16.mxu0 0
    %358 = vmatmul.mubr.bf16.gmra.mxu0 %v234
    %v359 = vpop.f32.mrf.mxu0
    %v360 = vadd.f32 %v74, %v359
    %v361 = vpop.f32.mrf.mxu0
    %v362 = vadd.f32 %v78, %v361
    %v363 = vpop.f32.mrf.mxu0
    %v364 = vadd.f32 %v74, %v363
    %v365 = vpop.f32.mrf.mxu0
    %v366 = vadd.f32 %v78, %v365
    %367 = vdwg.mxu0
    %v368 = vpack.c.bf16 %v91, %v89
    %v369 = vpack.c.bf16 %v92, %v90
    %v370 = vpack.c.bf16 %v95, %v93
    %v371 = vpack.c.bf16 %v96, %v94
    %v373 = vsel %vm173, %v369, 0
    %v376 = vsel %vm173, %v371, 0
    %378 = vmatprep.subr.bf16.mxu0 0
    %379 = vmatpush1.bf16.msra.mxu0 %v156
    %380 = vmatprep.subr.bf16.mxu0 0
    %381 = vmatpush1.bf16.msra.mxu0 %v155
    %382 = vmatprep.subr.bf16.mxu0 0
    %383 = vmatpush1.bf16.msra.mxu0 %v154
    %384 = vmatprep.subr.bf16.mxu0 0
    %385 = vmatpush1.bf16.msra.mxu0 %v153
    %386 = vmatprep.subr.bf16.mxu0 0
    %387 = vmatpush1.bf16.msra.mxu0 %v152
    %388 = vmatprep.subr.bf16.mxu0 0
    %389 = vmatpush1.bf16.msra.mxu0 %v151
    %390 = vmatprep.subr.bf16.mxu0 0
    %391 = vmatpush1.bf16.msra.mxu0 %v150
    %392 = vmatprep.subr.bf16.mxu0 0
    %393 = vmatpush1.bf16.msra.mxu0 %v149
    %394 = vmatprep.subr.bf16.mxu0 0
    %395 = vmatpush2.bf16.msra.mxu0 0
    %396 = vmatprep.subr.bf16.mxu0 0
    %397 = vmatpush2.bf16.msra.mxu0 0
    %398 = vmatprep.subr.bf16.mxu0 0
    %399 = vmatpush2.bf16.msra.mxu0 0
    %400 = vmatprep.subr.bf16.mxu0 0
    %401 = vmatpush2.bf16.msra.mxu0 0
    %402 = vmatprep.subr.bf16.mxu0 0
    %403 = vmatpush2.bf16.msra.mxu0 %v160
    %404 = vmatprep.subr.bf16.mxu0 0
    %405 = vmatpush2.bf16.msra.mxu0 %v159
    %406 = vmatprep.subr.bf16.mxu0 0
    %407 = vmatpush2.bf16.msra.mxu0 %v158
    %408 = vmatprep.subr.bf16.mxu0 0
    %409 = vmatpush2.bf16.msra.mxu0 %v157
    %410 = vmatprep.mubr.bf16.mxu0 %v373
    %411 = vmatmul.mubr.bf16.gmra.mxu0 %v368
    %v412 = vpop.f32.mrf.mxu0
    %v413 = vadd.f32 %v67, %v412
    %v414 = vpop.f32.mrf.mxu0
    %v415 = vpop.f32.mrf.mxu0
    %v416 = vadd.f32 %v67, %v415
    %v417 = vpop.f32.mrf.mxu0
    %418 = vmatprep.mubr.bf16.mxu0 %v376
    %419 = vmatmul.mubr.bf16.gmra.mxu0 %v370
    %v420 = vpop.f32.mrf.mxu0
    %v421 = vadd.f32 %v67, %v420
    %v422 = vpop.f32.mrf.mxu0
    %v423 = vpop.f32.mrf.mxu0
    %v424 = vadd.f32 %v67, %v423
    %v425 = vpop.f32.mrf.mxu0
    %426 = vdwg.mxu0
    %v427 = vmax.f32 %v413, 0.0
    %v428 = vmax.f32 %v416, 0.0
    %v429 = vmax.f32 %v421, 0.0
    %v430 = vmax.f32 %v424, 0.0
    %v431 = vpack.c.bf16 %v428, %v427
    %v432 = vpack.c.bf16 %v430, %v429
    %433 = vmatprep.subr.bf16.mxu0 %v298
    %434 = vmatpush1.bf16.msra.mxu0 %v297
    %435 = vmatprep.subr.bf16.mxu0 %v296
    %436 = vmatpush1.bf16.msra.mxu0 %v295
    %437 = vmatprep.subr.bf16.mxu0 %v294
    %438 = vmatpush1.bf16.msra.mxu0 %v293
    %439 = vmatprep.subr.bf16.mxu0 %v292
    %440 = vmatpush1.bf16.msra.mxu0 %v291
    %441 = vmatprep.subr.bf16.mxu0 %v290
    %442 = vmatpush1.bf16.msra.mxu0 %v289
    %443 = vmatprep.subr.bf16.mxu0 %v288
    %444 = vmatpush1.bf16.msra.mxu0 %v287
    %445 = vmatprep.subr.bf16.mxu0 %v286
    %446 = vmatpush1.bf16.msra.mxu0 %v285
    %447 = vmatprep.subr.bf16.mxu0 %v284
    %448 = vmatpush1.bf16.msra.mxu0 %v283
    %449 = vmatprep.subr.bf16.mxu0 0
    %450 = vmatpush2.bf16.msra.mxu0 0
    %451 = vmatprep.subr.bf16.mxu0 0
    %452 = vmatpush2.bf16.msra.mxu0 0
    %453 = vmatprep.subr.bf16.mxu0 0
    %454 = vmatpush2.bf16.msra.mxu0 0
    %455 = vmatprep.subr.bf16.mxu0 0
    %456 = vmatpush2.bf16.msra.mxu0 0
    %457 = vmatprep.subr.bf16.mxu0 0
    %458 = vmatpush2.bf16.msra.mxu0 0
    %459 = vmatprep.subr.bf16.mxu0 0
    %460 = vmatpush2.bf16.msra.mxu0 0
    %461 = vmatprep.subr.bf16.mxu0 0
    %462 = vmatpush2.bf16.msra.mxu0 0
    %463 = vmatprep.subr.bf16.mxu0 0
    %464 = vmatpush2.bf16.msra.mxu0 0
    %465 = vmatprep.mubr.bf16.mxu0 0
    %466 = vmatmul.mubr.bf16.gmra.mxu0 %v431
    %v467 = vpop.f32.mrf.mxu0
    %v468 = vadd.f32 %v74, %v467
    %v469 = vpop.f32.mrf.mxu0
    %v470 = vadd.f32 %v78, %v469
    %v471 = vpop.f32.mrf.mxu0
    %v472 = vadd.f32 %v74, %v471
    %v473 = vpop.f32.mrf.mxu0
    %v474 = vadd.f32 %v78, %v473
    %475 = vmatprep.mubr.bf16.mxu0 0
    %476 = vmatmul.mubr.bf16.gmra.mxu0 %v432
    %v477 = vpop.f32.mrf.mxu0
    %v478 = vadd.f32 %v74, %v477
    %v479 = vpop.f32.mrf.mxu0
    %v480 = vadd.f32 %v78, %v479
    %v481 = vpop.f32.mrf.mxu0
    %v482 = vadd.f32 %v74, %v481
    %v483 = vpop.f32.mrf.mxu0
    %v484 = vadd.f32 %v78, %v483
    %485 = vdwg.mxu0
    %v486 = vmul.f32 %v350, 0.083333336
    %v487 = vmul.f32 %v352, 0.083333336
    %v488 = vmul.f32 %v354, 0.083333336
    %v489 = vmul.f32 %v356, 0.083333336
    %v490 = vmul.f32 %v360, 0.083333336
    %v491 = vmul.f32 %v362, 0.083333336
    %v492 = vmul.f32 %v364, 0.083333336
    %v493 = vmul.f32 %v366, 0.083333336
    %v494 = vadd.f32 %v81, %v486
    %v495 = vadd.f32 %v82, %v487
    %v496 = vadd.f32 %v83, %v488
    %v497 = vadd.f32 %v84, %v489
    %v498 = vadd.f32 %v85, %v490
    %v499 = vadd.f32 %v86, %v491
    %v500 = vadd.f32 %v87, %v492
    %v501 = vadd.f32 %v88, %v493
    %v502 = vpack.c.bf16 %v496, %v494
    %v503 = vpack.c.bf16 %v497, %v495
    %v504 = vpack.c.bf16 %v500, %v498
    %v505 = vpack.c.bf16 %v501, %v499
    %v507 = vsel %vm173, %v503, 0
    %v510 = vsel %vm173, %v505, 0
    %512 = vmatprep.subr.bf16.mxu0 0
    %513 = vmatpush1.bf16.msra.mxu0 %v156
    %514 = vmatprep.subr.bf16.mxu0 0
    %515 = vmatpush1.bf16.msra.mxu0 %v155
    %516 = vmatprep.subr.bf16.mxu0 0
    %517 = vmatpush1.bf16.msra.mxu0 %v154
    %518 = vmatprep.subr.bf16.mxu0 0
    %519 = vmatpush1.bf16.msra.mxu0 %v153
    %520 = vmatprep.subr.bf16.mxu0 0
    %521 = vmatpush1.bf16.msra.mxu0 %v152
    %522 = vmatprep.subr.bf16.mxu0 0
    %523 = vmatpush1.bf16.msra.mxu0 %v151
    %524 = vmatprep.subr.bf16.mxu0 0
    %525 = vmatpush1.bf16.msra.mxu0 %v150
    %526 = vmatprep.subr.bf16.mxu0 0
    %527 = vmatpush1.bf16.msra.mxu0 %v149
    %528 = vmatprep.subr.bf16.mxu0 0
    %529 = vmatpush2.bf16.msra.mxu0 0
    %530 = vmatprep.subr.bf16.mxu0 0
    %531 = vmatpush2.bf16.msra.mxu0 0
    %532 = vmatprep.subr.bf16.mxu0 0
    %533 = vmatpush2.bf16.msra.mxu0 0
    %534 = vmatprep.subr.bf16.mxu0 0
    %535 = vmatpush2.bf16.msra.mxu0 0
    %536 = vmatprep.subr.bf16.mxu0 0
    %537 = vmatpush2.bf16.msra.mxu0 %v160
    %538 = vmatprep.subr.bf16.mxu0 0
    %539 = vmatpush2.bf16.msra.mxu0 %v159
    %540 = vmatprep.subr.bf16.mxu0 0
    %541 = vmatpush2.bf16.msra.mxu0 %v158
    %542 = vmatprep.subr.bf16.mxu0 0
    %543 = vmatpush2.bf16.msra.mxu0 %v157
    %544 = vmatprep.mubr.bf16.mxu0 %v507
    %545 = vmatmul.mubr.bf16.gmra.mxu0 %v502
    %v546 = vpop.f32.mrf.mxu0
    %v547 = vadd.f32 %v67, %v546
    %v548 = vpop.f32.mrf.mxu0
    %v549 = vpop.f32.mrf.mxu0
    %v550 = vadd.f32 %v67, %v549
    %v551 = vpop.f32.mrf.mxu0
    %552 = vmatprep.mubr.bf16.mxu0 %v510
    %553 = vmatmul.mubr.bf16.gmra.mxu0 %v504
    %v554 = vpop.f32.mrf.mxu0
    %v555 = vadd.f32 %v67, %v554
    %v556 = vpop.f32.mrf.mxu0
    %v557 = vpop.f32.mrf.mxu0
    %v558 = vadd.f32 %v67, %v557
    %v559 = vpop.f32.mrf.mxu0
    %560 = vdwg.mxu0
    %v561 = vmax.f32 %v547, 0.0
    %v562 = vmax.f32 %v550, 0.0
    %v563 = vmax.f32 %v555, 0.0
    %v564 = vmax.f32 %v558, 0.0
    %v565 = vpack.c.bf16 %v562, %v561
    %v566 = vpack.c.bf16 %v564, %v563
    %567 = vmatprep.subr.bf16.mxu0 %v298
    %568 = vmatpush1.bf16.msra.mxu0 %v297
    %569 = vmatprep.subr.bf16.mxu0 %v296
    %570 = vmatpush1.bf16.msra.mxu0 %v295
    %571 = vmatprep.subr.bf16.mxu0 %v294
    %572 = vmatpush1.bf16.msra.mxu0 %v293
    %573 = vmatprep.subr.bf16.mxu0 %v292
    %574 = vmatpush1.bf16.msra.mxu0 %v291
    %575 = vmatprep.subr.bf16.mxu0 %v290
    %576 = vmatpush1.bf16.msra.mxu0 %v289
    %577 = vmatprep.subr.bf16.mxu0 %v288
    %578 = vmatpush1.bf16.msra.mxu0 %v287
    %579 = vmatprep.subr.bf16.mxu0 %v286
    %580 = vmatpush1.bf16.msra.mxu0 %v285
    %581 = vmatprep.subr.bf16.mxu0 %v284
    %582 = vmatpush1.bf16.msra.mxu0 %v283
    %583 = vmatprep.subr.bf16.mxu0 0
    %584 = vmatpush2.bf16.msra.mxu0 0
    %585 = vmatprep.subr.bf16.mxu0 0
    %586 = vmatpush2.bf16.msra.mxu0 0
    %587 = vmatprep.subr.bf16.mxu0 0
    %588 = vmatpush2.bf16.msra.mxu0 0
    %589 = vmatprep.subr.bf16.mxu0 0
    %590 = vmatpush2.bf16.msra.mxu0 0
    %591 = vmatprep.subr.bf16.mxu0 0
    %592 = vmatpush2.bf16.msra.mxu0 0
    %593 = vmatprep.subr.bf16.mxu0 0
    %594 = vmatpush2.bf16.msra.mxu0 0
    %595 = vmatprep.subr.bf16.mxu0 0
    %596 = vmatpush2.bf16.msra.mxu0 0
    %597 = vmatprep.subr.bf16.mxu0 0
    %598 = vmatpush2.bf16.msra.mxu0 0
    %599 = vmatprep.mubr.bf16.mxu0 0
    %600 = vmatmul.mubr.bf16.gmra.mxu0 %v565
    %v601 = vpop.f32.mrf.mxu0
    %v602 = vadd.f32 %v74, %v601
    %v603 = vpop.f32.mrf.mxu0
    %v604 = vadd.f32 %v78, %v603
    %v605 = vpop.f32.mrf.mxu0
    %v606 = vadd.f32 %v74, %v605
    %v607 = vpop.f32.mrf.mxu0
    %v608 = vadd.f32 %v78, %v607
    %609 = vmatprep.mubr.bf16.mxu0 0
    %610 = vmatmul.mubr.bf16.gmra.mxu0 %v566
    %v611 = vpop.f32.mrf.mxu0
    %v612 = vadd.f32 %v74, %v611
    %v613 = vpop.f32.mrf.mxu0
    %v614 = vadd.f32 %v78, %v613
    %v615 = vpop.f32.mrf.mxu0
    %v616 = vadd.f32 %v74, %v615
    %v617 = vpop.f32.mrf.mxu0
    %v618 = vadd.f32 %v78, %v617
    %619 = vdwg.mxu0
    %v620 = vmul.f32 %v468, 0.083333336
    %v621 = vmul.f32 %v470, 0.083333336
    %v622 = vmul.f32 %v472, 0.083333336
    %v623 = vmul.f32 %v474, 0.083333336
    %v624 = vmul.f32 %v478, 0.083333336
    %v625 = vmul.f32 %v480, 0.083333336
    %v626 = vmul.f32 %v482, 0.083333336
    %v627 = vmul.f32 %v484, 0.083333336
    %v628 = vadd.f32 %v89, %v620
    %v629 = vadd.f32 %v90, %v621
    %v630 = vadd.f32 %v91, %v622
    %v631 = vadd.f32 %v92, %v623
    %v632 = vadd.f32 %v93, %v624
    %v633 = vadd.f32 %v94, %v625
    %v634 = vadd.f32 %v95, %v626
    %v635 = vadd.f32 %v96, %v627
    %v636 = vpack.c.bf16 %v630, %v628
    %v637 = vpack.c.bf16 %v631, %v629
    %v638 = vpack.c.bf16 %v634, %v632
    %v639 = vpack.c.bf16 %v635, %v633
    %v641 = vsel %vm173, %v637, 0
    %v644 = vsel %vm173, %v639, 0
    %646 = vmatprep.subr.bf16.mxu0 0
    %647 = vmatpush1.bf16.msra.mxu0 %v156
    %648 = vmatprep.subr.bf16.mxu0 0
    %649 = vmatpush1.bf16.msra.mxu0 %v155
    %650 = vmatprep.subr.bf16.mxu0 0
    %651 = vmatpush1.bf16.msra.mxu0 %v154
    %652 = vmatprep.subr.bf16.mxu0 0
    %653 = vmatpush1.bf16.msra.mxu0 %v153
    %654 = vmatprep.subr.bf16.mxu0 0
    %655 = vmatpush1.bf16.msra.mxu0 %v152
    %656 = vmatprep.subr.bf16.mxu0 0
    %657 = vmatpush1.bf16.msra.mxu0 %v151
    %658 = vmatprep.subr.bf16.mxu0 0
    %659 = vmatpush1.bf16.msra.mxu0 %v150
    %660 = vmatprep.subr.bf16.mxu0 0
    %661 = vmatpush1.bf16.msra.mxu0 %v149
    %662 = vmatprep.subr.bf16.mxu0 0
    %663 = vmatpush2.bf16.msra.mxu0 0
    %664 = vmatprep.subr.bf16.mxu0 0
    %665 = vmatpush2.bf16.msra.mxu0 0
    %666 = vmatprep.subr.bf16.mxu0 0
    %667 = vmatpush2.bf16.msra.mxu0 0
    %668 = vmatprep.subr.bf16.mxu0 0
    %669 = vmatpush2.bf16.msra.mxu0 0
    %670 = vmatprep.subr.bf16.mxu0 0
    %671 = vmatpush2.bf16.msra.mxu0 %v160
    %672 = vmatprep.subr.bf16.mxu0 0
    %673 = vmatpush2.bf16.msra.mxu0 %v159
    %674 = vmatprep.subr.bf16.mxu0 0
    %675 = vmatpush2.bf16.msra.mxu0 %v158
    %676 = vmatprep.subr.bf16.mxu0 0
    %677 = vmatpush2.bf16.msra.mxu0 %v157
    %678 = vmatprep.mubr.bf16.mxu0 %v641
    %679 = vmatmul.mubr.bf16.gmra.mxu0 %v636
    %v680 = vpop.f32.mrf.mxu0
    %v681 = vadd.f32 %v67, %v680
    %v682 = vpop.f32.mrf.mxu0
    %v683 = vpop.f32.mrf.mxu0
    %v684 = vadd.f32 %v67, %v683
    %v685 = vpop.f32.mrf.mxu0
    %686 = vmatprep.mubr.bf16.mxu0 %v644
    %687 = vmatmul.mubr.bf16.gmra.mxu0 %v638
    %v688 = vpop.f32.mrf.mxu0
    %v689 = vadd.f32 %v67, %v688
    %v690 = vpop.f32.mrf.mxu0
    %v691 = vpop.f32.mrf.mxu0
    %v692 = vadd.f32 %v67, %v691
    %v693 = vpop.f32.mrf.mxu0
    %694 = vdwg.mxu0
    %v695 = vmax.f32 %v681, 0.0
    %v696 = vmax.f32 %v684, 0.0
    %v697 = vmax.f32 %v689, 0.0
    %v698 = vmax.f32 %v692, 0.0
    %v699 = vpack.c.bf16 %v696, %v695
    %v700 = vpack.c.bf16 %v698, %v697
    %701 = vmatprep.subr.bf16.mxu0 %v298
    %702 = vmatpush1.bf16.msra.mxu0 %v297
    %703 = vmatprep.subr.bf16.mxu0 %v296
    %704 = vmatpush1.bf16.msra.mxu0 %v295
    %705 = vmatprep.subr.bf16.mxu0 %v294
    %706 = vmatpush1.bf16.msra.mxu0 %v293
    %707 = vmatprep.subr.bf16.mxu0 %v292
    %708 = vmatpush1.bf16.msra.mxu0 %v291
    %709 = vmatprep.subr.bf16.mxu0 %v290
    %710 = vmatpush1.bf16.msra.mxu0 %v289
    %711 = vmatprep.subr.bf16.mxu0 %v288
    %712 = vmatpush1.bf16.msra.mxu0 %v287
    %713 = vmatprep.subr.bf16.mxu0 %v286
    %714 = vmatpush1.bf16.msra.mxu0 %v285
    %715 = vmatprep.subr.bf16.mxu0 %v284
    %716 = vmatpush1.bf16.msra.mxu0 %v283
    %717 = vmatprep.subr.bf16.mxu0 0
    %718 = vmatpush2.bf16.msra.mxu0 0
    %719 = vmatprep.subr.bf16.mxu0 0
    %720 = vmatpush2.bf16.msra.mxu0 0
    %721 = vmatprep.subr.bf16.mxu0 0
    %722 = vmatpush2.bf16.msra.mxu0 0
    %723 = vmatprep.subr.bf16.mxu0 0
    %724 = vmatpush2.bf16.msra.mxu0 0
    %725 = vmatprep.subr.bf16.mxu0 0
    %726 = vmatpush2.bf16.msra.mxu0 0
    %727 = vmatprep.subr.bf16.mxu0 0
    %728 = vmatpush2.bf16.msra.mxu0 0
    %729 = vmatprep.subr.bf16.mxu0 0
    %730 = vmatpush2.bf16.msra.mxu0 0
    %731 = vmatprep.subr.bf16.mxu0 0
    %732 = vmatpush2.bf16.msra.mxu0 0
    %733 = vmatprep.mubr.bf16.mxu0 0
    %734 = vmatmul.mubr.bf16.gmra.mxu0 %v699
    %v735 = vpop.f32.mrf.mxu0
    %v736 = vadd.f32 %v74, %v735
    %v737 = vpop.f32.mrf.mxu0
    %v738 = vadd.f32 %v78, %v737
    %v739 = vpop.f32.mrf.mxu0
    %v740 = vadd.f32 %v74, %v739
    %v741 = vpop.f32.mrf.mxu0
    %v742 = vadd.f32 %v78, %v741
    %743 = vmatprep.mubr.bf16.mxu0 0
    %744 = vmatmul.mubr.bf16.gmra.mxu0 %v700
    %v745 = vpop.f32.mrf.mxu0
    %v746 = vadd.f32 %v74, %v745
    %v747 = vpop.f32.mrf.mxu0
    %v748 = vadd.f32 %v78, %v747
    %v749 = vpop.f32.mrf.mxu0
    %v750 = vadd.f32 %v74, %v749
    %v751 = vpop.f32.mrf.mxu0
    %v752 = vadd.f32 %v78, %v751
    %753 = vdwg.mxu0
    %v754 = vmul.f32 %v350, 0.33333334
    %v755 = vmul.f32 %v352, 0.33333334
    %v756 = vmul.f32 %v354, 0.33333334
    %v757 = vmul.f32 %v356, 0.33333334
    %v758 = vmul.f32 %v360, 0.33333334
    %v759 = vmul.f32 %v362, 0.33333334
    %v760 = vmul.f32 %v364, 0.33333334
    %v761 = vmul.f32 %v366, 0.33333334
    %v762 = vsub.f32 %v602, %v754
    %v763 = vsub.f32 %v604, %v755
    %v764 = vsub.f32 %v606, %v756
    %v765 = vsub.f32 %v608, %v757
    %v766 = vsub.f32 %v612, %v758
    %v767 = vsub.f32 %v614, %v759
    %v768 = vsub.f32 %v616, %v760
    %v769 = vsub.f32 %v618, %v761
    %v770 = vmul.f32 %v762, 0.25
    %v771 = vmul.f32 %v763, 0.25
    %v772 = vmul.f32 %v764, 0.25
    %v773 = vmul.f32 %v765, 0.25
    %v774 = vmul.f32 %v766, 0.25
    %v775 = vmul.f32 %v767, 0.25
    %v776 = vmul.f32 %v768, 0.25
    %v777 = vmul.f32 %v769, 0.25
    %v778 = vadd.f32 %v81, %v770
    %v779 = vadd.f32 %v82, %v771
    %v780 = vadd.f32 %v83, %v772
    %v781 = vadd.f32 %v84, %v773
    %v782 = vadd.f32 %v85, %v774
    %v783 = vadd.f32 %v86, %v775
    %v784 = vadd.f32 %v87, %v776
    %v785 = vadd.f32 %v88, %v777
    %v786 = vpack.c.bf16 %v780, %v778
    %v787 = vpack.c.bf16 %v781, %v779
    %v788 = vpack.c.bf16 %v784, %v782
    %v789 = vpack.c.bf16 %v785, %v783
    %v791 = vsel %vm173, %v787, 0
    %v794 = vsel %vm173, %v789, 0
    %796 = vmatprep.subr.bf16.mxu0 0
    %797 = vmatpush1.bf16.msra.mxu0 %v156
    %798 = vmatprep.subr.bf16.mxu0 0
    %799 = vmatpush1.bf16.msra.mxu0 %v155
    %800 = vmatprep.subr.bf16.mxu0 0
    %801 = vmatpush1.bf16.msra.mxu0 %v154
    %802 = vmatprep.subr.bf16.mxu0 0
    %803 = vmatpush1.bf16.msra.mxu0 %v153
    %804 = vmatprep.subr.bf16.mxu0 0
    %805 = vmatpush1.bf16.msra.mxu0 %v152
    %806 = vmatprep.subr.bf16.mxu0 0
    %807 = vmatpush1.bf16.msra.mxu0 %v151
    %808 = vmatprep.subr.bf16.mxu0 0
    %809 = vmatpush1.bf16.msra.mxu0 %v150
    %810 = vmatprep.subr.bf16.mxu0 0
    %811 = vmatpush1.bf16.msra.mxu0 %v149
    %812 = vmatprep.subr.bf16.mxu0 0
    %813 = vmatpush2.bf16.msra.mxu0 0
    %814 = vmatprep.subr.bf16.mxu0 0
    %815 = vmatpush2.bf16.msra.mxu0 0
    %816 = vmatprep.subr.bf16.mxu0 0
    %817 = vmatpush2.bf16.msra.mxu0 0
    %818 = vmatprep.subr.bf16.mxu0 0
    %819 = vmatpush2.bf16.msra.mxu0 0
    %820 = vmatprep.subr.bf16.mxu0 0
    %821 = vmatpush2.bf16.msra.mxu0 %v160
    %822 = vmatprep.subr.bf16.mxu0 0
    %823 = vmatpush2.bf16.msra.mxu0 %v159
    %824 = vmatprep.subr.bf16.mxu0 0
    %825 = vmatpush2.bf16.msra.mxu0 %v158
    %826 = vmatprep.subr.bf16.mxu0 0
    %827 = vmatpush2.bf16.msra.mxu0 %v157
    %828 = vmatprep.mubr.bf16.mxu0 %v791
    %829 = vmatmul.mubr.bf16.gmra.mxu0 %v786
    %v830 = vpop.f32.mrf.mxu0
    %v831 = vadd.f32 %v67, %v830
    %v832 = vpop.f32.mrf.mxu0
    %v833 = vpop.f32.mrf.mxu0
    %v834 = vadd.f32 %v67, %v833
    %v835 = vpop.f32.mrf.mxu0
    %836 = vmatprep.mubr.bf16.mxu0 %v794
    %837 = vmatmul.mubr.bf16.gmra.mxu0 %v788
    %v838 = vpop.f32.mrf.mxu0
    %v839 = vadd.f32 %v67, %v838
    %v840 = vpop.f32.mrf.mxu0
    %v841 = vpop.f32.mrf.mxu0
    %v842 = vadd.f32 %v67, %v841
    %v843 = vpop.f32.mrf.mxu0
    %844 = vdwg.mxu0
    %v845 = vmax.f32 %v831, 0.0
    %v846 = vmax.f32 %v834, 0.0
    %v847 = vmax.f32 %v839, 0.0
    %v848 = vmax.f32 %v842, 0.0
    %v849 = vpack.c.bf16 %v846, %v845
    %v850 = vpack.c.bf16 %v848, %v847
    %851 = vmatprep.subr.bf16.mxu0 %v298
    %852 = vmatpush1.bf16.msra.mxu0 %v297
    %853 = vmatprep.subr.bf16.mxu0 %v296
    %854 = vmatpush1.bf16.msra.mxu0 %v295
    %855 = vmatprep.subr.bf16.mxu0 %v294
    %856 = vmatpush1.bf16.msra.mxu0 %v293
    %857 = vmatprep.subr.bf16.mxu0 %v292
    %858 = vmatpush1.bf16.msra.mxu0 %v291
    %859 = vmatprep.subr.bf16.mxu0 %v290
    %860 = vmatpush1.bf16.msra.mxu0 %v289
    %861 = vmatprep.subr.bf16.mxu0 %v288
    %862 = vmatpush1.bf16.msra.mxu0 %v287
    %863 = vmatprep.subr.bf16.mxu0 %v286
    %864 = vmatpush1.bf16.msra.mxu0 %v285
    %865 = vmatprep.subr.bf16.mxu0 %v284
    %866 = vmatpush1.bf16.msra.mxu0 %v283
    %867 = vmatprep.subr.bf16.mxu0 0
    %868 = vmatpush2.bf16.msra.mxu0 0
    %869 = vmatprep.subr.bf16.mxu0 0
    %870 = vmatpush2.bf16.msra.mxu0 0
    %871 = vmatprep.subr.bf16.mxu0 0
    %872 = vmatpush2.bf16.msra.mxu0 0
    %873 = vmatprep.subr.bf16.mxu0 0
    %874 = vmatpush2.bf16.msra.mxu0 0
    %875 = vmatprep.subr.bf16.mxu0 0
    %876 = vmatpush2.bf16.msra.mxu0 0
    %877 = vmatprep.subr.bf16.mxu0 0
    %878 = vmatpush2.bf16.msra.mxu0 0
    %879 = vmatprep.subr.bf16.mxu0 0
    %880 = vmatpush2.bf16.msra.mxu0 0
    %881 = vmatprep.subr.bf16.mxu0 0
    %882 = vmatpush2.bf16.msra.mxu0 0
    %883 = vmatprep.mubr.bf16.mxu0 0
    %884 = vmatmul.mubr.bf16.gmra.mxu0 %v849
    %v885 = vpop.f32.mrf.mxu0
    %v886 = vadd.f32 %v74, %v885
    %v887 = vpop.f32.mrf.mxu0
    %v888 = vadd.f32 %v78, %v887
    %v889 = vpop.f32.mrf.mxu0
    %v890 = vadd.f32 %v74, %v889
    %v891 = vpop.f32.mrf.mxu0
    %v892 = vadd.f32 %v78, %v891
    %893 = vmatprep.mubr.bf16.mxu0 0
    %894 = vmatmul.mubr.bf16.gmra.mxu0 %v850
    %v895 = vpop.f32.mrf.mxu0
    %v896 = vadd.f32 %v74, %v895
    %v897 = vpop.f32.mrf.mxu0
    %v898 = vadd.f32 %v78, %v897
    %v899 = vpop.f32.mrf.mxu0
    %v900 = vadd.f32 %v74, %v899
    %v901 = vpop.f32.mrf.mxu0
    %v902 = vadd.f32 %v78, %v901
    %903 = vdwg.mxu0
    %v904 = vmul.f32 %v468, 0.33333334
    %v905 = vmul.f32 %v470, 0.33333334
    %v906 = vmul.f32 %v472, 0.33333334
    %v907 = vmul.f32 %v474, 0.33333334
    %v908 = vmul.f32 %v478, 0.33333334
    %v909 = vmul.f32 %v480, 0.33333334
    %v910 = vmul.f32 %v482, 0.33333334
    %v911 = vmul.f32 %v484, 0.33333334
    %v912 = vsub.f32 %v736, %v904
    %v913 = vsub.f32 %v738, %v905
    %v914 = vsub.f32 %v740, %v906
    %v915 = vsub.f32 %v742, %v907
    %v916 = vsub.f32 %v746, %v908
    %v917 = vsub.f32 %v748, %v909
    %v918 = vsub.f32 %v750, %v910
    %v919 = vsub.f32 %v752, %v911
    %v920 = vmul.f32 %v912, 0.25
    %v921 = vmul.f32 %v913, 0.25
    %v922 = vmul.f32 %v914, 0.25
    %v923 = vmul.f32 %v915, 0.25
    %v924 = vmul.f32 %v916, 0.25
    %v925 = vmul.f32 %v917, 0.25
    %v926 = vmul.f32 %v918, 0.25
    %v927 = vmul.f32 %v919, 0.25
    %v928 = vadd.f32 %v89, %v920
    %v929 = vadd.f32 %v90, %v921
    %v930 = vadd.f32 %v91, %v922
    %v931 = vadd.f32 %v92, %v923
    %v932 = vadd.f32 %v93, %v924
    %v933 = vadd.f32 %v94, %v925
    %v934 = vadd.f32 %v95, %v926
    %v935 = vadd.f32 %v96, %v927
    %v936 = vpack.c.bf16 %v930, %v928
    %v937 = vpack.c.bf16 %v931, %v929
    %v938 = vpack.c.bf16 %v934, %v932
    %v939 = vpack.c.bf16 %v935, %v933
    %v941 = vsel %vm173, %v937, 0
    %v944 = vsel %vm173, %v939, 0
    %946 = vmatprep.subr.bf16.mxu0 0
    %947 = vmatpush1.bf16.msra.mxu0 %v156
    %948 = vmatprep.subr.bf16.mxu0 0
    %949 = vmatpush1.bf16.msra.mxu0 %v155
    %950 = vmatprep.subr.bf16.mxu0 0
    %951 = vmatpush1.bf16.msra.mxu0 %v154
    %952 = vmatprep.subr.bf16.mxu0 0
    %953 = vmatpush1.bf16.msra.mxu0 %v153
    %954 = vmatprep.subr.bf16.mxu0 0
    %955 = vmatpush1.bf16.msra.mxu0 %v152
    %956 = vmatprep.subr.bf16.mxu0 0
    %957 = vmatpush1.bf16.msra.mxu0 %v151
    %958 = vmatprep.subr.bf16.mxu0 0
    %959 = vmatpush1.bf16.msra.mxu0 %v150
    %960 = vmatprep.subr.bf16.mxu0 0
    %961 = vmatpush1.bf16.msra.mxu0 %v149
    %962 = vmatprep.subr.bf16.mxu0 0
    %963 = vmatpush2.bf16.msra.mxu0 0
    %964 = vmatprep.subr.bf16.mxu0 0
    %965 = vmatpush2.bf16.msra.mxu0 0
    %966 = vmatprep.subr.bf16.mxu0 0
    %967 = vmatpush2.bf16.msra.mxu0 0
    %968 = vmatprep.subr.bf16.mxu0 0
    %969 = vmatpush2.bf16.msra.mxu0 0
    %970 = vmatprep.subr.bf16.mxu0 0
    %971 = vmatpush2.bf16.msra.mxu0 %v160
    %972 = vmatprep.subr.bf16.mxu0 0
    %973 = vmatpush2.bf16.msra.mxu0 %v159
    %974 = vmatprep.subr.bf16.mxu0 0
    %975 = vmatpush2.bf16.msra.mxu0 %v158
    %976 = vmatprep.subr.bf16.mxu0 0
    %977 = vmatpush2.bf16.msra.mxu0 %v157
    %978 = vmatprep.mubr.bf16.mxu0 %v941
    %979 = vmatmul.mubr.bf16.gmra.mxu0 %v936
    %v980 = vpop.f32.mrf.mxu0
    %v981 = vadd.f32 %v67, %v980
    %v982 = vpop.f32.mrf.mxu0
    %v983 = vpop.f32.mrf.mxu0
    %v984 = vadd.f32 %v67, %v983
    %v985 = vpop.f32.mrf.mxu0
    %986 = vmatprep.mubr.bf16.mxu0 %v944
    %987 = vmatmul.mubr.bf16.gmra.mxu0 %v938
    %v988 = vpop.f32.mrf.mxu0
    %v989 = vadd.f32 %v67, %v988
    %v990 = vpop.f32.mrf.mxu0
    %v991 = vpop.f32.mrf.mxu0
    %v992 = vadd.f32 %v67, %v991
    %v993 = vpop.f32.mrf.mxu0
    %994 = vdwg.mxu0
    %v995 = vmax.f32 %v981, 0.0
    %v996 = vmax.f32 %v984, 0.0
    %v997 = vmax.f32 %v989, 0.0
    %v998 = vmax.f32 %v992, 0.0
    %v999 = vpack.c.bf16 %v996, %v995
    %v1000 = vpack.c.bf16 %v998, %v997
    %1001 = vmatprep.subr.bf16.mxu0 %v298
    %1002 = vmatpush1.bf16.msra.mxu0 %v297
    %1003 = vmatprep.subr.bf16.mxu0 %v296
    %1004 = vmatpush1.bf16.msra.mxu0 %v295
    %1005 = vmatprep.subr.bf16.mxu0 %v294
    %1006 = vmatpush1.bf16.msra.mxu0 %v293
    %1007 = vmatprep.subr.bf16.mxu0 %v292
    %1008 = vmatpush1.bf16.msra.mxu0 %v291
    %1009 = vmatprep.subr.bf16.mxu0 %v290
    %1010 = vmatpush1.bf16.msra.mxu0 %v289
    %1011 = vmatprep.subr.bf16.mxu0 %v288
    %1012 = vmatpush1.bf16.msra.mxu0 %v287
    %1013 = vmatprep.subr.bf16.mxu0 %v286
    %1014 = vmatpush1.bf16.msra.mxu0 %v285
    %1015 = vmatprep.subr.bf16.mxu0 %v284
    %1016 = vmatpush1.bf16.msra.mxu0 %v283
    %1017 = vmatprep.subr.bf16.mxu0 0
    %1018 = vmatpush2.bf16.msra.mxu0 0
    %1019 = vmatprep.subr.bf16.mxu0 0
    %1020 = vmatpush2.bf16.msra.mxu0 0
    %1021 = vmatprep.subr.bf16.mxu0 0
    %1022 = vmatpush2.bf16.msra.mxu0 0
    %1023 = vmatprep.subr.bf16.mxu0 0
    %1024 = vmatpush2.bf16.msra.mxu0 0
    %1025 = vmatprep.subr.bf16.mxu0 0
    %1026 = vmatpush2.bf16.msra.mxu0 0
    %1027 = vmatprep.subr.bf16.mxu0 0
    %1028 = vmatpush2.bf16.msra.mxu0 0
    %1029 = vmatprep.subr.bf16.mxu0 0
    %1030 = vmatpush2.bf16.msra.mxu0 0
    %1031 = vmatprep.subr.bf16.mxu0 0
    %1032 = vmatpush2.bf16.msra.mxu0 0
    %1033 = vmatprep.mubr.bf16.mxu0 0
    %1034 = vmatmul.mubr.bf16.gmra.mxu0 %v999
    %v1035 = vpop.f32.mrf.mxu0
    %v1036 = vadd.f32 %v74, %v1035
    %v1037 = vpop.f32.mrf.mxu0
    %v1038 = vadd.f32 %v78, %v1037
    %v1039 = vpop.f32.mrf.mxu0
    %v1040 = vadd.f32 %v74, %v1039
    %v1041 = vpop.f32.mrf.mxu0
    %v1042 = vadd.f32 %v78, %v1041
    %1043 = vmatprep.mubr.bf16.mxu0 0
    %1044 = vmatmul.mubr.bf16.gmra.mxu0 %v1000
    %v1045 = vpop.f32.mrf.mxu0
    %v1046 = vadd.f32 %v74, %v1045
    %v1047 = vpop.f32.mrf.mxu0
    %v1048 = vadd.f32 %v78, %v1047
    %v1049 = vpop.f32.mrf.mxu0
    %v1050 = vadd.f32 %v74, %v1049
    %v1051 = vpop.f32.mrf.mxu0
    %v1052 = vadd.f32 %v78, %v1051
    %1053 = vdwg.mxu0
    %v1054 = vadd.f32 %v602, %v886
    %v1055 = vadd.f32 %v604, %v888
    %v1056 = vadd.f32 %v606, %v890
    %v1057 = vadd.f32 %v608, %v892
    %v1058 = vadd.f32 %v612, %v896
    %v1059 = vadd.f32 %v614, %v898
    %v1060 = vadd.f32 %v616, %v900
    %v1061 = vadd.f32 %v618, %v902
    %v1062 = vmul.f32 %v1054, 3.0
    %v1063 = vmul.f32 %v1055, 3.0
    %v1064 = vmul.f32 %v1056, 3.0
    %v1065 = vmul.f32 %v1057, 3.0
    %v1066 = vmul.f32 %v1058, 3.0
    %v1067 = vmul.f32 %v1059, 3.0
    %v1068 = vmul.f32 %v1060, 3.0
    %v1069 = vmul.f32 %v1061, 3.0
    %v1070 = vadd.f32 %v350, %v1062
    %v1071 = vadd.f32 %v352, %v1063
    %v1072 = vadd.f32 %v354, %v1064
    %v1073 = vadd.f32 %v356, %v1065
    %v1074 = vadd.f32 %v360, %v1066
    %v1075 = vadd.f32 %v362, %v1067
    %v1076 = vadd.f32 %v364, %v1068
    %v1077 = vadd.f32 %v366, %v1069
    %v1078 = vmul.f32 %v1070, 0.03125
    %v1079 = vmul.f32 %v1071, 0.03125
    %v1080 = vmul.f32 %v1072, 0.03125
    %v1081 = vmul.f32 %v1073, 0.03125
    %v1082 = vmul.f32 %v1074, 0.03125
    %v1083 = vmul.f32 %v1075, 0.03125
    %v1084 = vmul.f32 %v1076, 0.03125
    %v1085 = vmul.f32 %v1077, 0.03125
    %v1086 = vadd.f32 %v81, %v1078
    %v1087 = vadd.f32 %v82, %v1079
    %v1088 = vadd.f32 %v83, %v1080
    %v1089 = vadd.f32 %v84, %v1081
    %v1090 = vadd.f32 %v85, %v1082
    %v1091 = vadd.f32 %v86, %v1083
    %v1092 = vadd.f32 %v87, %v1084
    %v1093 = vadd.f32 %v88, %v1085
    %v1094 = vadd.f32 %v736, %v1036
    %v1095 = vadd.f32 %v738, %v1038
    %v1096 = vadd.f32 %v740, %v1040
    %v1097 = vadd.f32 %v742, %v1042
    %v1098 = vadd.f32 %v746, %v1046
    %v1099 = vadd.f32 %v748, %v1048
    %v1100 = vadd.f32 %v750, %v1050
    %v1101 = vadd.f32 %v752, %v1052
    %v1102 = vmul.f32 %v1094, 3.0
    %v1103 = vmul.f32 %v1095, 3.0
    %v1104 = vmul.f32 %v1096, 3.0
    %v1105 = vmul.f32 %v1097, 3.0
    %v1106 = vmul.f32 %v1098, 3.0
    %v1107 = vmul.f32 %v1099, 3.0
    %v1108 = vmul.f32 %v1100, 3.0
    %v1109 = vmul.f32 %v1101, 3.0
    %v1110 = vadd.f32 %v468, %v1102
    %v1111 = vadd.f32 %v470, %v1103
    %v1112 = vadd.f32 %v472, %v1104
    %v1113 = vadd.f32 %v474, %v1105
    %v1114 = vadd.f32 %v478, %v1106
    %v1115 = vadd.f32 %v480, %v1107
    %v1116 = vadd.f32 %v482, %v1108
    %v1117 = vadd.f32 %v484, %v1109
    %v1118 = vmul.f32 %v1110, 0.03125
    %v1119 = vmul.f32 %v1111, 0.03125
    %v1120 = vmul.f32 %v1112, 0.03125
    %v1121 = vmul.f32 %v1113, 0.03125
    %v1122 = vmul.f32 %v1114, 0.03125
    %v1123 = vmul.f32 %v1115, 0.03125
    %v1124 = vmul.f32 %v1116, 0.03125
    %v1125 = vmul.f32 %v1117, 0.03125
    %v1126 = vadd.f32 %v89, %v1118
    %v1127 = vadd.f32 %v90, %v1119
    %v1128 = vadd.f32 %v91, %v1120
    %v1129 = vadd.f32 %v92, %v1121
    %v1130 = vadd.f32 %v93, %v1122
    %v1131 = vadd.f32 %v94, %v1123
    %v1132 = vadd.f32 %v95, %v1124
    %v1133 = vadd.f32 %v96, %v1125
    %v1134 = vsub.f32 %v350, %v602
    %v1135 = vsub.f32 %v352, %v604
    %v1136 = vsub.f32 %v354, %v606
    %v1137 = vsub.f32 %v356, %v608
    %v1138 = vsub.f32 %v360, %v612
    %v1139 = vsub.f32 %v362, %v614
    %v1140 = vsub.f32 %v364, %v616
    %v1141 = vsub.f32 %v366, %v618
    %v1142 = vadd.f32 %v1134, %v886
    %v1143 = vadd.f32 %v1135, %v888
    %v1144 = vadd.f32 %v1136, %v890
    %v1145 = vadd.f32 %v1137, %v892
    %v1146 = vadd.f32 %v1138, %v896
    %v1147 = vadd.f32 %v1139, %v898
    %v1148 = vadd.f32 %v1140, %v900
    %v1149 = vadd.f32 %v1141, %v902
    %v1150 = vmul.f32 %v1142, 0.25
    %v1151 = vmul.f32 %v1143, 0.25
    %v1152 = vmul.f32 %v1144, 0.25
    %v1153 = vmul.f32 %v1145, 0.25
    %v1154 = vmul.f32 %v1146, 0.25
    %v1155 = vmul.f32 %v1147, 0.25
    %v1156 = vmul.f32 %v1148, 0.25
    %v1157 = vmul.f32 %v1149, 0.25
    %v1158 = vadd.f32 %v81, %v1150
    %v1159 = vadd.f32 %v82, %v1151
    %v1160 = vadd.f32 %v83, %v1152
    %v1161 = vadd.f32 %v84, %v1153
    %v1162 = vadd.f32 %v85, %v1154
    %v1163 = vadd.f32 %v86, %v1155
    %v1164 = vadd.f32 %v87, %v1156
    %v1165 = vadd.f32 %v88, %v1157
    %v1166 = vsub.f32 %v468, %v736
    %v1167 = vsub.f32 %v470, %v738
    %v1168 = vsub.f32 %v472, %v740
    %v1169 = vsub.f32 %v474, %v742
    %v1170 = vsub.f32 %v478, %v746
    %v1171 = vsub.f32 %v480, %v748
    %v1172 = vsub.f32 %v482, %v750
    %v1173 = vsub.f32 %v484, %v752
    %v1174 = vadd.f32 %v1166, %v1036
    %v1175 = vadd.f32 %v1167, %v1038
    %v1176 = vadd.f32 %v1168, %v1040
    %v1177 = vadd.f32 %v1169, %v1042
    %v1178 = vadd.f32 %v1170, %v1046
    %v1179 = vadd.f32 %v1171, %v1048
    %v1180 = vadd.f32 %v1172, %v1050
    %v1181 = vadd.f32 %v1173, %v1052
    %v1182 = vmul.f32 %v1174, 0.25
    %v1183 = vmul.f32 %v1175, 0.25
    %v1184 = vmul.f32 %v1176, 0.25
    %v1185 = vmul.f32 %v1177, 0.25
    %v1186 = vmul.f32 %v1178, 0.25
    %v1187 = vmul.f32 %v1179, 0.25
    %v1188 = vmul.f32 %v1180, 0.25
    %v1189 = vmul.f32 %v1181, 0.25
    %v1190 = vadd.f32 %v89, %v1182
    %v1191 = vadd.f32 %v90, %v1183
    %v1192 = vadd.f32 %v91, %v1184
    %v1193 = vadd.f32 %v92, %v1185
    %v1194 = vadd.f32 %v93, %v1186
    %v1195 = vadd.f32 %v94, %v1187
    %v1196 = vadd.f32 %v95, %v1188
    %v1197 = vadd.f32 %v96, %v1189
    %v1198 = vpack.c.bf16 %v1160, %v1158
    %v1199 = vpack.c.bf16 %v1161, %v1159
    %v1200 = vpack.c.bf16 %v1164, %v1162
    %v1201 = vpack.c.bf16 %v1165, %v1163
    %v1203 = vsel %vm173, %v1199, 0
    %v1206 = vsel %vm173, %v1201, 0
    %1208 = vmatprep.subr.bf16.mxu0 0
    %1209 = vmatpush1.bf16.msra.mxu0 %v156
    %1210 = vmatprep.subr.bf16.mxu0 0
    %1211 = vmatpush1.bf16.msra.mxu0 %v155
    %1212 = vmatprep.subr.bf16.mxu0 0
    %1213 = vmatpush1.bf16.msra.mxu0 %v154
    %1214 = vmatprep.subr.bf16.mxu0 0
    %1215 = vmatpush1.bf16.msra.mxu0 %v153
    %1216 = vmatprep.subr.bf16.mxu0 0
    %1217 = vmatpush1.bf16.msra.mxu0 %v152
    %1218 = vmatprep.subr.bf16.mxu0 0
    %1219 = vmatpush1.bf16.msra.mxu0 %v151
    %1220 = vmatprep.subr.bf16.mxu0 0
    %1221 = vmatpush1.bf16.msra.mxu0 %v150
    %1222 = vmatprep.subr.bf16.mxu0 0
    %1223 = vmatpush1.bf16.msra.mxu0 %v149
    %1224 = vmatprep.subr.bf16.mxu0 0
    %1225 = vmatpush2.bf16.msra.mxu0 0
    %1226 = vmatprep.subr.bf16.mxu0 0
    %1227 = vmatpush2.bf16.msra.mxu0 0
    %1228 = vmatprep.subr.bf16.mxu0 0
    %1229 = vmatpush2.bf16.msra.mxu0 0
    %1230 = vmatprep.subr.bf16.mxu0 0
    %1231 = vmatpush2.bf16.msra.mxu0 0
    %1232 = vmatprep.subr.bf16.mxu0 0
    %1233 = vmatpush2.bf16.msra.mxu0 %v160
    %1234 = vmatprep.subr.bf16.mxu0 0
    %1235 = vmatpush2.bf16.msra.mxu0 %v159
    %1236 = vmatprep.subr.bf16.mxu0 0
    %1237 = vmatpush2.bf16.msra.mxu0 %v158
    %1238 = vmatprep.subr.bf16.mxu0 0
    %1239 = vmatpush2.bf16.msra.mxu0 %v157
    %1240 = vmatprep.mubr.bf16.mxu0 %v1203
    %1241 = vmatmul.mubr.bf16.gmra.mxu0 %v1198
    %v1242 = vpop.f32.mrf.mxu0
    %v1243 = vadd.f32 %v67, %v1242
    %v1244 = vpop.f32.mrf.mxu0
    %v1245 = vpop.f32.mrf.mxu0
    %v1246 = vadd.f32 %v67, %v1245
    %v1247 = vpop.f32.mrf.mxu0
    %1248 = vmatprep.mubr.bf16.mxu0 %v1206
    %1249 = vmatmul.mubr.bf16.gmra.mxu0 %v1200
    %v1250 = vpop.f32.mrf.mxu0
    %v1251 = vadd.f32 %v67, %v1250
    %v1252 = vpop.f32.mrf.mxu0
    %v1253 = vpop.f32.mrf.mxu0
    %v1254 = vadd.f32 %v67, %v1253
    %v1255 = vpop.f32.mrf.mxu0
    %1256 = vdwg.mxu0
    %v1257 = vmax.f32 %v1243, 0.0
    %v1258 = vmax.f32 %v1246, 0.0
    %v1259 = vmax.f32 %v1251, 0.0
    %v1260 = vmax.f32 %v1254, 0.0
    %v1261 = vpack.c.bf16 %v1258, %v1257
    %v1262 = vpack.c.bf16 %v1260, %v1259
    %1263 = vmatprep.subr.bf16.mxu0 %v298
    %1264 = vmatpush1.bf16.msra.mxu0 %v297
    %1265 = vmatprep.subr.bf16.mxu0 %v296
    %1266 = vmatpush1.bf16.msra.mxu0 %v295
    %1267 = vmatprep.subr.bf16.mxu0 %v294
    %1268 = vmatpush1.bf16.msra.mxu0 %v293
    %1269 = vmatprep.subr.bf16.mxu0 %v292
    %1270 = vmatpush1.bf16.msra.mxu0 %v291
    %1271 = vmatprep.subr.bf16.mxu0 %v290
    %1272 = vmatpush1.bf16.msra.mxu0 %v289
    %1273 = vmatprep.subr.bf16.mxu0 %v288
    %1274 = vmatpush1.bf16.msra.mxu0 %v287
    %1275 = vmatprep.subr.bf16.mxu0 %v286
    %1276 = vmatpush1.bf16.msra.mxu0 %v285
    %1277 = vmatprep.subr.bf16.mxu0 %v284
    %1278 = vmatpush1.bf16.msra.mxu0 %v283
    %1279 = vmatprep.subr.bf16.mxu0 0
    %1280 = vmatpush2.bf16.msra.mxu0 0
    %1281 = vmatprep.subr.bf16.mxu0 0
    %1282 = vmatpush2.bf16.msra.mxu0 0
    %1283 = vmatprep.subr.bf16.mxu0 0
    %1284 = vmatpush2.bf16.msra.mxu0 0
    %1285 = vmatprep.subr.bf16.mxu0 0
    %1286 = vmatpush2.bf16.msra.mxu0 0
    %1287 = vmatprep.subr.bf16.mxu0 0
    %1288 = vmatpush2.bf16.msra.mxu0 0
    %1289 = vmatprep.subr.bf16.mxu0 0
    %1290 = vmatpush2.bf16.msra.mxu0 0
    %1291 = vmatprep.subr.bf16.mxu0 0
    %1292 = vmatpush2.bf16.msra.mxu0 0
    %1293 = vmatprep.subr.bf16.mxu0 0
    %1294 = vmatpush2.bf16.msra.mxu0 0
    %1295 = vmatprep.mubr.bf16.mxu0 0
    %1296 = vmatmul.mubr.bf16.gmra.mxu0 %v1261
    %v1297 = vpop.f32.mrf.mxu0
    %v1298 = vadd.f32 %v74, %v1297
    %v1299 = vpop.f32.mrf.mxu0
    %v1300 = vadd.f32 %v78, %v1299
    %v1301 = vpop.f32.mrf.mxu0
    %v1302 = vadd.f32 %v74, %v1301
    %v1303 = vpop.f32.mrf.mxu0
    %v1304 = vadd.f32 %v78, %v1303
    %1305 = vmatprep.mubr.bf16.mxu0 0
    %1306 = vmatmul.mubr.bf16.gmra.mxu0 %v1262
    %v1307 = vpop.f32.mrf.mxu0
    %v1308 = vadd.f32 %v74, %v1307
    %v1309 = vpop.f32.mrf.mxu0
    %v1310 = vadd.f32 %v78, %v1309
    %v1311 = vpop.f32.mrf.mxu0
    %v1312 = vadd.f32 %v74, %v1311
    %v1313 = vpop.f32.mrf.mxu0
    %v1314 = vadd.f32 %v78, %v1313
    %1315 = vdwg.mxu0
    %v1316 = vpack.c.bf16 %v1192, %v1190
    %v1317 = vpack.c.bf16 %v1193, %v1191
    %v1318 = vpack.c.bf16 %v1196, %v1194
    %v1319 = vpack.c.bf16 %v1197, %v1195
    %v1321 = vsel %vm173, %v1317, 0
    %v1324 = vsel %vm173, %v1319, 0
    %1326 = vmatprep.subr.bf16.mxu0 0
    %1327 = vmatpush1.bf16.msra.mxu0 %v156
    %1328 = vmatprep.subr.bf16.mxu0 0
    %1329 = vmatpush1.bf16.msra.mxu0 %v155
    %1330 = vmatprep.subr.bf16.mxu0 0
    %1331 = vmatpush1.bf16.msra.mxu0 %v154
    %1332 = vmatprep.subr.bf16.mxu0 0
    %1333 = vmatpush1.bf16.msra.mxu0 %v153
    %1334 = vmatprep.subr.bf16.mxu0 0
    %1335 = vmatpush1.bf16.msra.mxu0 %v152
    %1336 = vmatprep.subr.bf16.mxu0 0
    %1337 = vmatpush1.bf16.msra.mxu0 %v151
    %1338 = vmatprep.subr.bf16.mxu0 0
    %1339 = vmatpush1.bf16.msra.mxu0 %v150
    %1340 = vmatprep.subr.bf16.mxu0 0
    %1341 = vmatpush1.bf16.msra.mxu0 %v149
    %1342 = vmatprep.subr.bf16.mxu0 0
    %1343 = vmatpush2.bf16.msra.mxu0 0
    %1344 = vmatprep.subr.bf16.mxu0 0
    %1345 = vmatpush2.bf16.msra.mxu0 0
    %1346 = vmatprep.subr.bf16.mxu0 0
    %1347 = vmatpush2.bf16.msra.mxu0 0
    %1348 = vmatprep.subr.bf16.mxu0 0
    %1349 = vmatpush2.bf16.msra.mxu0 0
    %1350 = vmatprep.subr.bf16.mxu0 0
    %1351 = vmatpush2.bf16.msra.mxu0 %v160
    %1352 = vmatprep.subr.bf16.mxu0 0
    %1353 = vmatpush2.bf16.msra.mxu0 %v159
    %1354 = vmatprep.subr.bf16.mxu0 0
    %1355 = vmatpush2.bf16.msra.mxu0 %v158
    %1356 = vmatprep.subr.bf16.mxu0 0
    %1357 = vmatpush2.bf16.msra.mxu0 %v157
    %1358 = vmatprep.mubr.bf16.mxu0 %v1321
    %1359 = vmatmul.mubr.bf16.gmra.mxu0 %v1316
    %v1360 = vpop.f32.mrf.mxu0
    %v1361 = vadd.f32 %v67, %v1360
    %v1362 = vpop.f32.mrf.mxu0
    %v1363 = vpop.f32.mrf.mxu0
    %v1364 = vadd.f32 %v67, %v1363
    %v1365 = vpop.f32.mrf.mxu0
    %1366 = vmatprep.mubr.bf16.mxu0 %v1324
    %1367 = vmatmul.mubr.bf16.gmra.mxu0 %v1318
    %v1368 = vpop.f32.mrf.mxu0
    %v1369 = vadd.f32 %v67, %v1368
    %v1370 = vpop.f32.mrf.mxu0
    %v1371 = vpop.f32.mrf.mxu0
    %v1372 = vadd.f32 %v67, %v1371
    %v1373 = vpop.f32.mrf.mxu0
    %1374 = vdwg.mxu0
    %v1375 = vmax.f32 %v1361, 0.0
    %v1376 = vmax.f32 %v1364, 0.0
    %v1377 = vmax.f32 %v1369, 0.0
    %v1378 = vmax.f32 %v1372, 0.0
    %v1379 = vpack.c.bf16 %v1376, %v1375
    %v1380 = vpack.c.bf16 %v1378, %v1377
    %1381 = vmatprep.subr.bf16.mxu0 %v298
    %1382 = vmatpush1.bf16.msra.mxu0 %v297
    %1383 = vmatprep.subr.bf16.mxu0 %v296
    %1384 = vmatpush1.bf16.msra.mxu0 %v295
    %1385 = vmatprep.subr.bf16.mxu0 %v294
    %1386 = vmatpush1.bf16.msra.mxu0 %v293
    %1387 = vmatprep.subr.bf16.mxu0 %v292
    %1388 = vmatpush1.bf16.msra.mxu0 %v291
    %1389 = vmatprep.subr.bf16.mxu0 %v290
    %1390 = vmatpush1.bf16.msra.mxu0 %v289
    %1391 = vmatprep.subr.bf16.mxu0 %v288
    %1392 = vmatpush1.bf16.msra.mxu0 %v287
    %1393 = vmatprep.subr.bf16.mxu0 %v286
    %1394 = vmatpush1.bf16.msra.mxu0 %v285
    %1395 = vmatprep.subr.bf16.mxu0 %v284
    %1396 = vmatpush1.bf16.msra.mxu0 %v283
    %1397 = vmatprep.subr.bf16.mxu0 0
    %1398 = vmatpush2.bf16.msra.mxu0 0
    %1399 = vmatprep.subr.bf16.mxu0 0
    %1400 = vmatpush2.bf16.msra.mxu0 0
    %1401 = vmatprep.subr.bf16.mxu0 0
    %1402 = vmatpush2.bf16.msra.mxu0 0
    %1403 = vmatprep.subr.bf16.mxu0 0
    %1404 = vmatpush2.bf16.msra.mxu0 0
    %1405 = vmatprep.subr.bf16.mxu0 0
    %1406 = vmatpush2.bf16.msra.mxu0 0
    %1407 = vmatprep.subr.bf16.mxu0 0
    %1408 = vmatpush2.bf16.msra.mxu0 0
    %1409 = vmatprep.subr.bf16.mxu0 0
    %1410 = vmatpush2.bf16.msra.mxu0 0
    %1411 = vmatprep.subr.bf16.mxu0 0
    %1412 = vmatpush2.bf16.msra.mxu0 0
    %1413 = vmatprep.mubr.bf16.mxu0 0
    %1414 = vmatmul.mubr.bf16.gmra.mxu0 %v1379
    %v1415 = vpop.f32.mrf.mxu0
    %v1416 = vadd.f32 %v74, %v1415
    %v1417 = vpop.f32.mrf.mxu0
    %v1418 = vadd.f32 %v78, %v1417
    %v1419 = vpop.f32.mrf.mxu0
    %v1420 = vadd.f32 %v74, %v1419
    %v1421 = vpop.f32.mrf.mxu0
    %v1422 = vadd.f32 %v78, %v1421
    %1423 = vmatprep.mubr.bf16.mxu0 0
    %1424 = vmatmul.mubr.bf16.gmra.mxu0 %v1380
    %v1425 = vpop.f32.mrf.mxu0
    %v1426 = vadd.f32 %v74, %v1425
    %v1427 = vpop.f32.mrf.mxu0
    %v1428 = vadd.f32 %v78, %v1427
    %v1429 = vpop.f32.mrf.mxu0
    %v1430 = vadd.f32 %v74, %v1429
    %v1431 = vpop.f32.mrf.mxu0
    %v1432 = vadd.f32 %v78, %v1431
    %1433 = vdwg.mxu0
    %v1434 = vmul.f32 %v1298, 0.03125
    %v1435 = vmul.f32 %v1300, 0.03125
    %v1436 = vmul.f32 %v1302, 0.03125
    %v1437 = vmul.f32 %v1304, 0.03125
    %v1438 = vmul.f32 %v1308, 0.03125
    %v1439 = vmul.f32 %v1310, 0.03125
    %v1440 = vmul.f32 %v1312, 0.03125
    %v1441 = vmul.f32 %v1314, 0.03125
    %v1442 = vadd.f32 %v1086, %v1434
    %v1443 = vadd.f32 %v1087, %v1435
    %v1444 = vadd.f32 %v1088, %v1436
    %v1445 = vadd.f32 %v1089, %v1437
    %v1446 = vadd.f32 %v1090, %v1438
    %v1447 = vadd.f32 %v1091, %v1439
    %v1448 = vadd.f32 %v1092, %v1440
    %v1449 = vadd.f32 %v1093, %v1441
    %v1450 = vmul.f32 %v1416, 0.03125
    %v1451 = vmul.f32 %v1418, 0.03125
    %v1452 = vmul.f32 %v1420, 0.03125
    %v1453 = vmul.f32 %v1422, 0.03125
    %v1454 = vmul.f32 %v1426, 0.03125
    %v1455 = vmul.f32 %v1428, 0.03125
    %v1456 = vmul.f32 %v1430, 0.03125
    %v1457 = vmul.f32 %v1432, 0.03125
    %v1458 = vadd.f32 %v1126, %v1450
    %v1459 = vadd.f32 %v1127, %v1451
    %v1460 = vadd.f32 %v1128, %v1452
    %v1461 = vadd.f32 %v1129, %v1453
    %v1462 = vadd.f32 %v1130, %v1454
    %v1463 = vadd.f32 %v1131, %v1455
    %v1464 = vadd.f32 %v1132, %v1456
    %v1465 = vadd.f32 %v1133, %v1457
    %v1466 = vpack.c.bf16 %v1444, %v1442
    %v1467 = vpack.c.bf16 %v1445, %v1443
    %v1468 = vpack.c.bf16 %v1448, %v1446
    %v1469 = vpack.c.bf16 %v1449, %v1447
    %v1471 = vsel %vm173, %v1467, 0
    %v1474 = vsel %vm173, %v1469, 0
    %1476 = vmatprep.subr.bf16.mxu0 0
    %1477 = vmatpush1.bf16.msra.mxu0 %v156
    %1478 = vmatprep.subr.bf16.mxu0 0
    %1479 = vmatpush1.bf16.msra.mxu0 %v155
    %1480 = vmatprep.subr.bf16.mxu0 0
    %1481 = vmatpush1.bf16.msra.mxu0 %v154
    %1482 = vmatprep.subr.bf16.mxu0 0
    %1483 = vmatpush1.bf16.msra.mxu0 %v153
    %1484 = vmatprep.subr.bf16.mxu0 0
    %1485 = vmatpush1.bf16.msra.mxu0 %v152
    %1486 = vmatprep.subr.bf16.mxu0 0
    %1487 = vmatpush1.bf16.msra.mxu0 %v151
    %1488 = vmatprep.subr.bf16.mxu0 0
    %1489 = vmatpush1.bf16.msra.mxu0 %v150
    %1490 = vmatprep.subr.bf16.mxu0 0
    %1491 = vmatpush1.bf16.msra.mxu0 %v149
    %1492 = vmatprep.subr.bf16.mxu0 0
    %1493 = vmatpush2.bf16.msra.mxu0 0
    %1494 = vmatprep.subr.bf16.mxu0 0
    %1495 = vmatpush2.bf16.msra.mxu0 0
    %1496 = vmatprep.subr.bf16.mxu0 0
    %1497 = vmatpush2.bf16.msra.mxu0 0
    %1498 = vmatprep.subr.bf16.mxu0 0
    %1499 = vmatpush2.bf16.msra.mxu0 0
    %1500 = vmatprep.subr.bf16.mxu0 0
    %1501 = vmatpush2.bf16.msra.mxu0 %v160
    %1502 = vmatprep.subr.bf16.mxu0 0
    %1503 = vmatpush2.bf16.msra.mxu0 %v159
    %1504 = vmatprep.subr.bf16.mxu0 0
    %1505 = vmatpush2.bf16.msra.mxu0 %v158
    %1506 = vmatprep.subr.bf16.mxu0 0
    %1507 = vmatpush2.bf16.msra.mxu0 %v157
    %1508 = vmatprep.mubr.bf16.mxu0 %v1471
    %1509 = vmatmul.mubr.bf16.gmra.mxu0 %v1466
    %v1510 = vpop.f32.mrf.mxu0
    %v1511 = vadd.f32 %v67, %v1510
    %v1512 = vpop.f32.mrf.mxu0
    %v1513 = vpop.f32.mrf.mxu0
    %v1514 = vadd.f32 %v67, %v1513
    %v1515 = vpop.f32.mrf.mxu0
    %1516 = vmatprep.mubr.bf16.mxu0 %v1474
    %1517 = vmatmul.mubr.bf16.gmra.mxu0 %v1468
    %v1518 = vpop.f32.mrf.mxu0
    %v1519 = vadd.f32 %v67, %v1518
    %v1520 = vpop.f32.mrf.mxu0
    %v1521 = vpop.f32.mrf.mxu0
    %v1522 = vadd.f32 %v67, %v1521
    %v1523 = vpop.f32.mrf.mxu0
    %1524 = vdwg.mxu0
    %v1525 = vmax.f32 %v1511, 0.0
    %v1526 = vmax.f32 %v1514, 0.0
    %v1527 = vmax.f32 %v1519, 0.0
    %v1528 = vmax.f32 %v1522, 0.0
    %v1529 = vpack.c.bf16 %v1526, %v1525
    %v1530 = vpack.c.bf16 %v1528, %v1527
    %1531 = vmatprep.subr.bf16.mxu0 %v298
    %1532 = vmatpush1.bf16.msra.mxu0 %v297
    %1533 = vmatprep.subr.bf16.mxu0 %v296
    %1534 = vmatpush1.bf16.msra.mxu0 %v295
    %1535 = vmatprep.subr.bf16.mxu0 %v294
    %1536 = vmatpush1.bf16.msra.mxu0 %v293
    %1537 = vmatprep.subr.bf16.mxu0 %v292
    %1538 = vmatpush1.bf16.msra.mxu0 %v291
    %1539 = vmatprep.subr.bf16.mxu0 %v290
    %1540 = vmatpush1.bf16.msra.mxu0 %v289
    %1541 = vmatprep.subr.bf16.mxu0 %v288
    %1542 = vmatpush1.bf16.msra.mxu0 %v287
    %1543 = vmatprep.subr.bf16.mxu0 %v286
    %1544 = vmatpush1.bf16.msra.mxu0 %v285
    %1545 = vmatprep.subr.bf16.mxu0 %v284
    %1546 = vmatpush1.bf16.msra.mxu0 %v283
    %1547 = vmatprep.subr.bf16.mxu0 0
    %1548 = vmatpush2.bf16.msra.mxu0 0
    %1549 = vmatprep.subr.bf16.mxu0 0
    %1550 = vmatpush2.bf16.msra.mxu0 0
    %1551 = vmatprep.subr.bf16.mxu0 0
    %1552 = vmatpush2.bf16.msra.mxu0 0
    %1553 = vmatprep.subr.bf16.mxu0 0
    %1554 = vmatpush2.bf16.msra.mxu0 0
    %1555 = vmatprep.subr.bf16.mxu0 0
    %1556 = vmatpush2.bf16.msra.mxu0 0
    %1557 = vmatprep.subr.bf16.mxu0 0
    %1558 = vmatpush2.bf16.msra.mxu0 0
    %1559 = vmatprep.subr.bf16.mxu0 0
    %1560 = vmatpush2.bf16.msra.mxu0 0
    %1561 = vmatprep.subr.bf16.mxu0 0
    %1562 = vmatpush2.bf16.msra.mxu0 0
    %1563 = vmatprep.mubr.bf16.mxu0 0
    %1564 = vmatmul.mubr.bf16.gmra.mxu0 %v1529
    %v1565 = vpop.f32.mrf.mxu0
    %v1566 = vadd.f32 %v74, %v1565
    %v1567 = vpop.f32.mrf.mxu0
    %v1568 = vadd.f32 %v78, %v1567
    %v1569 = vpop.f32.mrf.mxu0
    %v1570 = vadd.f32 %v74, %v1569
    %v1571 = vpop.f32.mrf.mxu0
    %v1572 = vadd.f32 %v78, %v1571
    %1573 = vmatprep.mubr.bf16.mxu0 0
    %1574 = vmatmul.mubr.bf16.gmra.mxu0 %v1530
    %v1575 = vpop.f32.mrf.mxu0
    %v1576 = vadd.f32 %v74, %v1575
    %v1577 = vpop.f32.mrf.mxu0
    %v1578 = vadd.f32 %v78, %v1577
    %v1579 = vpop.f32.mrf.mxu0
    %v1580 = vadd.f32 %v74, %v1579
    %v1581 = vpop.f32.mrf.mxu0
    %v1582 = vadd.f32 %v78, %v1581
    %1583 = vdwg.mxu0
    %v1584 = vpack.c.bf16 %v1460, %v1458
    %v1585 = vpack.c.bf16 %v1461, %v1459
    %v1586 = vpack.c.bf16 %v1464, %v1462
    %v1587 = vpack.c.bf16 %v1465, %v1463
    %v1589 = vsel %vm173, %v1585, 0
    %v1592 = vsel %vm173, %v1587, 0
    %1594 = vmatprep.subr.bf16.mxu0 0
    %1595 = vmatpush1.bf16.msra.mxu0 %v156
    %1596 = vmatprep.subr.bf16.mxu0 0
    %1597 = vmatpush1.bf16.msra.mxu0 %v155
    %1598 = vmatprep.subr.bf16.mxu0 0
    %1599 = vmatpush1.bf16.msra.mxu0 %v154
    %1600 = vmatprep.subr.bf16.mxu0 0
    %1601 = vmatpush1.bf16.msra.mxu0 %v153
    %1602 = vmatprep.subr.bf16.mxu0 0
    %1603 = vmatpush1.bf16.msra.mxu0 %v152
    %1604 = vmatprep.subr.bf16.mxu0 0
    %1605 = vmatpush1.bf16.msra.mxu0 %v151
    %1606 = vmatprep.subr.bf16.mxu0 0
    %1607 = vmatpush1.bf16.msra.mxu0 %v150
    %1608 = vmatprep.subr.bf16.mxu0 0
    %1609 = vmatpush1.bf16.msra.mxu0 %v149
    %1610 = vmatprep.subr.bf16.mxu0 0
    %1611 = vmatpush2.bf16.msra.mxu0 0
    %1612 = vmatprep.subr.bf16.mxu0 0
    %1613 = vmatpush2.bf16.msra.mxu0 0
    %1614 = vmatprep.subr.bf16.mxu0 0
    %1615 = vmatpush2.bf16.msra.mxu0 0
    %1616 = vmatprep.subr.bf16.mxu0 0
    %1617 = vmatpush2.bf16.msra.mxu0 0
    %1618 = vmatprep.subr.bf16.mxu0 0
    %1619 = vmatpush2.bf16.msra.mxu0 %v160
    %1620 = vmatprep.subr.bf16.mxu0 0
    %1621 = vmatpush2.bf16.msra.mxu0 %v159
    %1622 = vmatprep.subr.bf16.mxu0 0
    %1623 = vmatpush2.bf16.msra.mxu0 %v158
    %1624 = vmatprep.subr.bf16.mxu0 0
    %1625 = vmatpush2.bf16.msra.mxu0 %v157
    %1626 = vmatprep.mubr.bf16.mxu0 %v1589
    %1627 = vmatmul.mubr.bf16.gmra.mxu0 %v1584
    %v1628 = vpop.f32.mrf.mxu0
    %v1629 = vadd.f32 %v67, %v1628
    %v1630 = vpop.f32.mrf.mxu0
    %v1631 = vpop.f32.mrf.mxu0
    %v1632 = vadd.f32 %v67, %v1631
    %v1633 = vpop.f32.mrf.mxu0
    %1634 = vmatprep.mubr.bf16.mxu0 %v1592
    %1635 = vmatmul.mubr.bf16.gmra.mxu0 %v1586
    %v1636 = vpop.f32.mrf.mxu0
    %v1637 = vadd.f32 %v67, %v1636
    %v1638 = vpop.f32.mrf.mxu0
    %v1639 = vpop.f32.mrf.mxu0
    %v1640 = vadd.f32 %v67, %v1639
    %v1641 = vpop.f32.mrf.mxu0
    %1642 = vdwg.mxu0
    %v1643 = vmax.f32 %v1629, 0.0
    %v1644 = vmax.f32 %v1632, 0.0
    %v1645 = vmax.f32 %v1637, 0.0
    %v1646 = vmax.f32 %v1640, 0.0
    %v1647 = vpack.c.bf16 %v1644, %v1643
    %v1648 = vpack.c.bf16 %v1646, %v1645
    %1649 = vmatprep.subr.bf16.mxu0 %v298
    %1650 = vmatpush1.bf16.msra.mxu0 %v297
    %1651 = vmatprep.subr.bf16.mxu0 %v296
    %1652 = vmatpush1.bf16.msra.mxu0 %v295
    %1653 = vmatprep.subr.bf16.mxu0 %v294
    %1654 = vmatpush1.bf16.msra.mxu0 %v293
    %1655 = vmatprep.subr.bf16.mxu0 %v292
    %1656 = vmatpush1.bf16.msra.mxu0 %v291
    %1657 = vmatprep.subr.bf16.mxu0 %v290
    %1658 = vmatpush1.bf16.msra.mxu0 %v289
    %1659 = vmatprep.subr.bf16.mxu0 %v288
    %1660 = vmatpush1.bf16.msra.mxu0 %v287
    %1661 = vmatprep.subr.bf16.mxu0 %v286
    %1662 = vmatpush1.bf16.msra.mxu0 %v285
    %1663 = vmatprep.subr.bf16.mxu0 %v284
    %1664 = vmatpush1.bf16.msra.mxu0 %v283
    %1665 = vmatprep.subr.bf16.mxu0 0
    %1666 = vmatpush2.bf16.msra.mxu0 0
    %1667 = vmatprep.subr.bf16.mxu0 0
    %1668 = vmatpush2.bf16.msra.mxu0 0
    %1669 = vmatprep.subr.bf16.mxu0 0
    %1670 = vmatpush2.bf16.msra.mxu0 0
    %1671 = vmatprep.subr.bf16.mxu0 0
    %1672 = vmatpush2.bf16.msra.mxu0 0
    %1673 = vmatprep.subr.bf16.mxu0 0
    %1674 = vmatpush2.bf16.msra.mxu0 0
    %1675 = vmatprep.subr.bf16.mxu0 0
    %1676 = vmatpush2.bf16.msra.mxu0 0
    %1677 = vmatprep.subr.bf16.mxu0 0
    %1678 = vmatpush2.bf16.msra.mxu0 0
    %1679 = vmatprep.subr.bf16.mxu0 0
    %1680 = vmatpush2.bf16.msra.mxu0 0
    %1681 = vmatprep.mubr.bf16.mxu0 0
    %1682 = vmatmul.mubr.bf16.gmra.mxu0 %v1647
    %v1683 = vpop.f32.mrf.mxu0
    %v1684 = vadd.f32 %v74, %v1683
    %v1685 = vpop.f32.mrf.mxu0
    %v1686 = vadd.f32 %v78, %v1685
    %v1687 = vpop.f32.mrf.mxu0
    %v1688 = vadd.f32 %v74, %v1687
    %v1689 = vpop.f32.mrf.mxu0
    %v1690 = vadd.f32 %v78, %v1689
    %1691 = vmatprep.mubr.bf16.mxu0 0
    %1692 = vmatmul.mubr.bf16.gmra.mxu0 %v1648
    %v1693 = vpop.f32.mrf.mxu0
    %v1694 = vadd.f32 %v74, %v1693
    %v1695 = vpop.f32.mrf.mxu0
    %v1696 = vadd.f32 %v78, %v1695
    %v1697 = vpop.f32.mrf.mxu0
    %v1698 = vadd.f32 %v74, %v1697
    %v1699 = vpop.f32.mrf.mxu0
    %v1700 = vadd.f32 %v78, %v1699
    %1701 = vdwg.mxu0
    %v1702 = vmul.f32 %v1566, 0.083333336
    %v1703 = vmul.f32 %v1568, 0.083333336
    %v1704 = vmul.f32 %v1570, 0.083333336
    %v1705 = vmul.f32 %v1572, 0.083333336
    %v1706 = vmul.f32 %v1576, 0.083333336
    %v1707 = vmul.f32 %v1578, 0.083333336
    %v1708 = vmul.f32 %v1580, 0.083333336
    %v1709 = vmul.f32 %v1582, 0.083333336
    %v1710 = vadd.f32 %v1442, %v1702
    %v1711 = vadd.f32 %v1443, %v1703
    %v1712 = vadd.f32 %v1444, %v1704
    %v1713 = vadd.f32 %v1445, %v1705
    %v1714 = vadd.f32 %v1446, %v1706
    %v1715 = vadd.f32 %v1447, %v1707
    %v1716 = vadd.f32 %v1448, %v1708
    %v1717 = vadd.f32 %v1449, %v1709
    %v1718 = vpack.c.bf16 %v1712, %v1710
    %v1719 = vpack.c.bf16 %v1713, %v1711
    %v1720 = vpack.c.bf16 %v1716, %v1714
    %v1721 = vpack.c.bf16 %v1717, %v1715
    %v1723 = vsel %vm173, %v1719, 0
    %v1726 = vsel %vm173, %v1721, 0
    %1728 = vmatprep.subr.bf16.mxu0 0
    %1729 = vmatpush1.bf16.msra.mxu0 %v156
    %1730 = vmatprep.subr.bf16.mxu0 0
    %1731 = vmatpush1.bf16.msra.mxu0 %v155
    %1732 = vmatprep.subr.bf16.mxu0 0
    %1733 = vmatpush1.bf16.msra.mxu0 %v154
    %1734 = vmatprep.subr.bf16.mxu0 0
    %1735 = vmatpush1.bf16.msra.mxu0 %v153
    %1736 = vmatprep.subr.bf16.mxu0 0
    %1737 = vmatpush1.bf16.msra.mxu0 %v152
    %1738 = vmatprep.subr.bf16.mxu0 0
    %1739 = vmatpush1.bf16.msra.mxu0 %v151
    %1740 = vmatprep.subr.bf16.mxu0 0
    %1741 = vmatpush1.bf16.msra.mxu0 %v150
    %1742 = vmatprep.subr.bf16.mxu0 0
    %1743 = vmatpush1.bf16.msra.mxu0 %v149
    %1744 = vmatprep.subr.bf16.mxu0 0
    %1745 = vmatpush2.bf16.msra.mxu0 0
    %1746 = vmatprep.subr.bf16.mxu0 0
    %1747 = vmatpush2.bf16.msra.mxu0 0
    %1748 = vmatprep.subr.bf16.mxu0 0
    %1749 = vmatpush2.bf16.msra.mxu0 0
    %1750 = vmatprep.subr.bf16.mxu0 0
    %1751 = vmatpush2.bf16.msra.mxu0 0
    %1752 = vmatprep.subr.bf16.mxu0 0
    %1753 = vmatpush2.bf16.msra.mxu0 %v160
    %1754 = vmatprep.subr.bf16.mxu0 0
    %1755 = vmatpush2.bf16.msra.mxu0 %v159
    %1756 = vmatprep.subr.bf16.mxu0 0
    %1757 = vmatpush2.bf16.msra.mxu0 %v158
    %1758 = vmatprep.subr.bf16.mxu0 0
    %1759 = vmatpush2.bf16.msra.mxu0 %v157
    %1760 = vmatprep.mubr.bf16.mxu0 %v1723
    %1761 = vmatmul.mubr.bf16.gmra.mxu0 %v1718
    %v1762 = vpop.f32.mrf.mxu0
    %v1763 = vadd.f32 %v67, %v1762
    %v1764 = vpop.f32.mrf.mxu0
    %v1765 = vpop.f32.mrf.mxu0
    %v1766 = vadd.f32 %v67, %v1765
    %v1767 = vpop.f32.mrf.mxu0
    %1768 = vmatprep.mubr.bf16.mxu0 %v1726
    %1769 = vmatmul.mubr.bf16.gmra.mxu0 %v1720
    %v1770 = vpop.f32.mrf.mxu0
    %v1771 = vadd.f32 %v67, %v1770
    %v1772 = vpop.f32.mrf.mxu0
    %v1773 = vpop.f32.mrf.mxu0
    %v1774 = vadd.f32 %v67, %v1773
    %v1775 = vpop.f32.mrf.mxu0
    %1776 = vdwg.mxu0
    %v1777 = vmax.f32 %v1763, 0.0
    %v1778 = vmax.f32 %v1766, 0.0
    %v1779 = vmax.f32 %v1771, 0.0
    %v1780 = vmax.f32 %v1774, 0.0
    %v1781 = vpack.c.bf16 %v1778, %v1777
    %v1782 = vpack.c.bf16 %v1780, %v1779
    %1783 = vmatprep.subr.bf16.mxu0 %v298
    %1784 = vmatpush1.bf16.msra.mxu0 %v297
    %1785 = vmatprep.subr.bf16.mxu0 %v296
    %1786 = vmatpush1.bf16.msra.mxu0 %v295
    %1787 = vmatprep.subr.bf16.mxu0 %v294
    %1788 = vmatpush1.bf16.msra.mxu0 %v293
    %1789 = vmatprep.subr.bf16.mxu0 %v292
    %1790 = vmatpush1.bf16.msra.mxu0 %v291
    %1791 = vmatprep.subr.bf16.mxu0 %v290
    %1792 = vmatpush1.bf16.msra.mxu0 %v289
    %1793 = vmatprep.subr.bf16.mxu0 %v288
    %1794 = vmatpush1.bf16.msra.mxu0 %v287
    %1795 = vmatprep.subr.bf16.mxu0 %v286
    %1796 = vmatpush1.bf16.msra.mxu0 %v285
    %1797 = vmatprep.subr.bf16.mxu0 %v284
    %1798 = vmatpush1.bf16.msra.mxu0 %v283
    %1799 = vmatprep.subr.bf16.mxu0 0
    %1800 = vmatpush2.bf16.msra.mxu0 0
    %1801 = vmatprep.subr.bf16.mxu0 0
    %1802 = vmatpush2.bf16.msra.mxu0 0
    %1803 = vmatprep.subr.bf16.mxu0 0
    %1804 = vmatpush2.bf16.msra.mxu0 0
    %1805 = vmatprep.subr.bf16.mxu0 0
    %1806 = vmatpush2.bf16.msra.mxu0 0
    %1807 = vmatprep.subr.bf16.mxu0 0
    %1808 = vmatpush2.bf16.msra.mxu0 0
    %1809 = vmatprep.subr.bf16.mxu0 0
    %1810 = vmatpush2.bf16.msra.mxu0 0
    %1811 = vmatprep.subr.bf16.mxu0 0
    %1812 = vmatpush2.bf16.msra.mxu0 0
    %1813 = vmatprep.subr.bf16.mxu0 0
    %1814 = vmatpush2.bf16.msra.mxu0 0
    %1815 = vmatprep.mubr.bf16.mxu0 0
    %1816 = vmatmul.mubr.bf16.gmra.mxu0 %v1781
    %v1817 = vpop.f32.mrf.mxu0
    %v1818 = vadd.f32 %v74, %v1817
    %v1819 = vpop.f32.mrf.mxu0
    %v1820 = vadd.f32 %v78, %v1819
    %v1821 = vpop.f32.mrf.mxu0
    %v1822 = vadd.f32 %v74, %v1821
    %v1823 = vpop.f32.mrf.mxu0
    %v1824 = vadd.f32 %v78, %v1823
    %1825 = vmatprep.mubr.bf16.mxu0 0
    %1826 = vmatmul.mubr.bf16.gmra.mxu0 %v1782
    %v1827 = vpop.f32.mrf.mxu0
    %v1828 = vadd.f32 %v74, %v1827
    %v1829 = vpop.f32.mrf.mxu0
    %v1830 = vadd.f32 %v78, %v1829
    %v1831 = vpop.f32.mrf.mxu0
    %v1832 = vadd.f32 %v74, %v1831
    %v1833 = vpop.f32.mrf.mxu0
    %v1834 = vadd.f32 %v78, %v1833
    %1835 = vdwg.mxu0
    %v1836 = vmul.f32 %v1684, 0.083333336
    %v1837 = vmul.f32 %v1686, 0.083333336
    %v1838 = vmul.f32 %v1688, 0.083333336
    %v1839 = vmul.f32 %v1690, 0.083333336
    %v1840 = vmul.f32 %v1694, 0.083333336
    %v1841 = vmul.f32 %v1696, 0.083333336
    %v1842 = vmul.f32 %v1698, 0.083333336
    %v1843 = vmul.f32 %v1700, 0.083333336
    %v1844 = vadd.f32 %v1458, %v1836
    %v1845 = vadd.f32 %v1459, %v1837
    %v1846 = vadd.f32 %v1460, %v1838
    %v1847 = vadd.f32 %v1461, %v1839
    %v1848 = vadd.f32 %v1462, %v1840
    %v1849 = vadd.f32 %v1463, %v1841
    %v1850 = vadd.f32 %v1464, %v1842
    %v1851 = vadd.f32 %v1465, %v1843
    %v1852 = vpack.c.bf16 %v1846, %v1844
    %v1853 = vpack.c.bf16 %v1847, %v1845
    %v1854 = vpack.c.bf16 %v1850, %v1848
    %v1855 = vpack.c.bf16 %v1851, %v1849
    %v1857 = vsel %vm173, %v1853, 0
    %v1860 = vsel %vm173, %v1855, 0
    %1862 = vmatprep.subr.bf16.mxu0 0
    %1863 = vmatpush1.bf16.msra.mxu0 %v156
    %1864 = vmatprep.subr.bf16.mxu0 0
    %1865 = vmatpush1.bf16.msra.mxu0 %v155
    %1866 = vmatprep.subr.bf16.mxu0 0
    %1867 = vmatpush1.bf16.msra.mxu0 %v154
    %1868 = vmatprep.subr.bf16.mxu0 0
    %1869 = vmatpush1.bf16.msra.mxu0 %v153
    %1870 = vmatprep.subr.bf16.mxu0 0
    %1871 = vmatpush1.bf16.msra.mxu0 %v152
    %1872 = vmatprep.subr.bf16.mxu0 0
    %1873 = vmatpush1.bf16.msra.mxu0 %v151
    %1874 = vmatprep.subr.bf16.mxu0 0
    %1875 = vmatpush1.bf16.msra.mxu0 %v150
    %1876 = vmatprep.subr.bf16.mxu0 0
    %1877 = vmatpush1.bf16.msra.mxu0 %v149
    %1878 = vmatprep.subr.bf16.mxu0 0
    %1879 = vmatpush2.bf16.msra.mxu0 0
    %1880 = vmatprep.subr.bf16.mxu0 0
    %1881 = vmatpush2.bf16.msra.mxu0 0
    %1882 = vmatprep.subr.bf16.mxu0 0
    %1883 = vmatpush2.bf16.msra.mxu0 0
    %1884 = vmatprep.subr.bf16.mxu0 0
    %1885 = vmatpush2.bf16.msra.mxu0 0
    %1886 = vmatprep.subr.bf16.mxu0 0
    %1887 = vmatpush2.bf16.msra.mxu0 %v160
    %1888 = vmatprep.subr.bf16.mxu0 0
    %1889 = vmatpush2.bf16.msra.mxu0 %v159
    %1890 = vmatprep.subr.bf16.mxu0 0
    %1891 = vmatpush2.bf16.msra.mxu0 %v158
    %1892 = vmatprep.subr.bf16.mxu0 0
    %1893 = vmatpush2.bf16.msra.mxu0 %v157
    %1894 = vmatprep.mubr.bf16.mxu0 %v1857
    %1895 = vmatmul.mubr.bf16.gmra.mxu0 %v1852
    %v1896 = vpop.f32.mrf.mxu0
    %v1897 = vadd.f32 %v67, %v1896
    %v1898 = vpop.f32.mrf.mxu0
    %v1899 = vpop.f32.mrf.mxu0
    %v1900 = vadd.f32 %v67, %v1899
    %v1901 = vpop.f32.mrf.mxu0
    %1902 = vmatprep.mubr.bf16.mxu0 %v1860
    %1903 = vmatmul.mubr.bf16.gmra.mxu0 %v1854
    %v1904 = vpop.f32.mrf.mxu0
    %v1905 = vadd.f32 %v67, %v1904
    %v1906 = vpop.f32.mrf.mxu0
    %v1907 = vpop.f32.mrf.mxu0
    %v1908 = vadd.f32 %v67, %v1907
    %v1909 = vpop.f32.mrf.mxu0
    %1910 = vdwg.mxu0
    %v1911 = vmax.f32 %v1897, 0.0
    %v1912 = vmax.f32 %v1900, 0.0
    %v1913 = vmax.f32 %v1905, 0.0
    %v1914 = vmax.f32 %v1908, 0.0
    %v1915 = vpack.c.bf16 %v1912, %v1911
    %v1916 = vpack.c.bf16 %v1914, %v1913
    %1917 = vmatprep.subr.bf16.mxu0 %v298
    %1918 = vmatpush1.bf16.msra.mxu0 %v297
    %1919 = vmatprep.subr.bf16.mxu0 %v296
    %1920 = vmatpush1.bf16.msra.mxu0 %v295
    %1921 = vmatprep.subr.bf16.mxu0 %v294
    %1922 = vmatpush1.bf16.msra.mxu0 %v293
    %1923 = vmatprep.subr.bf16.mxu0 %v292
    %1924 = vmatpush1.bf16.msra.mxu0 %v291
    %1925 = vmatprep.subr.bf16.mxu0 %v290
    %1926 = vmatpush1.bf16.msra.mxu0 %v289
    %1927 = vmatprep.subr.bf16.mxu0 %v288
    %1928 = vmatpush1.bf16.msra.mxu0 %v287
    %1929 = vmatprep.subr.bf16.mxu0 %v286
    %1930 = vmatpush1.bf16.msra.mxu0 %v285
    %1931 = vmatprep.subr.bf16.mxu0 %v284
    %1932 = vmatpush1.bf16.msra.mxu0 %v283
    %1933 = vmatprep.subr.bf16.mxu0 0
    %1934 = vmatpush2.bf16.msra.mxu0 0
    %1935 = vmatprep.subr.bf16.mxu0 0
    %1936 = vmatpush2.bf16.msra.mxu0 0
    %1937 = vmatprep.subr.bf16.mxu0 0
    %1938 = vmatpush2.bf16.msra.mxu0 0
    %1939 = vmatprep.subr.bf16.mxu0 0
    %1940 = vmatpush2.bf16.msra.mxu0 0
    %1941 = vmatprep.subr.bf16.mxu0 0
    %1942 = vmatpush2.bf16.msra.mxu0 0
    %1943 = vmatprep.subr.bf16.mxu0 0
    %1944 = vmatpush2.bf16.msra.mxu0 0
    %1945 = vmatprep.subr.bf16.mxu0 0
    %1946 = vmatpush2.bf16.msra.mxu0 0
    %1947 = vmatprep.subr.bf16.mxu0 0
    %1948 = vmatpush2.bf16.msra.mxu0 0
    %1949 = vmatprep.mubr.bf16.mxu0 0
    %1950 = vmatmul.mubr.bf16.gmra.mxu0 %v1915
    %v1951 = vpop.f32.mrf.mxu0
    %v1952 = vadd.f32 %v74, %v1951
    %v1953 = vpop.f32.mrf.mxu0
    %v1954 = vadd.f32 %v78, %v1953
    %v1955 = vpop.f32.mrf.mxu0
    %v1956 = vadd.f32 %v74, %v1955
    %v1957 = vpop.f32.mrf.mxu0
    %v1958 = vadd.f32 %v78, %v1957
    %1959 = vmatprep.mubr.bf16.mxu0 0
    %1960 = vmatmul.mubr.bf16.gmra.mxu0 %v1916
    %v1961 = vpop.f32.mrf.mxu0
    %v1962 = vadd.f32 %v74, %v1961
    %v1963 = vpop.f32.mrf.mxu0
    %v1964 = vadd.f32 %v78, %v1963
    %v1965 = vpop.f32.mrf.mxu0
    %v1966 = vadd.f32 %v74, %v1965
    %v1967 = vpop.f32.mrf.mxu0
    %v1968 = vadd.f32 %v78, %v1967
    %1969 = vdwg.mxu0
    %v1970 = vmul.f32 %v1566, 0.33333334
    %v1971 = vmul.f32 %v1568, 0.33333334
    %v1972 = vmul.f32 %v1570, 0.33333334
    %v1973 = vmul.f32 %v1572, 0.33333334
    %v1974 = vmul.f32 %v1576, 0.33333334
    %v1975 = vmul.f32 %v1578, 0.33333334
    %v1976 = vmul.f32 %v1580, 0.33333334
    %v1977 = vmul.f32 %v1582, 0.33333334
    %v1978 = vsub.f32 %v1818, %v1970
    %v1979 = vsub.f32 %v1820, %v1971
    %v1980 = vsub.f32 %v1822, %v1972
    %v1981 = vsub.f32 %v1824, %v1973
    %v1982 = vsub.f32 %v1828, %v1974
    %v1983 = vsub.f32 %v1830, %v1975
    %v1984 = vsub.f32 %v1832, %v1976
    %v1985 = vsub.f32 %v1834, %v1977
    %v1986 = vmul.f32 %v1978, 0.25
    %v1987 = vmul.f32 %v1979, 0.25
    %v1988 = vmul.f32 %v1980, 0.25
    %v1989 = vmul.f32 %v1981, 0.25
    %v1990 = vmul.f32 %v1982, 0.25
    %v1991 = vmul.f32 %v1983, 0.25
    %v1992 = vmul.f32 %v1984, 0.25
    %v1993 = vmul.f32 %v1985, 0.25
    %v1994 = vadd.f32 %v1442, %v1986
    %v1995 = vadd.f32 %v1443, %v1987
    %v1996 = vadd.f32 %v1444, %v1988
    %v1997 = vadd.f32 %v1445, %v1989
    %v1998 = vadd.f32 %v1446, %v1990
    %v1999 = vadd.f32 %v1447, %v1991
    %v2000 = vadd.f32 %v1448, %v1992
    %v2001 = vadd.f32 %v1449, %v1993
    %v2002 = vpack.c.bf16 %v1996, %v1994
    %v2003 = vpack.c.bf16 %v1997, %v1995
    %v2004 = vpack.c.bf16 %v2000, %v1998
    %v2005 = vpack.c.bf16 %v2001, %v1999
    %v2007 = vsel %vm173, %v2003, 0
    %v2010 = vsel %vm173, %v2005, 0
    %2012 = vmatprep.subr.bf16.mxu0 0
    %2013 = vmatpush1.bf16.msra.mxu0 %v156
    %2014 = vmatprep.subr.bf16.mxu0 0
    %2015 = vmatpush1.bf16.msra.mxu0 %v155
    %2016 = vmatprep.subr.bf16.mxu0 0
    %2017 = vmatpush1.bf16.msra.mxu0 %v154
    %2018 = vmatprep.subr.bf16.mxu0 0
    %2019 = vmatpush1.bf16.msra.mxu0 %v153
    %2020 = vmatprep.subr.bf16.mxu0 0
    %2021 = vmatpush1.bf16.msra.mxu0 %v152
    %2022 = vmatprep.subr.bf16.mxu0 0
    %2023 = vmatpush1.bf16.msra.mxu0 %v151
    %2024 = vmatprep.subr.bf16.mxu0 0
    %2025 = vmatpush1.bf16.msra.mxu0 %v150
    %2026 = vmatprep.subr.bf16.mxu0 0
    %2027 = vmatpush1.bf16.msra.mxu0 %v149
    %2028 = vmatprep.subr.bf16.mxu0 0
    %2029 = vmatpush2.bf16.msra.mxu0 0
    %2030 = vmatprep.subr.bf16.mxu0 0
    %2031 = vmatpush2.bf16.msra.mxu0 0
    %2032 = vmatprep.subr.bf16.mxu0 0
    %2033 = vmatpush2.bf16.msra.mxu0 0
    %2034 = vmatprep.subr.bf16.mxu0 0
    %2035 = vmatpush2.bf16.msra.mxu0 0
    %2036 = vmatprep.subr.bf16.mxu0 0
    %2037 = vmatpush2.bf16.msra.mxu0 %v160
    %2038 = vmatprep.subr.bf16.mxu0 0
    %2039 = vmatpush2.bf16.msra.mxu0 %v159
    %2040 = vmatprep.subr.bf16.mxu0 0
    %2041 = vmatpush2.bf16.msra.mxu0 %v158
    %2042 = vmatprep.subr.bf16.mxu0 0
    %2043 = vmatpush2.bf16.msra.mxu0 %v157
    %2044 = vmatprep.mubr.bf16.mxu0 %v2007
    %2045 = vmatmul.mubr.bf16.gmra.mxu0 %v2002
    %v2046 = vpop.f32.mrf.mxu0
    %v2047 = vadd.f32 %v67, %v2046
    %v2048 = vpop.f32.mrf.mxu0
    %v2049 = vpop.f32.mrf.mxu0
    %v2050 = vadd.f32 %v67, %v2049
    %v2051 = vpop.f32.mrf.mxu0
    %2052 = vmatprep.mubr.bf16.mxu0 %v2010
    %2053 = vmatmul.mubr.bf16.gmra.mxu0 %v2004
    %v2054 = vpop.f32.mrf.mxu0
    %v2055 = vadd.f32 %v67, %v2054
    %v2056 = vpop.f32.mrf.mxu0
    %v2057 = vpop.f32.mrf.mxu0
    %v2058 = vadd.f32 %v67, %v2057
    %v2059 = vpop.f32.mrf.mxu0
    %2060 = vdwg.mxu0
    %v2061 = vmax.f32 %v2047, 0.0
    %v2062 = vmax.f32 %v2050, 0.0
    %v2063 = vmax.f32 %v2055, 0.0
    %v2064 = vmax.f32 %v2058, 0.0
    %v2065 = vpack.c.bf16 %v2062, %v2061
    %v2066 = vpack.c.bf16 %v2064, %v2063
    %2067 = vmatprep.subr.bf16.mxu0 %v298
    %2068 = vmatpush1.bf16.msra.mxu0 %v297
    %2069 = vmatprep.subr.bf16.mxu0 %v296
    %2070 = vmatpush1.bf16.msra.mxu0 %v295
    %2071 = vmatprep.subr.bf16.mxu0 %v294
    %2072 = vmatpush1.bf16.msra.mxu0 %v293
    %2073 = vmatprep.subr.bf16.mxu0 %v292
    %2074 = vmatpush1.bf16.msra.mxu0 %v291
    %2075 = vmatprep.subr.bf16.mxu0 %v290
    %2076 = vmatpush1.bf16.msra.mxu0 %v289
    %2077 = vmatprep.subr.bf16.mxu0 %v288
    %2078 = vmatpush1.bf16.msra.mxu0 %v287
    %2079 = vmatprep.subr.bf16.mxu0 %v286
    %2080 = vmatpush1.bf16.msra.mxu0 %v285
    %2081 = vmatprep.subr.bf16.mxu0 %v284
    %2082 = vmatpush1.bf16.msra.mxu0 %v283
    %2083 = vmatprep.subr.bf16.mxu0 0
    %2084 = vmatpush2.bf16.msra.mxu0 0
    %2085 = vmatprep.subr.bf16.mxu0 0
    %2086 = vmatpush2.bf16.msra.mxu0 0
    %2087 = vmatprep.subr.bf16.mxu0 0
    %2088 = vmatpush2.bf16.msra.mxu0 0
    %2089 = vmatprep.subr.bf16.mxu0 0
    %2090 = vmatpush2.bf16.msra.mxu0 0
    %2091 = vmatprep.subr.bf16.mxu0 0
    %2092 = vmatpush2.bf16.msra.mxu0 0
    %2093 = vmatprep.subr.bf16.mxu0 0
    %2094 = vmatpush2.bf16.msra.mxu0 0
    %2095 = vmatprep.subr.bf16.mxu0 0
    %2096 = vmatpush2.bf16.msra.mxu0 0
    %2097 = vmatprep.subr.bf16.mxu0 0
    %2098 = vmatpush2.bf16.msra.mxu0 0
    %2099 = vmatprep.mubr.bf16.mxu0 0
    %2100 = vmatmul.mubr.bf16.gmra.mxu0 %v2065
    %v2101 = vpop.f32.mrf.mxu0
    %v2102 = vadd.f32 %v74, %v2101
    %v2103 = vpop.f32.mrf.mxu0
    %v2104 = vadd.f32 %v78, %v2103
    %v2105 = vpop.f32.mrf.mxu0
    %v2106 = vadd.f32 %v74, %v2105
    %v2107 = vpop.f32.mrf.mxu0
    %v2108 = vadd.f32 %v78, %v2107
    %2109 = vmatprep.mubr.bf16.mxu0 0
    %2110 = vmatmul.mubr.bf16.gmra.mxu0 %v2066
    %v2111 = vpop.f32.mrf.mxu0
    %v2112 = vadd.f32 %v74, %v2111
    %v2113 = vpop.f32.mrf.mxu0
    %v2114 = vadd.f32 %v78, %v2113
    %v2115 = vpop.f32.mrf.mxu0
    %v2116 = vadd.f32 %v74, %v2115
    %v2117 = vpop.f32.mrf.mxu0
    %v2118 = vadd.f32 %v78, %v2117
    %2119 = vdwg.mxu0
    %v2120 = vmul.f32 %v1684, 0.33333334
    %v2121 = vmul.f32 %v1686, 0.33333334
    %v2122 = vmul.f32 %v1688, 0.33333334
    %v2123 = vmul.f32 %v1690, 0.33333334
    %v2124 = vmul.f32 %v1694, 0.33333334
    %v2125 = vmul.f32 %v1696, 0.33333334
    %v2126 = vmul.f32 %v1698, 0.33333334
    %v2127 = vmul.f32 %v1700, 0.33333334
    %v2128 = vsub.f32 %v1952, %v2120
    %v2129 = vsub.f32 %v1954, %v2121
    %v2130 = vsub.f32 %v1956, %v2122
    %v2131 = vsub.f32 %v1958, %v2123
    %v2132 = vsub.f32 %v1962, %v2124
    %v2133 = vsub.f32 %v1964, %v2125
    %v2134 = vsub.f32 %v1966, %v2126
    %v2135 = vsub.f32 %v1968, %v2127
    %v2136 = vmul.f32 %v2128, 0.25
    %v2137 = vmul.f32 %v2129, 0.25
    %v2138 = vmul.f32 %v2130, 0.25
    %v2139 = vmul.f32 %v2131, 0.25
    %v2140 = vmul.f32 %v2132, 0.25
    %v2141 = vmul.f32 %v2133, 0.25
    %v2142 = vmul.f32 %v2134, 0.25
    %v2143 = vmul.f32 %v2135, 0.25
    %v2144 = vadd.f32 %v1458, %v2136
    %v2145 = vadd.f32 %v1459, %v2137
    %v2146 = vadd.f32 %v1460, %v2138
    %v2147 = vadd.f32 %v1461, %v2139
    %v2148 = vadd.f32 %v1462, %v2140
    %v2149 = vadd.f32 %v1463, %v2141
    %v2150 = vadd.f32 %v1464, %v2142
    %v2151 = vadd.f32 %v1465, %v2143
    %v2152 = vpack.c.bf16 %v2146, %v2144
    %v2153 = vpack.c.bf16 %v2147, %v2145
    %v2154 = vpack.c.bf16 %v2150, %v2148
    %v2155 = vpack.c.bf16 %v2151, %v2149
    %v2157 = vsel %vm173, %v2153, 0
    %v2160 = vsel %vm173, %v2155, 0
    %2162 = vmatprep.subr.bf16.mxu0 0
    %2163 = vmatpush1.bf16.msra.mxu0 %v156
    %2164 = vmatprep.subr.bf16.mxu0 0
    %2165 = vmatpush1.bf16.msra.mxu0 %v155
    %2166 = vmatprep.subr.bf16.mxu0 0
    %2167 = vmatpush1.bf16.msra.mxu0 %v154
    %2168 = vmatprep.subr.bf16.mxu0 0
    %2169 = vmatpush1.bf16.msra.mxu0 %v153
    %2170 = vmatprep.subr.bf16.mxu0 0
    %2171 = vmatpush1.bf16.msra.mxu0 %v152
    %2172 = vmatprep.subr.bf16.mxu0 0
    %2173 = vmatpush1.bf16.msra.mxu0 %v151
    %2174 = vmatprep.subr.bf16.mxu0 0
    %2175 = vmatpush1.bf16.msra.mxu0 %v150
    %2176 = vmatprep.subr.bf16.mxu0 0
    %2177 = vmatpush1.bf16.msra.mxu0 %v149
    %2178 = vmatprep.subr.bf16.mxu0 0
    %2179 = vmatpush2.bf16.msra.mxu0 0
    %2180 = vmatprep.subr.bf16.mxu0 0
    %2181 = vmatpush2.bf16.msra.mxu0 0
    %2182 = vmatprep.subr.bf16.mxu0 0
    %2183 = vmatpush2.bf16.msra.mxu0 0
    %2184 = vmatprep.subr.bf16.mxu0 0
    %2185 = vmatpush2.bf16.msra.mxu0 0
    %2186 = vmatprep.subr.bf16.mxu0 0
    %2187 = vmatpush2.bf16.msra.mxu0 %v160
    %2188 = vmatprep.subr.bf16.mxu0 0
    %2189 = vmatpush2.bf16.msra.mxu0 %v159
    %2190 = vmatprep.subr.bf16.mxu0 0
    %2191 = vmatpush2.bf16.msra.mxu0 %v158
    %2192 = vmatprep.subr.bf16.mxu0 0
    %2193 = vmatpush2.bf16.msra.mxu0 %v157
    %2194 = vmatprep.mubr.bf16.mxu0 %v2157
    %2195 = vmatmul.mubr.bf16.gmra.mxu0 %v2152
    %v2196 = vpop.f32.mrf.mxu0
    %v2197 = vadd.f32 %v67, %v2196
    %v2198 = vpop.f32.mrf.mxu0
    %v2199 = vpop.f32.mrf.mxu0
    %v2200 = vadd.f32 %v67, %v2199
    %v2201 = vpop.f32.mrf.mxu0
    %2202 = vmatprep.mubr.bf16.mxu0 %v2160
    %2203 = vmatmul.mubr.bf16.gmra.mxu0 %v2154
    %v2204 = vpop.f32.mrf.mxu0
    %v2205 = vadd.f32 %v67, %v2204
    %v2206 = vpop.f32.mrf.mxu0
    %v2207 = vpop.f32.mrf.mxu0
    %v2208 = vadd.f32 %v67, %v2207
    %v2209 = vpop.f32.mrf.mxu0
    %2210 = vdwg.mxu0
    %v2211 = vmax.f32 %v2197, 0.0
    %v2212 = vmax.f32 %v2200, 0.0
    %v2213 = vmax.f32 %v2205, 0.0
    %v2214 = vmax.f32 %v2208, 0.0
    %v2215 = vpack.c.bf16 %v2212, %v2211
    %v2216 = vpack.c.bf16 %v2214, %v2213
    %2217 = vmatprep.subr.bf16.mxu0 %v298
    %2218 = vmatpush1.bf16.msra.mxu0 %v297
    %2219 = vmatprep.subr.bf16.mxu0 %v296
    %2220 = vmatpush1.bf16.msra.mxu0 %v295
    %2221 = vmatprep.subr.bf16.mxu0 %v294
    %2222 = vmatpush1.bf16.msra.mxu0 %v293
    %2223 = vmatprep.subr.bf16.mxu0 %v292
    %2224 = vmatpush1.bf16.msra.mxu0 %v291
    %2225 = vmatprep.subr.bf16.mxu0 %v290
    %2226 = vmatpush1.bf16.msra.mxu0 %v289
    %2227 = vmatprep.subr.bf16.mxu0 %v288
    %2228 = vmatpush1.bf16.msra.mxu0 %v287
    %2229 = vmatprep.subr.bf16.mxu0 %v286
    %2230 = vmatpush1.bf16.msra.mxu0 %v285
    %2231 = vmatprep.subr.bf16.mxu0 %v284
    %2232 = vmatpush1.bf16.msra.mxu0 %v283
    %2233 = vmatprep.subr.bf16.mxu0 0
    %2234 = vmatpush2.bf16.msra.mxu0 0
    %2235 = vmatprep.subr.bf16.mxu0 0
    %2236 = vmatpush2.bf16.msra.mxu0 0
    %2237 = vmatprep.subr.bf16.mxu0 0
    %2238 = vmatpush2.bf16.msra.mxu0 0
    %2239 = vmatprep.subr.bf16.mxu0 0
    %2240 = vmatpush2.bf16.msra.mxu0 0
    %2241 = vmatprep.subr.bf16.mxu0 0
    %2242 = vmatpush2.bf16.msra.mxu0 0
    %2243 = vmatprep.subr.bf16.mxu0 0
    %2244 = vmatpush2.bf16.msra.mxu0 0
    %2245 = vmatprep.subr.bf16.mxu0 0
    %2246 = vmatpush2.bf16.msra.mxu0 0
    %2247 = vmatprep.subr.bf16.mxu0 0
    %2248 = vmatpush2.bf16.msra.mxu0 0
    %2249 = vmatprep.mubr.bf16.mxu0 0
    %2250 = vmatmul.mubr.bf16.gmra.mxu0 %v2215
    %v2251 = vpop.f32.mrf.mxu0
    %v2252 = vadd.f32 %v74, %v2251
    %v2253 = vpop.f32.mrf.mxu0
    %v2254 = vadd.f32 %v78, %v2253
    %v2255 = vpop.f32.mrf.mxu0
    %v2256 = vadd.f32 %v74, %v2255
    %v2257 = vpop.f32.mrf.mxu0
    %v2258 = vadd.f32 %v78, %v2257
    %2259 = vmatprep.mubr.bf16.mxu0 0
    %2260 = vmatmul.mubr.bf16.gmra.mxu0 %v2216
    %v2261 = vpop.f32.mrf.mxu0
    %v2262 = vadd.f32 %v74, %v2261
    %v2263 = vpop.f32.mrf.mxu0
    %v2264 = vadd.f32 %v78, %v2263
    %v2265 = vpop.f32.mrf.mxu0
    %v2266 = vadd.f32 %v74, %v2265
    %v2267 = vpop.f32.mrf.mxu0
    %v2268 = vadd.f32 %v78, %v2267
    %2269 = vdwg.mxu0
    %v2270 = vadd.f32 %v1818, %v2102
    %v2271 = vadd.f32 %v1820, %v2104
    %v2272 = vadd.f32 %v1822, %v2106
    %v2273 = vadd.f32 %v1824, %v2108
    %v2274 = vadd.f32 %v1828, %v2112
    %v2275 = vadd.f32 %v1830, %v2114
    %v2276 = vadd.f32 %v1832, %v2116
    %v2277 = vadd.f32 %v1834, %v2118
    %v2278 = vmul.f32 %v2270, 3.0
    %v2279 = vmul.f32 %v2271, 3.0
    %v2280 = vmul.f32 %v2272, 3.0
    %v2281 = vmul.f32 %v2273, 3.0
    %v2282 = vmul.f32 %v2274, 3.0
    %v2283 = vmul.f32 %v2275, 3.0
    %v2284 = vmul.f32 %v2276, 3.0
    %v2285 = vmul.f32 %v2277, 3.0
    %v2286 = vadd.f32 %v1566, %v2278
    %v2287 = vadd.f32 %v1568, %v2279
    %v2288 = vadd.f32 %v1570, %v2280
    %v2289 = vadd.f32 %v1572, %v2281
    %v2290 = vadd.f32 %v1576, %v2282
    %v2291 = vadd.f32 %v1578, %v2283
    %v2292 = vadd.f32 %v1580, %v2284
    %v2293 = vadd.f32 %v1582, %v2285
    %v2294 = vmul.f32 %v2286, 0.03125
    %v2295 = vmul.f32 %v2287, 0.03125
    %v2296 = vmul.f32 %v2288, 0.03125
    %v2297 = vmul.f32 %v2289, 0.03125
    %v2298 = vmul.f32 %v2290, 0.03125
    %v2299 = vmul.f32 %v2291, 0.03125
    %v2300 = vmul.f32 %v2292, 0.03125
    %v2301 = vmul.f32 %v2293, 0.03125
    %v2302 = vadd.f32 %v1442, %v2294
    %v2303 = vadd.f32 %v1443, %v2295
    %v2304 = vadd.f32 %v1444, %v2296
    %v2305 = vadd.f32 %v1445, %v2297
    %v2306 = vadd.f32 %v1446, %v2298
    %v2307 = vadd.f32 %v1447, %v2299
    %v2308 = vadd.f32 %v1448, %v2300
    %v2309 = vadd.f32 %v1449, %v2301
    %v2310 = vadd.f32 %v1952, %v2252
    %v2311 = vadd.f32 %v1954, %v2254
    %v2312 = vadd.f32 %v1956, %v2256
    %v2313 = vadd.f32 %v1958, %v2258
    %v2314 = vadd.f32 %v1962, %v2262
    %v2315 = vadd.f32 %v1964, %v2264
    %v2316 = vadd.f32 %v1966, %v2266
    %v2317 = vadd.f32 %v1968, %v2268
    %v2318 = vmul.f32 %v2310, 3.0
    %v2319 = vmul.f32 %v2311, 3.0
    %v2320 = vmul.f32 %v2312, 3.0
    %v2321 = vmul.f32 %v2313, 3.0
    %v2322 = vmul.f32 %v2314, 3.0
    %v2323 = vmul.f32 %v2315, 3.0
    %v2324 = vmul.f32 %v2316, 3.0
    %v2325 = vmul.f32 %v2317, 3.0
    %v2326 = vadd.f32 %v1684, %v2318
    %v2327 = vadd.f32 %v1686, %v2319
    %v2328 = vadd.f32 %v1688, %v2320
    %v2329 = vadd.f32 %v1690, %v2321
    %v2330 = vadd.f32 %v1694, %v2322
    %v2331 = vadd.f32 %v1696, %v2323
    %v2332 = vadd.f32 %v1698, %v2324
    %v2333 = vadd.f32 %v1700, %v2325
    %v2334 = vmul.f32 %v2326, 0.03125
    %v2335 = vmul.f32 %v2327, 0.03125
    %v2336 = vmul.f32 %v2328, 0.03125
    %v2337 = vmul.f32 %v2329, 0.03125
    %v2338 = vmul.f32 %v2330, 0.03125
    %v2339 = vmul.f32 %v2331, 0.03125
    %v2340 = vmul.f32 %v2332, 0.03125
    %v2341 = vmul.f32 %v2333, 0.03125
    %v2342 = vadd.f32 %v1458, %v2334
    %v2343 = vadd.f32 %v1459, %v2335
    %v2344 = vadd.f32 %v1460, %v2336
    %v2345 = vadd.f32 %v1461, %v2337
    %v2346 = vadd.f32 %v1462, %v2338
    %v2347 = vadd.f32 %v1463, %v2339
    %v2348 = vadd.f32 %v1464, %v2340
    %v2349 = vadd.f32 %v1465, %v2341
    %v2350 = vsub.f32 %v1566, %v1818
    %v2351 = vsub.f32 %v1568, %v1820
    %v2352 = vsub.f32 %v1570, %v1822
    %v2353 = vsub.f32 %v1572, %v1824
    %v2354 = vsub.f32 %v1576, %v1828
    %v2355 = vsub.f32 %v1578, %v1830
    %v2356 = vsub.f32 %v1580, %v1832
    %v2357 = vsub.f32 %v1582, %v1834
    %v2358 = vadd.f32 %v2350, %v2102
    %v2359 = vadd.f32 %v2351, %v2104
    %v2360 = vadd.f32 %v2352, %v2106
    %v2361 = vadd.f32 %v2353, %v2108
    %v2362 = vadd.f32 %v2354, %v2112
    %v2363 = vadd.f32 %v2355, %v2114
    %v2364 = vadd.f32 %v2356, %v2116
    %v2365 = vadd.f32 %v2357, %v2118
    %v2366 = vmul.f32 %v2358, 0.25
    %v2367 = vmul.f32 %v2359, 0.25
    %v2368 = vmul.f32 %v2360, 0.25
    %v2369 = vmul.f32 %v2361, 0.25
    %v2370 = vmul.f32 %v2362, 0.25
    %v2371 = vmul.f32 %v2363, 0.25
    %v2372 = vmul.f32 %v2364, 0.25
    %v2373 = vmul.f32 %v2365, 0.25
    %v2374 = vadd.f32 %v1442, %v2366
    %v2375 = vadd.f32 %v1443, %v2367
    %v2376 = vadd.f32 %v1444, %v2368
    %v2377 = vadd.f32 %v1445, %v2369
    %v2378 = vadd.f32 %v1446, %v2370
    %v2379 = vadd.f32 %v1447, %v2371
    %v2380 = vadd.f32 %v1448, %v2372
    %v2381 = vadd.f32 %v1449, %v2373
    %v2382 = vsub.f32 %v1684, %v1952
    %v2383 = vsub.f32 %v1686, %v1954
    %v2384 = vsub.f32 %v1688, %v1956
    %v2385 = vsub.f32 %v1690, %v1958
    %v2386 = vsub.f32 %v1694, %v1962
    %v2387 = vsub.f32 %v1696, %v1964
    %v2388 = vsub.f32 %v1698, %v1966
    %v2389 = vsub.f32 %v1700, %v1968
    %v2390 = vadd.f32 %v2382, %v2252
    %v2391 = vadd.f32 %v2383, %v2254
    %v2392 = vadd.f32 %v2384, %v2256
    %v2393 = vadd.f32 %v2385, %v2258
    %v2394 = vadd.f32 %v2386, %v2262
    %v2395 = vadd.f32 %v2387, %v2264
    %v2396 = vadd.f32 %v2388, %v2266
    %v2397 = vadd.f32 %v2389, %v2268
    %v2398 = vmul.f32 %v2390, 0.25
    %v2399 = vmul.f32 %v2391, 0.25
    %v2400 = vmul.f32 %v2392, 0.25
    %v2401 = vmul.f32 %v2393, 0.25
    %v2402 = vmul.f32 %v2394, 0.25
    %v2403 = vmul.f32 %v2395, 0.25
    %v2404 = vmul.f32 %v2396, 0.25
    %v2405 = vmul.f32 %v2397, 0.25
    %v2406 = vadd.f32 %v1458, %v2398
    %v2407 = vadd.f32 %v1459, %v2399
    %v2408 = vadd.f32 %v1460, %v2400
    %v2409 = vadd.f32 %v1461, %v2401
    %v2410 = vadd.f32 %v1462, %v2402
    %v2411 = vadd.f32 %v1463, %v2403
    %v2412 = vadd.f32 %v1464, %v2404
    %v2413 = vadd.f32 %v1465, %v2405
    %v2414 = vpack.c.bf16 %v2376, %v2374
    %v2415 = vpack.c.bf16 %v2377, %v2375
    %v2416 = vpack.c.bf16 %v2380, %v2378
    %v2417 = vpack.c.bf16 %v2381, %v2379
    %v2419 = vsel %vm173, %v2415, 0
    %v2422 = vsel %vm173, %v2417, 0
    %2424 = vmatprep.subr.bf16.mxu0 0
    %2425 = vmatpush1.bf16.msra.mxu0 %v156
    %2426 = vmatprep.subr.bf16.mxu0 0
    %2427 = vmatpush1.bf16.msra.mxu0 %v155
    %2428 = vmatprep.subr.bf16.mxu0 0
    %2429 = vmatpush1.bf16.msra.mxu0 %v154
    %2430 = vmatprep.subr.bf16.mxu0 0
    %2431 = vmatpush1.bf16.msra.mxu0 %v153
    %2432 = vmatprep.subr.bf16.mxu0 0
    %2433 = vmatpush1.bf16.msra.mxu0 %v152
    %2434 = vmatprep.subr.bf16.mxu0 0
    %2435 = vmatpush1.bf16.msra.mxu0 %v151
    %2436 = vmatprep.subr.bf16.mxu0 0
    %2437 = vmatpush1.bf16.msra.mxu0 %v150
    %2438 = vmatprep.subr.bf16.mxu0 0
    %2439 = vmatpush1.bf16.msra.mxu0 %v149
    %2440 = vmatprep.subr.bf16.mxu0 0
    %2441 = vmatpush2.bf16.msra.mxu0 0
    %2442 = vmatprep.subr.bf16.mxu0 0
    %2443 = vmatpush2.bf16.msra.mxu0 0
    %2444 = vmatprep.subr.bf16.mxu0 0
    %2445 = vmatpush2.bf16.msra.mxu0 0
    %2446 = vmatprep.subr.bf16.mxu0 0
    %2447 = vmatpush2.bf16.msra.mxu0 0
    %2448 = vmatprep.subr.bf16.mxu0 0
    %2449 = vmatpush2.bf16.msra.mxu0 %v160
    %2450 = vmatprep.subr.bf16.mxu0 0
    %2451 = vmatpush2.bf16.msra.mxu0 %v159
    %2452 = vmatprep.subr.bf16.mxu0 0
    %2453 = vmatpush2.bf16.msra.mxu0 %v158
    %2454 = vmatprep.subr.bf16.mxu0 0
    %2455 = vmatpush2.bf16.msra.mxu0 %v157
    %2456 = vmatprep.mubr.bf16.mxu0 %v2419
    %2457 = vmatmul.mubr.bf16.gmra.mxu0 %v2414
    %v2458 = vpop.f32.mrf.mxu0
    %v2459 = vadd.f32 %v67, %v2458
    %v2460 = vpop.f32.mrf.mxu0
    %v2461 = vpop.f32.mrf.mxu0
    %v2462 = vadd.f32 %v67, %v2461
    %v2463 = vpop.f32.mrf.mxu0
    %2464 = vmatprep.mubr.bf16.mxu0 %v2422
    %2465 = vmatmul.mubr.bf16.gmra.mxu0 %v2416
    %v2466 = vpop.f32.mrf.mxu0
    %v2467 = vadd.f32 %v67, %v2466
    %v2468 = vpop.f32.mrf.mxu0
    %v2469 = vpop.f32.mrf.mxu0
    %v2470 = vadd.f32 %v67, %v2469
    %v2471 = vpop.f32.mrf.mxu0
    %2472 = vdwg.mxu0
    %v2473 = vmax.f32 %v2459, 0.0
    %v2474 = vmax.f32 %v2462, 0.0
    %v2475 = vmax.f32 %v2467, 0.0
    %v2476 = vmax.f32 %v2470, 0.0
    %v2477 = vpack.c.bf16 %v2474, %v2473
    %v2478 = vpack.c.bf16 %v2476, %v2475
    %2479 = vmatprep.subr.bf16.mxu0 %v298
    %2480 = vmatpush1.bf16.msra.mxu0 %v297
    %2481 = vmatprep.subr.bf16.mxu0 %v296
    %2482 = vmatpush1.bf16.msra.mxu0 %v295
    %2483 = vmatprep.subr.bf16.mxu0 %v294
    %2484 = vmatpush1.bf16.msra.mxu0 %v293
    %2485 = vmatprep.subr.bf16.mxu0 %v292
    %2486 = vmatpush1.bf16.msra.mxu0 %v291
    %2487 = vmatprep.subr.bf16.mxu0 %v290
    %2488 = vmatpush1.bf16.msra.mxu0 %v289
    %2489 = vmatprep.subr.bf16.mxu0 %v288
    %2490 = vmatpush1.bf16.msra.mxu0 %v287
    %2491 = vmatprep.subr.bf16.mxu0 %v286
    %2492 = vmatpush1.bf16.msra.mxu0 %v285
    %2493 = vmatprep.subr.bf16.mxu0 %v284
    %2494 = vmatpush1.bf16.msra.mxu0 %v283
    %2495 = vmatprep.subr.bf16.mxu0 0
    %2496 = vmatpush2.bf16.msra.mxu0 0
    %2497 = vmatprep.subr.bf16.mxu0 0
    %2498 = vmatpush2.bf16.msra.mxu0 0
    %2499 = vmatprep.subr.bf16.mxu0 0
    %2500 = vmatpush2.bf16.msra.mxu0 0
    %2501 = vmatprep.subr.bf16.mxu0 0
    %2502 = vmatpush2.bf16.msra.mxu0 0
    %2503 = vmatprep.subr.bf16.mxu0 0
    %2504 = vmatpush2.bf16.msra.mxu0 0
    %2505 = vmatprep.subr.bf16.mxu0 0
    %2506 = vmatpush2.bf16.msra.mxu0 0
    %2507 = vmatprep.subr.bf16.mxu0 0
    %2508 = vmatpush2.bf16.msra.mxu0 0
    %2509 = vmatprep.subr.bf16.mxu0 0
    %2510 = vmatpush2.bf16.msra.mxu0 0
    %2511 = vmatprep.mubr.bf16.mxu0 0
    %2512 = vmatmul.mubr.bf16.gmra.mxu0 %v2477
    %v2513 = vpop.f32.mrf.mxu0
    %v2514 = vadd.f32 %v74, %v2513
    %v2515 = vpop.f32.mrf.mxu0
    %v2516 = vadd.f32 %v78, %v2515
    %v2517 = vpop.f32.mrf.mxu0
    %v2518 = vadd.f32 %v74, %v2517
    %v2519 = vpop.f32.mrf.mxu0
    %v2520 = vadd.f32 %v78, %v2519
    %2521 = vmatprep.mubr.bf16.mxu0 0
    %2522 = vmatmul.mubr.bf16.gmra.mxu0 %v2478
    %v2523 = vpop.f32.mrf.mxu0
    %v2524 = vadd.f32 %v74, %v2523
    %v2525 = vpop.f32.mrf.mxu0
    %v2526 = vadd.f32 %v78, %v2525
    %v2527 = vpop.f32.mrf.mxu0
    %v2528 = vadd.f32 %v74, %v2527
    %v2529 = vpop.f32.mrf.mxu0
    %v2530 = vadd.f32 %v78, %v2529
    %2531 = vdwg.mxu0
    %v2532 = vpack.c.bf16 %v2408, %v2406
    %v2533 = vpack.c.bf16 %v2409, %v2407
    %v2534 = vpack.c.bf16 %v2412, %v2410
    %v2535 = vpack.c.bf16 %v2413, %v2411
    %v2537 = vsel %vm173, %v2533, 0
    %v2540 = vsel %vm173, %v2535, 0
    %2542 = vmatprep.subr.bf16.mxu0 0
    %2543 = vmatpush1.bf16.msra.mxu0 %v156
    %2544 = vmatprep.subr.bf16.mxu0 0
    %2545 = vmatpush1.bf16.msra.mxu0 %v155
    %2546 = vmatprep.subr.bf16.mxu0 0
    %2547 = vmatpush1.bf16.msra.mxu0 %v154
    %2548 = vmatprep.subr.bf16.mxu0 0
    %2549 = vmatpush1.bf16.msra.mxu0 %v153
    %2550 = vmatprep.subr.bf16.mxu0 0
    %2551 = vmatpush1.bf16.msra.mxu0 %v152
    %2552 = vmatprep.subr.bf16.mxu0 0
    %2553 = vmatpush1.bf16.msra.mxu0 %v151
    %2554 = vmatprep.subr.bf16.mxu0 0
    %2555 = vmatpush1.bf16.msra.mxu0 %v150
    %2556 = vmatprep.subr.bf16.mxu0 0
    %2557 = vmatpush1.bf16.msra.mxu0 %v149
    %2558 = vmatprep.subr.bf16.mxu0 0
    %2559 = vmatpush2.bf16.msra.mxu0 0
    %2560 = vmatprep.subr.bf16.mxu0 0
    %2561 = vmatpush2.bf16.msra.mxu0 0
    %2562 = vmatprep.subr.bf16.mxu0 0
    %2563 = vmatpush2.bf16.msra.mxu0 0
    %2564 = vmatprep.subr.bf16.mxu0 0
    %2565 = vmatpush2.bf16.msra.mxu0 0
    %2566 = vmatprep.subr.bf16.mxu0 0
    %2567 = vmatpush2.bf16.msra.mxu0 %v160
    %2568 = vmatprep.subr.bf16.mxu0 0
    %2569 = vmatpush2.bf16.msra.mxu0 %v159
    %2570 = vmatprep.subr.bf16.mxu0 0
    %2571 = vmatpush2.bf16.msra.mxu0 %v158
    %2572 = vmatprep.subr.bf16.mxu0 0
    %2573 = vmatpush2.bf16.msra.mxu0 %v157
    %2574 = vmatprep.mubr.bf16.mxu0 %v2537
    %2575 = vmatmul.mubr.bf16.gmra.mxu0 %v2532
    %v2576 = vpop.f32.mrf.mxu0
    %v2577 = vadd.f32 %v67, %v2576
    %v2578 = vpop.f32.mrf.mxu0
    %v2579 = vpop.f32.mrf.mxu0
    %v2580 = vadd.f32 %v67, %v2579
    %v2581 = vpop.f32.mrf.mxu0
    %2582 = vmatprep.mubr.bf16.mxu0 %v2540
    %2583 = vmatmul.mubr.bf16.gmra.mxu0 %v2534
    %v2584 = vpop.f32.mrf.mxu0
    %v2585 = vadd.f32 %v67, %v2584
    %v2586 = vpop.f32.mrf.mxu0
    %v2587 = vpop.f32.mrf.mxu0
    %v2588 = vadd.f32 %v67, %v2587
    %v2589 = vpop.f32.mrf.mxu0
    %2590 = vdwg.mxu0
    %v2591 = vmax.f32 %v2577, 0.0
    %v2592 = vmax.f32 %v2580, 0.0
    %v2593 = vmax.f32 %v2585, 0.0
    %v2594 = vmax.f32 %v2588, 0.0
    %v2595 = vpack.c.bf16 %v2592, %v2591
    %v2596 = vpack.c.bf16 %v2594, %v2593
    %2597 = vmatprep.subr.bf16.mxu0 %v298
    %2598 = vmatpush1.bf16.msra.mxu0 %v297
    %2599 = vmatprep.subr.bf16.mxu0 %v296
    %2600 = vmatpush1.bf16.msra.mxu0 %v295
    %2601 = vmatprep.subr.bf16.mxu0 %v294
    %2602 = vmatpush1.bf16.msra.mxu0 %v293
    %2603 = vmatprep.subr.bf16.mxu0 %v292
    %2604 = vmatpush1.bf16.msra.mxu0 %v291
    %2605 = vmatprep.subr.bf16.mxu0 %v290
    %2606 = vmatpush1.bf16.msra.mxu0 %v289
    %2607 = vmatprep.subr.bf16.mxu0 %v288
    %2608 = vmatpush1.bf16.msra.mxu0 %v287
    %2609 = vmatprep.subr.bf16.mxu0 %v286
    %2610 = vmatpush1.bf16.msra.mxu0 %v285
    %2611 = vmatprep.subr.bf16.mxu0 %v284
    %2612 = vmatpush1.bf16.msra.mxu0 %v283
    %2613 = vmatprep.subr.bf16.mxu0 0
    %2614 = vmatpush2.bf16.msra.mxu0 0
    %2615 = vmatprep.subr.bf16.mxu0 0
    %2616 = vmatpush2.bf16.msra.mxu0 0
    %2617 = vmatprep.subr.bf16.mxu0 0
    %2618 = vmatpush2.bf16.msra.mxu0 0
    %2619 = vmatprep.subr.bf16.mxu0 0
    %2620 = vmatpush2.bf16.msra.mxu0 0
    %2621 = vmatprep.subr.bf16.mxu0 0
    %2622 = vmatpush2.bf16.msra.mxu0 0
    %2623 = vmatprep.subr.bf16.mxu0 0
    %2624 = vmatpush2.bf16.msra.mxu0 0
    %2625 = vmatprep.subr.bf16.mxu0 0
    %2626 = vmatpush2.bf16.msra.mxu0 0
    %2627 = vmatprep.subr.bf16.mxu0 0
    %2628 = vmatpush2.bf16.msra.mxu0 0
    %2629 = vmatprep.mubr.bf16.mxu0 0
    %2630 = vmatmul.mubr.bf16.gmra.mxu0 %v2595
    %v2631 = vpop.f32.mrf.mxu0
    %v2632 = vadd.f32 %v74, %v2631
    %v2633 = vpop.f32.mrf.mxu0
    %v2634 = vadd.f32 %v78, %v2633
    %v2635 = vpop.f32.mrf.mxu0
    %v2636 = vadd.f32 %v74, %v2635
    %v2637 = vpop.f32.mrf.mxu0
    %v2638 = vadd.f32 %v78, %v2637
    %2639 = vmatprep.mubr.bf16.mxu0 0
    %2640 = vmatmul.mubr.bf16.gmra.mxu0 %v2596
    %v2641 = vpop.f32.mrf.mxu0
    %v2642 = vadd.f32 %v74, %v2641
    %v2643 = vpop.f32.mrf.mxu0
    %v2644 = vadd.f32 %v78, %v2643
    %v2645 = vpop.f32.mrf.mxu0
    %v2646 = vadd.f32 %v74, %v2645
    %v2647 = vpop.f32.mrf.mxu0
    %v2648 = vadd.f32 %v78, %v2647
    %2649 = vdwg.mxu0
    %v2650 = vmul.f32 %v2514, 0.03125
    %v2651 = vmul.f32 %v2516, 0.03125
    %v2652 = vmul.f32 %v2518, 0.03125
    %v2653 = vmul.f32 %v2520, 0.03125
    %v2654 = vmul.f32 %v2524, 0.03125
    %v2655 = vmul.f32 %v2526, 0.03125
    %v2656 = vmul.f32 %v2528, 0.03125
    %v2657 = vmul.f32 %v2530, 0.03125
    %v2658 = vadd.f32 %v2302, %v2650
    %v2659 = vadd.f32 %v2303, %v2651
    %v2660 = vadd.f32 %v2304, %v2652
    %v2661 = vadd.f32 %v2305, %v2653
    %v2662 = vadd.f32 %v2306, %v2654
    %v2663 = vadd.f32 %v2307, %v2655
    %v2664 = vadd.f32 %v2308, %v2656
    %v2665 = vadd.f32 %v2309, %v2657
    %v2666 = vmul.f32 %v2632, 0.03125
    %v2667 = vmul.f32 %v2634, 0.03125
    %v2668 = vmul.f32 %v2636, 0.03125
    %v2669 = vmul.f32 %v2638, 0.03125
    %v2670 = vmul.f32 %v2642, 0.03125
    %v2671 = vmul.f32 %v2644, 0.03125
    %v2672 = vmul.f32 %v2646, 0.03125
    %v2673 = vmul.f32 %v2648, 0.03125
    %v2674 = vadd.f32 %v2342, %v2666
    %v2675 = vadd.f32 %v2343, %v2667
    %v2676 = vadd.f32 %v2344, %v2668
    %v2677 = vadd.f32 %v2345, %v2669
    %v2678 = vadd.f32 %v2346, %v2670
    %v2679 = vadd.f32 %v2347, %v2671
    %v2680 = vadd.f32 %v2348, %v2672
    %v2681 = vadd.f32 %v2349, %v2673
    %v2682 = vpack.c.bf16 %v2660, %v2658
    %v2683 = vpack.c.bf16 %v2661, %v2659
    %v2684 = vpack.c.bf16 %v2664, %v2662
    %v2685 = vpack.c.bf16 %v2665, %v2663
    %v2687 = vsel %vm173, %v2683, 0
    %v2690 = vsel %vm173, %v2685, 0
    %2692 = vmatprep.subr.bf16.mxu0 0
    %2693 = vmatpush1.bf16.msra.mxu0 %v156
    %2694 = vmatprep.subr.bf16.mxu0 0
    %2695 = vmatpush1.bf16.msra.mxu0 %v155
    %2696 = vmatprep.subr.bf16.mxu0 0
    %2697 = vmatpush1.bf16.msra.mxu0 %v154
    %2698 = vmatprep.subr.bf16.mxu0 0
    %2699 = vmatpush1.bf16.msra.mxu0 %v153
    %2700 = vmatprep.subr.bf16.mxu0 0
    %2701 = vmatpush1.bf16.msra.mxu0 %v152
    %2702 = vmatprep.subr.bf16.mxu0 0
    %2703 = vmatpush1.bf16.msra.mxu0 %v151
    %2704 = vmatprep.subr.bf16.mxu0 0
    %2705 = vmatpush1.bf16.msra.mxu0 %v150
    %2706 = vmatprep.subr.bf16.mxu0 0
    %2707 = vmatpush1.bf16.msra.mxu0 %v149
    %2708 = vmatprep.subr.bf16.mxu0 0
    %2709 = vmatpush2.bf16.msra.mxu0 0
    %2710 = vmatprep.subr.bf16.mxu0 0
    %2711 = vmatpush2.bf16.msra.mxu0 0
    %2712 = vmatprep.subr.bf16.mxu0 0
    %2713 = vmatpush2.bf16.msra.mxu0 0
    %2714 = vmatprep.subr.bf16.mxu0 0
    %2715 = vmatpush2.bf16.msra.mxu0 0
    %2716 = vmatprep.subr.bf16.mxu0 0
    %2717 = vmatpush2.bf16.msra.mxu0 %v160
    %2718 = vmatprep.subr.bf16.mxu0 0
    %2719 = vmatpush2.bf16.msra.mxu0 %v159
    %2720 = vmatprep.subr.bf16.mxu0 0
    %2721 = vmatpush2.bf16.msra.mxu0 %v158
    %2722 = vmatprep.subr.bf16.mxu0 0
    %2723 = vmatpush2.bf16.msra.mxu0 %v157
    %2724 = vmatprep.mubr.bf16.mxu0 %v2687
    %2725 = vmatmul.mubr.bf16.gmra.mxu0 %v2682
    %v2726 = vpop.f32.mrf.mxu0
    %v2727 = vadd.f32 %v67, %v2726
    %v2728 = vpop.f32.mrf.mxu0
    %v2729 = vpop.f32.mrf.mxu0
    %v2730 = vadd.f32 %v67, %v2729
    %v2731 = vpop.f32.mrf.mxu0
    %2732 = vmatprep.mubr.bf16.mxu0 %v2690
    %2733 = vmatmul.mubr.bf16.gmra.mxu0 %v2684
    %v2734 = vpop.f32.mrf.mxu0
    %v2735 = vadd.f32 %v67, %v2734
    %v2736 = vpop.f32.mrf.mxu0
    %v2737 = vpop.f32.mrf.mxu0
    %v2738 = vadd.f32 %v67, %v2737
    %v2739 = vpop.f32.mrf.mxu0
    %2740 = vdwg.mxu0
    %v2741 = vmax.f32 %v2727, 0.0
    %v2742 = vmax.f32 %v2730, 0.0
    %v2743 = vmax.f32 %v2735, 0.0
    %v2744 = vmax.f32 %v2738, 0.0
    %v2745 = vpack.c.bf16 %v2742, %v2741
    %v2746 = vpack.c.bf16 %v2744, %v2743
    %2747 = vmatprep.subr.bf16.mxu0 %v298
    %2748 = vmatpush1.bf16.msra.mxu0 %v297
    %2749 = vmatprep.subr.bf16.mxu0 %v296
    %2750 = vmatpush1.bf16.msra.mxu0 %v295
    %2751 = vmatprep.subr.bf16.mxu0 %v294
    %2752 = vmatpush1.bf16.msra.mxu0 %v293
    %2753 = vmatprep.subr.bf16.mxu0 %v292
    %2754 = vmatpush1.bf16.msra.mxu0 %v291
    %2755 = vmatprep.subr.bf16.mxu0 %v290
    %2756 = vmatpush1.bf16.msra.mxu0 %v289
    %2757 = vmatprep.subr.bf16.mxu0 %v288
    %2758 = vmatpush1.bf16.msra.mxu0 %v287
    %2759 = vmatprep.subr.bf16.mxu0 %v286
    %2760 = vmatpush1.bf16.msra.mxu0 %v285
    %2761 = vmatprep.subr.bf16.mxu0 %v284
    %2762 = vmatpush1.bf16.msra.mxu0 %v283
    %2763 = vmatprep.subr.bf16.mxu0 0
    %2764 = vmatpush2.bf16.msra.mxu0 0
    %2765 = vmatprep.subr.bf16.mxu0 0
    %2766 = vmatpush2.bf16.msra.mxu0 0
    %2767 = vmatprep.subr.bf16.mxu0 0
    %2768 = vmatpush2.bf16.msra.mxu0 0
    %2769 = vmatprep.subr.bf16.mxu0 0
    %2770 = vmatpush2.bf16.msra.mxu0 0
    %2771 = vmatprep.subr.bf16.mxu0 0
    %2772 = vmatpush2.bf16.msra.mxu0 0
    %2773 = vmatprep.subr.bf16.mxu0 0
    %2774 = vmatpush2.bf16.msra.mxu0 0
    %2775 = vmatprep.subr.bf16.mxu0 0
    %2776 = vmatpush2.bf16.msra.mxu0 0
    %2777 = vmatprep.subr.bf16.mxu0 0
    %2778 = vmatpush2.bf16.msra.mxu0 0
    %2779 = vmatprep.mubr.bf16.mxu0 0
    %2780 = vmatmul.mubr.bf16.gmra.mxu0 %v2745
    %v2781 = vpop.f32.mrf.mxu0
    %v2782 = vadd.f32 %v74, %v2781
    %v2783 = vpop.f32.mrf.mxu0
    %v2784 = vadd.f32 %v78, %v2783
    %v2785 = vpop.f32.mrf.mxu0
    %v2786 = vadd.f32 %v74, %v2785
    %v2787 = vpop.f32.mrf.mxu0
    %v2788 = vadd.f32 %v78, %v2787
    %2789 = vmatprep.mubr.bf16.mxu0 0
    %2790 = vmatmul.mubr.bf16.gmra.mxu0 %v2746
    %v2791 = vpop.f32.mrf.mxu0
    %v2792 = vadd.f32 %v74, %v2791
    %v2793 = vpop.f32.mrf.mxu0
    %v2794 = vadd.f32 %v78, %v2793
    %v2795 = vpop.f32.mrf.mxu0
    %v2796 = vadd.f32 %v74, %v2795
    %v2797 = vpop.f32.mrf.mxu0
    %v2798 = vadd.f32 %v78, %v2797
    %2799 = vdwg.mxu0
    %v2800 = vpack.c.bf16 %v2676, %v2674
    %v2801 = vpack.c.bf16 %v2677, %v2675
    %v2802 = vpack.c.bf16 %v2680, %v2678
    %v2803 = vpack.c.bf16 %v2681, %v2679
    %v2805 = vsel %vm173, %v2801, 0
    %v2808 = vsel %vm173, %v2803, 0
    %2810 = vmatprep.subr.bf16.mxu0 0
    %2811 = vmatpush1.bf16.msra.mxu0 %v156
    %2812 = vmatprep.subr.bf16.mxu0 0
    %2813 = vmatpush1.bf16.msra.mxu0 %v155
    %2814 = vmatprep.subr.bf16.mxu0 0
    %2815 = vmatpush1.bf16.msra.mxu0 %v154
    %2816 = vmatprep.subr.bf16.mxu0 0
    %2817 = vmatpush1.bf16.msra.mxu0 %v153
    %2818 = vmatprep.subr.bf16.mxu0 0
    %2819 = vmatpush1.bf16.msra.mxu0 %v152
    %2820 = vmatprep.subr.bf16.mxu0 0
    %2821 = vmatpush1.bf16.msra.mxu0 %v151
    %2822 = vmatprep.subr.bf16.mxu0 0
    %2823 = vmatpush1.bf16.msra.mxu0 %v150
    %2824 = vmatprep.subr.bf16.mxu0 0
    %2825 = vmatpush1.bf16.msra.mxu0 %v149
    %2826 = vmatprep.subr.bf16.mxu0 0
    %2827 = vmatpush2.bf16.msra.mxu0 0
    %2828 = vmatprep.subr.bf16.mxu0 0
    %2829 = vmatpush2.bf16.msra.mxu0 0
    %2830 = vmatprep.subr.bf16.mxu0 0
    %2831 = vmatpush2.bf16.msra.mxu0 0
    %2832 = vmatprep.subr.bf16.mxu0 0
    %2833 = vmatpush2.bf16.msra.mxu0 0
    %2834 = vmatprep.subr.bf16.mxu0 0
    %2835 = vmatpush2.bf16.msra.mxu0 %v160
    %2836 = vmatprep.subr.bf16.mxu0 0
    %2837 = vmatpush2.bf16.msra.mxu0 %v159
    %2838 = vmatprep.subr.bf16.mxu0 0
    %2839 = vmatpush2.bf16.msra.mxu0 %v158
    %2840 = vmatprep.subr.bf16.mxu0 0
    %2841 = vmatpush2.bf16.msra.mxu0 %v157
    %2842 = vmatprep.mubr.bf16.mxu0 %v2805
    %2843 = vmatmul.mubr.bf16.gmra.mxu0 %v2800
    %v2844 = vpop.f32.mrf.mxu0
    %v2845 = vadd.f32 %v67, %v2844
    %v2846 = vpop.f32.mrf.mxu0
    %v2847 = vpop.f32.mrf.mxu0
    %v2848 = vadd.f32 %v67, %v2847
    %v2849 = vpop.f32.mrf.mxu0
    %2850 = vmatprep.mubr.bf16.mxu0 %v2808
    %2851 = vmatmul.mubr.bf16.gmra.mxu0 %v2802
    %v2852 = vpop.f32.mrf.mxu0
    %v2853 = vadd.f32 %v67, %v2852
    %v2854 = vpop.f32.mrf.mxu0
    %v2855 = vpop.f32.mrf.mxu0
    %v2856 = vadd.f32 %v67, %v2855
    %v2857 = vpop.f32.mrf.mxu0
    %2858 = vdwg.mxu0
    %v2859 = vmax.f32 %v2845, 0.0
    %v2860 = vmax.f32 %v2848, 0.0
    %v2861 = vmax.f32 %v2853, 0.0
    %v2862 = vmax.f32 %v2856, 0.0
    %v2863 = vpack.c.bf16 %v2860, %v2859
    %v2864 = vpack.c.bf16 %v2862, %v2861
    %2865 = vmatprep.subr.bf16.mxu0 %v298
    %2866 = vmatpush1.bf16.msra.mxu0 %v297
    %2867 = vmatprep.subr.bf16.mxu0 %v296
    %2868 = vmatpush1.bf16.msra.mxu0 %v295
    %2869 = vmatprep.subr.bf16.mxu0 %v294
    %2870 = vmatpush1.bf16.msra.mxu0 %v293
    %2871 = vmatprep.subr.bf16.mxu0 %v292
    %2872 = vmatpush1.bf16.msra.mxu0 %v291
    %2873 = vmatprep.subr.bf16.mxu0 %v290
    %2874 = vmatpush1.bf16.msra.mxu0 %v289
    %2875 = vmatprep.subr.bf16.mxu0 %v288
    %2876 = vmatpush1.bf16.msra.mxu0 %v287
    %2877 = vmatprep.subr.bf16.mxu0 %v286
    %2878 = vmatpush1.bf16.msra.mxu0 %v285
    %2879 = vmatprep.subr.bf16.mxu0 %v284
    %2880 = vmatpush1.bf16.msra.mxu0 %v283
    %2881 = vmatprep.subr.bf16.mxu0 0
    %2882 = vmatpush2.bf16.msra.mxu0 0
    %2883 = vmatprep.subr.bf16.mxu0 0
    %2884 = vmatpush2.bf16.msra.mxu0 0
    %2885 = vmatprep.subr.bf16.mxu0 0
    %2886 = vmatpush2.bf16.msra.mxu0 0
    %2887 = vmatprep.subr.bf16.mxu0 0
    %2888 = vmatpush2.bf16.msra.mxu0 0
    %2889 = vmatprep.subr.bf16.mxu0 0
    %2890 = vmatpush2.bf16.msra.mxu0 0
    %2891 = vmatprep.subr.bf16.mxu0 0
    %2892 = vmatpush2.bf16.msra.mxu0 0
    %2893 = vmatprep.subr.bf16.mxu0 0
    %2894 = vmatpush2.bf16.msra.mxu0 0
    %2895 = vmatprep.subr.bf16.mxu0 0
    %2896 = vmatpush2.bf16.msra.mxu0 0
    %2897 = vmatprep.mubr.bf16.mxu0 0
    %2898 = vmatmul.mubr.bf16.gmra.mxu0 %v2863
    %v2899 = vpop.f32.mrf.mxu0
    %v2900 = vadd.f32 %v74, %v2899
    %v2901 = vpop.f32.mrf.mxu0
    %v2902 = vadd.f32 %v78, %v2901
    %v2903 = vpop.f32.mrf.mxu0
    %v2904 = vadd.f32 %v74, %v2903
    %v2905 = vpop.f32.mrf.mxu0
    %v2906 = vadd.f32 %v78, %v2905
    %2907 = vmatprep.mubr.bf16.mxu0 0
    %2908 = vmatmul.mubr.bf16.gmra.mxu0 %v2864
    %v2909 = vpop.f32.mrf.mxu0
    %v2910 = vadd.f32 %v74, %v2909
    %v2911 = vpop.f32.mrf.mxu0
    %v2912 = vadd.f32 %v78, %v2911
    %v2913 = vpop.f32.mrf.mxu0
    %v2914 = vadd.f32 %v74, %v2913
    %v2915 = vpop.f32.mrf.mxu0
    %v2916 = vadd.f32 %v78, %v2915
    %2917 = vdwg.mxu0
    %v2918 = vmul.f32 %v2782, 0.083333336
    %v2919 = vmul.f32 %v2784, 0.083333336
    %v2920 = vmul.f32 %v2786, 0.083333336
    %v2921 = vmul.f32 %v2788, 0.083333336
    %v2922 = vmul.f32 %v2792, 0.083333336
    %v2923 = vmul.f32 %v2794, 0.083333336
    %v2924 = vmul.f32 %v2796, 0.083333336
    %v2925 = vmul.f32 %v2798, 0.083333336
    %v2926 = vadd.f32 %v2658, %v2918
    %v2927 = vadd.f32 %v2659, %v2919
    %v2928 = vadd.f32 %v2660, %v2920
    %v2929 = vadd.f32 %v2661, %v2921
    %v2930 = vadd.f32 %v2662, %v2922
    %v2931 = vadd.f32 %v2663, %v2923
    %v2932 = vadd.f32 %v2664, %v2924
    %v2933 = vadd.f32 %v2665, %v2925
    %v2934 = vpack.c.bf16 %v2928, %v2926
    %v2935 = vpack.c.bf16 %v2929, %v2927
    %v2936 = vpack.c.bf16 %v2932, %v2930
    %v2937 = vpack.c.bf16 %v2933, %v2931
    %v2939 = vsel %vm173, %v2935, 0
    %v2942 = vsel %vm173, %v2937, 0
    %2944 = vmatprep.subr.bf16.mxu0 0
    %2945 = vmatpush1.bf16.msra.mxu0 %v156
    %2946 = vmatprep.subr.bf16.mxu0 0
    %2947 = vmatpush1.bf16.msra.mxu0 %v155
    %2948 = vmatprep.subr.bf16.mxu0 0
    %2949 = vmatpush1.bf16.msra.mxu0 %v154
    %2950 = vmatprep.subr.bf16.mxu0 0
    %2951 = vmatpush1.bf16.msra.mxu0 %v153
    %2952 = vmatprep.subr.bf16.mxu0 0
    %2953 = vmatpush1.bf16.msra.mxu0 %v152
    %2954 = vmatprep.subr.bf16.mxu0 0
    %2955 = vmatpush1.bf16.msra.mxu0 %v151
    %2956 = vmatprep.subr.bf16.mxu0 0
    %2957 = vmatpush1.bf16.msra.mxu0 %v150
    %2958 = vmatprep.subr.bf16.mxu0 0
    %2959 = vmatpush1.bf16.msra.mxu0 %v149
    %2960 = vmatprep.subr.bf16.mxu0 0
    %2961 = vmatpush2.bf16.msra.mxu0 0
    %2962 = vmatprep.subr.bf16.mxu0 0
    %2963 = vmatpush2.bf16.msra.mxu0 0
    %2964 = vmatprep.subr.bf16.mxu0 0
    %2965 = vmatpush2.bf16.msra.mxu0 0
    %2966 = vmatprep.subr.bf16.mxu0 0
    %2967 = vmatpush2.bf16.msra.mxu0 0
    %2968 = vmatprep.subr.bf16.mxu0 0
    %2969 = vmatpush2.bf16.msra.mxu0 %v160
    %2970 = vmatprep.subr.bf16.mxu0 0
    %2971 = vmatpush2.bf16.msra.mxu0 %v159
    %2972 = vmatprep.subr.bf16.mxu0 0
    %2973 = vmatpush2.bf16.msra.mxu0 %v158
    %2974 = vmatprep.subr.bf16.mxu0 0
    %2975 = vmatpush2.bf16.msra.mxu0 %v157
    %2976 = vmatprep.mubr.bf16.mxu0 %v2939
    %2977 = vmatmul.mubr.bf16.gmra.mxu0 %v2934
    %v2978 = vpop.f32.mrf.mxu0
    %v2979 = vadd.f32 %v67, %v2978
    %v2980 = vpop.f32.mrf.mxu0
    %v2981 = vpop.f32.mrf.mxu0
    %v2982 = vadd.f32 %v67, %v2981
    %v2983 = vpop.f32.mrf.mxu0
    %2984 = vmatprep.mubr.bf16.mxu0 %v2942
    %2985 = vmatmul.mubr.bf16.gmra.mxu0 %v2936
    %v2986 = vpop.f32.mrf.mxu0
    %v2987 = vadd.f32 %v67, %v2986
    %v2988 = vpop.f32.mrf.mxu0
    %v2989 = vpop.f32.mrf.mxu0
    %v2990 = vadd.f32 %v67, %v2989
    %v2991 = vpop.f32.mrf.mxu0
    %2992 = vdwg.mxu0
    %v2993 = vmax.f32 %v2979, 0.0
    %v2994 = vmax.f32 %v2982, 0.0
    %v2995 = vmax.f32 %v2987, 0.0
    %v2996 = vmax.f32 %v2990, 0.0
    %v2997 = vpack.c.bf16 %v2994, %v2993
    %v2998 = vpack.c.bf16 %v2996, %v2995
    %2999 = vmatprep.subr.bf16.mxu0 %v298
    %3000 = vmatpush1.bf16.msra.mxu0 %v297
    %3001 = vmatprep.subr.bf16.mxu0 %v296
    %3002 = vmatpush1.bf16.msra.mxu0 %v295
    %3003 = vmatprep.subr.bf16.mxu0 %v294
    %3004 = vmatpush1.bf16.msra.mxu0 %v293
    %3005 = vmatprep.subr.bf16.mxu0 %v292
    %3006 = vmatpush1.bf16.msra.mxu0 %v291
    %3007 = vmatprep.subr.bf16.mxu0 %v290
    %3008 = vmatpush1.bf16.msra.mxu0 %v289
    %3009 = vmatprep.subr.bf16.mxu0 %v288
    %3010 = vmatpush1.bf16.msra.mxu0 %v287
    %3011 = vmatprep.subr.bf16.mxu0 %v286
    %3012 = vmatpush1.bf16.msra.mxu0 %v285
    %3013 = vmatprep.subr.bf16.mxu0 %v284
    %3014 = vmatpush1.bf16.msra.mxu0 %v283
    %3015 = vmatprep.subr.bf16.mxu0 0
    %3016 = vmatpush2.bf16.msra.mxu0 0
    %3017 = vmatprep.subr.bf16.mxu0 0
    %3018 = vmatpush2.bf16.msra.mxu0 0
    %3019 = vmatprep.subr.bf16.mxu0 0
    %3020 = vmatpush2.bf16.msra.mxu0 0
    %3021 = vmatprep.subr.bf16.mxu0 0
    %3022 = vmatpush2.bf16.msra.mxu0 0
    %3023 = vmatprep.subr.bf16.mxu0 0
    %3024 = vmatpush2.bf16.msra.mxu0 0
    %3025 = vmatprep.subr.bf16.mxu0 0
    %3026 = vmatpush2.bf16.msra.mxu0 0
    %3027 = vmatprep.subr.bf16.mxu0 0
    %3028 = vmatpush2.bf16.msra.mxu0 0
    %3029 = vmatprep.subr.bf16.mxu0 0
    %3030 = vmatpush2.bf16.msra.mxu0 0
    %3031 = vmatprep.mubr.bf16.mxu0 0
    %3032 = vmatmul.mubr.bf16.gmra.mxu0 %v2997
    %v3033 = vpop.f32.mrf.mxu0
    %v3034 = vadd.f32 %v74, %v3033
    %v3035 = vpop.f32.mrf.mxu0
    %v3036 = vadd.f32 %v78, %v3035
    %v3037 = vpop.f32.mrf.mxu0
    %v3038 = vadd.f32 %v74, %v3037
    %v3039 = vpop.f32.mrf.mxu0
    %v3040 = vadd.f32 %v78, %v3039
    %3041 = vmatprep.mubr.bf16.mxu0 0
    %3042 = vmatmul.mubr.bf16.gmra.mxu0 %v2998
    %v3043 = vpop.f32.mrf.mxu0
    %v3044 = vadd.f32 %v74, %v3043
    %v3045 = vpop.f32.mrf.mxu0
    %v3046 = vadd.f32 %v78, %v3045
    %v3047 = vpop.f32.mrf.mxu0
    %v3048 = vadd.f32 %v74, %v3047
    %v3049 = vpop.f32.mrf.mxu0
    %v3050 = vadd.f32 %v78, %v3049
    %3051 = vdwg.mxu0
    %v3052 = vmul.f32 %v2900, 0.083333336
    %v3053 = vmul.f32 %v2902, 0.083333336
    %v3054 = vmul.f32 %v2904, 0.083333336
    %v3055 = vmul.f32 %v2906, 0.083333336
    %v3056 = vmul.f32 %v2910, 0.083333336
    %v3057 = vmul.f32 %v2912, 0.083333336
    %v3058 = vmul.f32 %v2914, 0.083333336
    %v3059 = vmul.f32 %v2916, 0.083333336
    %v3060 = vadd.f32 %v2674, %v3052
    %v3061 = vadd.f32 %v2675, %v3053
    %v3062 = vadd.f32 %v2676, %v3054
    %v3063 = vadd.f32 %v2677, %v3055
    %v3064 = vadd.f32 %v2678, %v3056
    %v3065 = vadd.f32 %v2679, %v3057
    %v3066 = vadd.f32 %v2680, %v3058
    %v3067 = vadd.f32 %v2681, %v3059
    %v3068 = vpack.c.bf16 %v3062, %v3060
    %v3069 = vpack.c.bf16 %v3063, %v3061
    %v3070 = vpack.c.bf16 %v3066, %v3064
    %v3071 = vpack.c.bf16 %v3067, %v3065
    %v3073 = vsel %vm173, %v3069, 0
    %v3076 = vsel %vm173, %v3071, 0
    %3078 = vmatprep.subr.bf16.mxu0 0
    %3079 = vmatpush1.bf16.msra.mxu0 %v156
    %3080 = vmatprep.subr.bf16.mxu0 0
    %3081 = vmatpush1.bf16.msra.mxu0 %v155
    %3082 = vmatprep.subr.bf16.mxu0 0
    %3083 = vmatpush1.bf16.msra.mxu0 %v154
    %3084 = vmatprep.subr.bf16.mxu0 0
    %3085 = vmatpush1.bf16.msra.mxu0 %v153
    %3086 = vmatprep.subr.bf16.mxu0 0
    %3087 = vmatpush1.bf16.msra.mxu0 %v152
    %3088 = vmatprep.subr.bf16.mxu0 0
    %3089 = vmatpush1.bf16.msra.mxu0 %v151
    %3090 = vmatprep.subr.bf16.mxu0 0
    %3091 = vmatpush1.bf16.msra.mxu0 %v150
    %3092 = vmatprep.subr.bf16.mxu0 0
    %3093 = vmatpush1.bf16.msra.mxu0 %v149
    %3094 = vmatprep.subr.bf16.mxu0 0
    %3095 = vmatpush2.bf16.msra.mxu0 0
    %3096 = vmatprep.subr.bf16.mxu0 0
    %3097 = vmatpush2.bf16.msra.mxu0 0
    %3098 = vmatprep.subr.bf16.mxu0 0
    %3099 = vmatpush2.bf16.msra.mxu0 0
    %3100 = vmatprep.subr.bf16.mxu0 0
    %3101 = vmatpush2.bf16.msra.mxu0 0
    %3102 = vmatprep.subr.bf16.mxu0 0
    %3103 = vmatpush2.bf16.msra.mxu0 %v160
    %3104 = vmatprep.subr.bf16.mxu0 0
    %3105 = vmatpush2.bf16.msra.mxu0 %v159
    %3106 = vmatprep.subr.bf16.mxu0 0
    %3107 = vmatpush2.bf16.msra.mxu0 %v158
    %3108 = vmatprep.subr.bf16.mxu0 0
    %3109 = vmatpush2.bf16.msra.mxu0 %v157
    %3110 = vmatprep.mubr.bf16.mxu0 %v3073
    %3111 = vmatmul.mubr.bf16.gmra.mxu0 %v3068
    %v3112 = vpop.f32.mrf.mxu0
    %v3113 = vadd.f32 %v67, %v3112
    %v3114 = vpop.f32.mrf.mxu0
    %v3115 = vpop.f32.mrf.mxu0
    %v3116 = vadd.f32 %v67, %v3115
    %v3117 = vpop.f32.mrf.mxu0
    %3118 = vmatprep.mubr.bf16.mxu0 %v3076
    %3119 = vmatmul.mubr.bf16.gmra.mxu0 %v3070
    %v3120 = vpop.f32.mrf.mxu0
    %v3121 = vadd.f32 %v67, %v3120
    %v3122 = vpop.f32.mrf.mxu0
    %v3123 = vpop.f32.mrf.mxu0
    %v3124 = vadd.f32 %v67, %v3123
    %v3125 = vpop.f32.mrf.mxu0
    %3126 = vdwg.mxu0
    %v3127 = vmax.f32 %v3113, 0.0
    %v3128 = vmax.f32 %v3116, 0.0
    %v3129 = vmax.f32 %v3121, 0.0
    %v3130 = vmax.f32 %v3124, 0.0
    %v3131 = vpack.c.bf16 %v3128, %v3127
    %v3132 = vpack.c.bf16 %v3130, %v3129
    %3133 = vmatprep.subr.bf16.mxu0 %v298
    %3134 = vmatpush1.bf16.msra.mxu0 %v297
    %3135 = vmatprep.subr.bf16.mxu0 %v296
    %3136 = vmatpush1.bf16.msra.mxu0 %v295
    %3137 = vmatprep.subr.bf16.mxu0 %v294
    %3138 = vmatpush1.bf16.msra.mxu0 %v293
    %3139 = vmatprep.subr.bf16.mxu0 %v292
    %3140 = vmatpush1.bf16.msra.mxu0 %v291
    %3141 = vmatprep.subr.bf16.mxu0 %v290
    %3142 = vmatpush1.bf16.msra.mxu0 %v289
    %3143 = vmatprep.subr.bf16.mxu0 %v288
    %3144 = vmatpush1.bf16.msra.mxu0 %v287
    %3145 = vmatprep.subr.bf16.mxu0 %v286
    %3146 = vmatpush1.bf16.msra.mxu0 %v285
    %3147 = vmatprep.subr.bf16.mxu0 %v284
    %3148 = vmatpush1.bf16.msra.mxu0 %v283
    %3149 = vmatprep.subr.bf16.mxu0 0
    %3150 = vmatpush2.bf16.msra.mxu0 0
    %3151 = vmatprep.subr.bf16.mxu0 0
    %3152 = vmatpush2.bf16.msra.mxu0 0
    %3153 = vmatprep.subr.bf16.mxu0 0
    %3154 = vmatpush2.bf16.msra.mxu0 0
    %3155 = vmatprep.subr.bf16.mxu0 0
    %3156 = vmatpush2.bf16.msra.mxu0 0
    %3157 = vmatprep.subr.bf16.mxu0 0
    %3158 = vmatpush2.bf16.msra.mxu0 0
    %3159 = vmatprep.subr.bf16.mxu0 0
    %3160 = vmatpush2.bf16.msra.mxu0 0
    %3161 = vmatprep.subr.bf16.mxu0 0
    %3162 = vmatpush2.bf16.msra.mxu0 0
    %3163 = vmatprep.subr.bf16.mxu0 0
    %3164 = vmatpush2.bf16.msra.mxu0 0
    %3165 = vmatprep.mubr.bf16.mxu0 0
    %3166 = vmatmul.mubr.bf16.gmra.mxu0 %v3131
    %v3167 = vpop.f32.mrf.mxu0
    %v3168 = vadd.f32 %v74, %v3167
    %v3169 = vpop.f32.mrf.mxu0
    %v3170 = vadd.f32 %v78, %v3169
    %v3171 = vpop.f32.mrf.mxu0
    %v3172 = vadd.f32 %v74, %v3171
    %v3173 = vpop.f32.mrf.mxu0
    %v3174 = vadd.f32 %v78, %v3173
    %3175 = vmatprep.mubr.bf16.mxu0 0
    %3176 = vmatmul.mubr.bf16.gmra.mxu0 %v3132
    %v3177 = vpop.f32.mrf.mxu0
    %v3178 = vadd.f32 %v74, %v3177
    %v3179 = vpop.f32.mrf.mxu0
    %v3180 = vadd.f32 %v78, %v3179
    %v3181 = vpop.f32.mrf.mxu0
    %v3182 = vadd.f32 %v74, %v3181
    %v3183 = vpop.f32.mrf.mxu0
    %v3184 = vadd.f32 %v78, %v3183
    %3185 = vdwg.mxu0
    %v3186 = vmul.f32 %v2782, 0.33333334
    %v3187 = vmul.f32 %v2784, 0.33333334
    %v3188 = vmul.f32 %v2786, 0.33333334
    %v3189 = vmul.f32 %v2788, 0.33333334
    %v3190 = vmul.f32 %v2792, 0.33333334
    %v3191 = vmul.f32 %v2794, 0.33333334
    %v3192 = vmul.f32 %v2796, 0.33333334
    %v3193 = vmul.f32 %v2798, 0.33333334
    %v3194 = vsub.f32 %v3034, %v3186
    %v3195 = vsub.f32 %v3036, %v3187
    %v3196 = vsub.f32 %v3038, %v3188
    %v3197 = vsub.f32 %v3040, %v3189
    %v3198 = vsub.f32 %v3044, %v3190
    %v3199 = vsub.f32 %v3046, %v3191
    %v3200 = vsub.f32 %v3048, %v3192
    %v3201 = vsub.f32 %v3050, %v3193
    %v3202 = vmul.f32 %v3194, 0.25
    %v3203 = vmul.f32 %v3195, 0.25
    %v3204 = vmul.f32 %v3196, 0.25
    %v3205 = vmul.f32 %v3197, 0.25
    %v3206 = vmul.f32 %v3198, 0.25
    %v3207 = vmul.f32 %v3199, 0.25
    %v3208 = vmul.f32 %v3200, 0.25
    %v3209 = vmul.f32 %v3201, 0.25
    %v3210 = vadd.f32 %v2658, %v3202
    %v3211 = vadd.f32 %v2659, %v3203
    %v3212 = vadd.f32 %v2660, %v3204
    %v3213 = vadd.f32 %v2661, %v3205
    %v3214 = vadd.f32 %v2662, %v3206
    %v3215 = vadd.f32 %v2663, %v3207
    %v3216 = vadd.f32 %v2664, %v3208
    %v3217 = vadd.f32 %v2665, %v3209
    %v3218 = vpack.c.bf16 %v3212, %v3210
    %v3219 = vpack.c.bf16 %v3213, %v3211
    %v3220 = vpack.c.bf16 %v3216, %v3214
    %v3221 = vpack.c.bf16 %v3217, %v3215
    %v3223 = vsel %vm173, %v3219, 0
    %v3226 = vsel %vm173, %v3221, 0
    %3228 = vmatprep.subr.bf16.mxu0 0
    %3229 = vmatpush1.bf16.msra.mxu0 %v156
    %3230 = vmatprep.subr.bf16.mxu0 0
    %3231 = vmatpush1.bf16.msra.mxu0 %v155
    %3232 = vmatprep.subr.bf16.mxu0 0
    %3233 = vmatpush1.bf16.msra.mxu0 %v154
    %3234 = vmatprep.subr.bf16.mxu0 0
    %3235 = vmatpush1.bf16.msra.mxu0 %v153
    %3236 = vmatprep.subr.bf16.mxu0 0
    %3237 = vmatpush1.bf16.msra.mxu0 %v152
    %3238 = vmatprep.subr.bf16.mxu0 0
    %3239 = vmatpush1.bf16.msra.mxu0 %v151
    %3240 = vmatprep.subr.bf16.mxu0 0
    %3241 = vmatpush1.bf16.msra.mxu0 %v150
    %3242 = vmatprep.subr.bf16.mxu0 0
    %3243 = vmatpush1.bf16.msra.mxu0 %v149
    %3244 = vmatprep.subr.bf16.mxu0 0
    %3245 = vmatpush2.bf16.msra.mxu0 0
    %3246 = vmatprep.subr.bf16.mxu0 0
    %3247 = vmatpush2.bf16.msra.mxu0 0
    %3248 = vmatprep.subr.bf16.mxu0 0
    %3249 = vmatpush2.bf16.msra.mxu0 0
    %3250 = vmatprep.subr.bf16.mxu0 0
    %3251 = vmatpush2.bf16.msra.mxu0 0
    %3252 = vmatprep.subr.bf16.mxu0 0
    %3253 = vmatpush2.bf16.msra.mxu0 %v160
    %3254 = vmatprep.subr.bf16.mxu0 0
    %3255 = vmatpush2.bf16.msra.mxu0 %v159
    %3256 = vmatprep.subr.bf16.mxu0 0
    %3257 = vmatpush2.bf16.msra.mxu0 %v158
    %3258 = vmatprep.subr.bf16.mxu0 0
    %3259 = vmatpush2.bf16.msra.mxu0 %v157
    %3260 = vmatprep.mubr.bf16.mxu0 %v3223
    %3261 = vmatmul.mubr.bf16.gmra.mxu0 %v3218
    %v3262 = vpop.f32.mrf.mxu0
    %v3263 = vadd.f32 %v67, %v3262
    %v3264 = vpop.f32.mrf.mxu0
    %v3265 = vpop.f32.mrf.mxu0
    %v3266 = vadd.f32 %v67, %v3265
    %v3267 = vpop.f32.mrf.mxu0
    %3268 = vmatprep.mubr.bf16.mxu0 %v3226
    %3269 = vmatmul.mubr.bf16.gmra.mxu0 %v3220
    %v3270 = vpop.f32.mrf.mxu0
    %v3271 = vadd.f32 %v67, %v3270
    %v3272 = vpop.f32.mrf.mxu0
    %v3273 = vpop.f32.mrf.mxu0
    %v3274 = vadd.f32 %v67, %v3273
    %v3275 = vpop.f32.mrf.mxu0
    %3276 = vdwg.mxu0
    %v3277 = vmax.f32 %v3263, 0.0
    %v3278 = vmax.f32 %v3266, 0.0
    %v3279 = vmax.f32 %v3271, 0.0
    %v3280 = vmax.f32 %v3274, 0.0
    %v3281 = vpack.c.bf16 %v3278, %v3277
    %v3282 = vpack.c.bf16 %v3280, %v3279
    %3283 = vmatprep.subr.bf16.mxu0 %v298
    %3284 = vmatpush1.bf16.msra.mxu0 %v297
    %3285 = vmatprep.subr.bf16.mxu0 %v296
    %3286 = vmatpush1.bf16.msra.mxu0 %v295
    %3287 = vmatprep.subr.bf16.mxu0 %v294
    %3288 = vmatpush1.bf16.msra.mxu0 %v293
    %3289 = vmatprep.subr.bf16.mxu0 %v292
    %3290 = vmatpush1.bf16.msra.mxu0 %v291
    %3291 = vmatprep.subr.bf16.mxu0 %v290
    %3292 = vmatpush1.bf16.msra.mxu0 %v289
    %3293 = vmatprep.subr.bf16.mxu0 %v288
    %3294 = vmatpush1.bf16.msra.mxu0 %v287
    %3295 = vmatprep.subr.bf16.mxu0 %v286
    %3296 = vmatpush1.bf16.msra.mxu0 %v285
    %3297 = vmatprep.subr.bf16.mxu0 %v284
    %3298 = vmatpush1.bf16.msra.mxu0 %v283
    %3299 = vmatprep.subr.bf16.mxu0 0
    %3300 = vmatpush2.bf16.msra.mxu0 0
    %3301 = vmatprep.subr.bf16.mxu0 0
    %3302 = vmatpush2.bf16.msra.mxu0 0
    %3303 = vmatprep.subr.bf16.mxu0 0
    %3304 = vmatpush2.bf16.msra.mxu0 0
    %3305 = vmatprep.subr.bf16.mxu0 0
    %3306 = vmatpush2.bf16.msra.mxu0 0
    %3307 = vmatprep.subr.bf16.mxu0 0
    %3308 = vmatpush2.bf16.msra.mxu0 0
    %3309 = vmatprep.subr.bf16.mxu0 0
    %3310 = vmatpush2.bf16.msra.mxu0 0
    %3311 = vmatprep.subr.bf16.mxu0 0
    %3312 = vmatpush2.bf16.msra.mxu0 0
    %3313 = vmatprep.subr.bf16.mxu0 0
    %3314 = vmatpush2.bf16.msra.mxu0 0
    %3315 = vmatprep.mubr.bf16.mxu0 0
    %3316 = vmatmul.mubr.bf16.gmra.mxu0 %v3281
    %v3317 = vpop.f32.mrf.mxu0
    %v3318 = vadd.f32 %v74, %v3317
    %v3319 = vpop.f32.mrf.mxu0
    %v3320 = vadd.f32 %v78, %v3319
    %v3321 = vpop.f32.mrf.mxu0
    %v3322 = vadd.f32 %v74, %v3321
    %v3323 = vpop.f32.mrf.mxu0
    %v3324 = vadd.f32 %v78, %v3323
    %3325 = vmatprep.mubr.bf16.mxu0 0
    %3326 = vmatmul.mubr.bf16.gmra.mxu0 %v3282
    %v3327 = vpop.f32.mrf.mxu0
    %v3328 = vadd.f32 %v74, %v3327
    %v3329 = vpop.f32.mrf.mxu0
    %v3330 = vadd.f32 %v78, %v3329
    %v3331 = vpop.f32.mrf.mxu0
    %v3332 = vadd.f32 %v74, %v3331
    %v3333 = vpop.f32.mrf.mxu0
    %v3334 = vadd.f32 %v78, %v3333
    %3335 = vdwg.mxu0
    %v3336 = vmul.f32 %v2900, 0.33333334
    %v3337 = vmul.f32 %v2902, 0.33333334
    %v3338 = vmul.f32 %v2904, 0.33333334
    %v3339 = vmul.f32 %v2906, 0.33333334
    %v3340 = vmul.f32 %v2910, 0.33333334
    %v3341 = vmul.f32 %v2912, 0.33333334
    %v3342 = vmul.f32 %v2914, 0.33333334
    %v3343 = vmul.f32 %v2916, 0.33333334
    %v3344 = vsub.f32 %v3168, %v3336
    %v3345 = vsub.f32 %v3170, %v3337
    %v3346 = vsub.f32 %v3172, %v3338
    %v3347 = vsub.f32 %v3174, %v3339
    %v3348 = vsub.f32 %v3178, %v3340
    %v3349 = vsub.f32 %v3180, %v3341
    %v3350 = vsub.f32 %v3182, %v3342
    %v3351 = vsub.f32 %v3184, %v3343
    %v3352 = vmul.f32 %v3344, 0.25
    %v3353 = vmul.f32 %v3345, 0.25
    %v3354 = vmul.f32 %v3346, 0.25
    %v3355 = vmul.f32 %v3347, 0.25
    %v3356 = vmul.f32 %v3348, 0.25
    %v3357 = vmul.f32 %v3349, 0.25
    %v3358 = vmul.f32 %v3350, 0.25
    %v3359 = vmul.f32 %v3351, 0.25
    %v3360 = vadd.f32 %v2674, %v3352
    %v3361 = vadd.f32 %v2675, %v3353
    %v3362 = vadd.f32 %v2676, %v3354
    %v3363 = vadd.f32 %v2677, %v3355
    %v3364 = vadd.f32 %v2678, %v3356
    %v3365 = vadd.f32 %v2679, %v3357
    %v3366 = vadd.f32 %v2680, %v3358
    %v3367 = vadd.f32 %v2681, %v3359
    %v3368 = vpack.c.bf16 %v3362, %v3360
    %v3369 = vpack.c.bf16 %v3363, %v3361
    %v3370 = vpack.c.bf16 %v3366, %v3364
    %v3371 = vpack.c.bf16 %v3367, %v3365
    %v3373 = vsel %vm173, %v3369, 0
    %v3376 = vsel %vm173, %v3371, 0
    %3378 = vmatprep.subr.bf16.mxu0 0
    %3379 = vmatpush1.bf16.msra.mxu0 %v156
    %3380 = vmatprep.subr.bf16.mxu0 0
    %3381 = vmatpush1.bf16.msra.mxu0 %v155
    %3382 = vmatprep.subr.bf16.mxu0 0
    %3383 = vmatpush1.bf16.msra.mxu0 %v154
    %3384 = vmatprep.subr.bf16.mxu0 0
    %3385 = vmatpush1.bf16.msra.mxu0 %v153
    %3386 = vmatprep.subr.bf16.mxu0 0
    %3387 = vmatpush1.bf16.msra.mxu0 %v152
    %3388 = vmatprep.subr.bf16.mxu0 0
    %3389 = vmatpush1.bf16.msra.mxu0 %v151
    %3390 = vmatprep.subr.bf16.mxu0 0
    %3391 = vmatpush1.bf16.msra.mxu0 %v150
    %3392 = vmatprep.subr.bf16.mxu0 0
    %3393 = vmatpush1.bf16.msra.mxu0 %v149
    %3394 = vmatprep.subr.bf16.mxu0 0
    %3395 = vmatpush2.bf16.msra.mxu0 0
    %3396 = vmatprep.subr.bf16.mxu0 0
    %3397 = vmatpush2.bf16.msra.mxu0 0
    %3398 = vmatprep.subr.bf16.mxu0 0
    %3399 = vmatpush2.bf16.msra.mxu0 0
    %3400 = vmatprep.subr.bf16.mxu0 0
    %3401 = vmatpush2.bf16.msra.mxu0 0
    %3402 = vmatprep.subr.bf16.mxu0 0
    %3403 = vmatpush2.bf16.msra.mxu0 %v160
    %3404 = vmatprep.subr.bf16.mxu0 0
    %3405 = vmatpush2.bf16.msra.mxu0 %v159
    %3406 = vmatprep.subr.bf16.mxu0 0
    %3407 = vmatpush2.bf16.msra.mxu0 %v158
    %3408 = vmatprep.subr.bf16.mxu0 0
    %3409 = vmatpush2.bf16.msra.mxu0 %v157
    %3410 = vmatprep.mubr.bf16.mxu0 %v3373
    %3411 = vmatmul.mubr.bf16.gmra.mxu0 %v3368
    %v3412 = vpop.f32.mrf.mxu0
    %v3413 = vadd.f32 %v67, %v3412
    %v3414 = vpop.f32.mrf.mxu0
    %v3415 = vpop.f32.mrf.mxu0
    %v3416 = vadd.f32 %v67, %v3415
    %v3417 = vpop.f32.mrf.mxu0
    %3418 = vmatprep.mubr.bf16.mxu0 %v3376
    %3419 = vmatmul.mubr.bf16.gmra.mxu0 %v3370
    %v3420 = vpop.f32.mrf.mxu0
    %v3421 = vadd.f32 %v67, %v3420
    %v3422 = vpop.f32.mrf.mxu0
    %v3423 = vpop.f32.mrf.mxu0
    %v3424 = vadd.f32 %v67, %v3423
    %v3425 = vpop.f32.mrf.mxu0
    %3426 = vdwg.mxu0
    %v3427 = vmax.f32 %v3413, 0.0
    %v3428 = vmax.f32 %v3416, 0.0
    %v3429 = vmax.f32 %v3421, 0.0
    %v3430 = vmax.f32 %v3424, 0.0
    %v3431 = vpack.c.bf16 %v3428, %v3427
    %v3432 = vpack.c.bf16 %v3430, %v3429
    %3433 = vmatprep.subr.bf16.mxu0 %v298
    %3434 = vmatpush1.bf16.msra.mxu0 %v297
    %3435 = vmatprep.subr.bf16.mxu0 %v296
    %3436 = vmatpush1.bf16.msra.mxu0 %v295
    %3437 = vmatprep.subr.bf16.mxu0 %v294
    %3438 = vmatpush1.bf16.msra.mxu0 %v293
    %3439 = vmatprep.subr.bf16.mxu0 %v292
    %3440 = vmatpush1.bf16.msra.mxu0 %v291
    %3441 = vmatprep.subr.bf16.mxu0 %v290
    %3442 = vmatpush1.bf16.msra.mxu0 %v289
    %3443 = vmatprep.subr.bf16.mxu0 %v288
    %3444 = vmatpush1.bf16.msra.mxu0 %v287
    %3445 = vmatprep.subr.bf16.mxu0 %v286
    %3446 = vmatpush1.bf16.msra.mxu0 %v285
    %3447 = vmatprep.subr.bf16.mxu0 %v284
    %3448 = vmatpush1.bf16.msra.mxu0 %v283
    %3449 = vmatprep.subr.bf16.mxu0 0
    %3450 = vmatpush2.bf16.msra.mxu0 0
    %3451 = vmatprep.subr.bf16.mxu0 0
    %3452 = vmatpush2.bf16.msra.mxu0 0
    %3453 = vmatprep.subr.bf16.mxu0 0
    %3454 = vmatpush2.bf16.msra.mxu0 0
    %3455 = vmatprep.subr.bf16.mxu0 0
    %3456 = vmatpush2.bf16.msra.mxu0 0
    %3457 = vmatprep.subr.bf16.mxu0 0
    %3458 = vmatpush2.bf16.msra.mxu0 0
    %3459 = vmatprep.subr.bf16.mxu0 0
    %3460 = vmatpush2.bf16.msra.mxu0 0
    %3461 = vmatprep.subr.bf16.mxu0 0
    %3462 = vmatpush2.bf16.msra.mxu0 0
    %3463 = vmatprep.subr.bf16.mxu0 0
    %3464 = vmatpush2.bf16.msra.mxu0 0
    %3465 = vmatprep.mubr.bf16.mxu0 0
    %3466 = vmatmul.mubr.bf16.gmra.mxu0 %v3431
    %v3467 = vpop.f32.mrf.mxu0
    %v3468 = vadd.f32 %v74, %v3467
    %v3469 = vpop.f32.mrf.mxu0
    %v3470 = vadd.f32 %v78, %v3469
    %v3471 = vpop.f32.mrf.mxu0
    %v3472 = vadd.f32 %v74, %v3471
    %v3473 = vpop.f32.mrf.mxu0
    %v3474 = vadd.f32 %v78, %v3473
    %3475 = vmatprep.mubr.bf16.mxu0 0
    %3476 = vmatmul.mubr.bf16.gmra.mxu0 %v3432
    %v3477 = vpop.f32.mrf.mxu0
    %v3478 = vadd.f32 %v74, %v3477
    %v3479 = vpop.f32.mrf.mxu0
    %v3480 = vadd.f32 %v78, %v3479
    %v3481 = vpop.f32.mrf.mxu0
    %v3482 = vadd.f32 %v74, %v3481
    %v3483 = vpop.f32.mrf.mxu0
    %v3484 = vadd.f32 %v78, %v3483
    %3485 = vdwg.mxu0
    %v3486 = vadd.f32 %v3034, %v3318
    %v3487 = vadd.f32 %v3036, %v3320
    %v3488 = vadd.f32 %v3038, %v3322
    %v3489 = vadd.f32 %v3040, %v3324
    %v3490 = vadd.f32 %v3044, %v3328
    %v3491 = vadd.f32 %v3046, %v3330
    %v3492 = vadd.f32 %v3048, %v3332
    %v3493 = vadd.f32 %v3050, %v3334
    %v3494 = vmul.f32 %v3486, 3.0
    %v3495 = vmul.f32 %v3487, 3.0
    %v3496 = vmul.f32 %v3488, 3.0
    %v3497 = vmul.f32 %v3489, 3.0
    %v3498 = vmul.f32 %v3490, 3.0
    %v3499 = vmul.f32 %v3491, 3.0
    %v3500 = vmul.f32 %v3492, 3.0
    %v3501 = vmul.f32 %v3493, 3.0
    %v3502 = vadd.f32 %v2782, %v3494
    %v3503 = vadd.f32 %v2784, %v3495
    %v3504 = vadd.f32 %v2786, %v3496
    %v3505 = vadd.f32 %v2788, %v3497
    %v3506 = vadd.f32 %v2792, %v3498
    %v3507 = vadd.f32 %v2794, %v3499
    %v3508 = vadd.f32 %v2796, %v3500
    %v3509 = vadd.f32 %v2798, %v3501
    %v3510 = vmul.f32 %v3502, 0.03125
    %v3511 = vmul.f32 %v3503, 0.03125
    %v3512 = vmul.f32 %v3504, 0.03125
    %v3513 = vmul.f32 %v3505, 0.03125
    %v3514 = vmul.f32 %v3506, 0.03125
    %v3515 = vmul.f32 %v3507, 0.03125
    %v3516 = vmul.f32 %v3508, 0.03125
    %v3517 = vmul.f32 %v3509, 0.03125
    %v3518 = vadd.f32 %v2658, %v3510
    %v3519 = vadd.f32 %v2659, %v3511
    %v3520 = vadd.f32 %v2660, %v3512
    %v3521 = vadd.f32 %v2661, %v3513
    %v3522 = vadd.f32 %v2662, %v3514
    %v3523 = vadd.f32 %v2663, %v3515
    %v3524 = vadd.f32 %v2664, %v3516
    %v3525 = vadd.f32 %v2665, %v3517
    %v3526 = vadd.f32 %v3168, %v3468
    %v3527 = vadd.f32 %v3170, %v3470
    %v3528 = vadd.f32 %v3172, %v3472
    %v3529 = vadd.f32 %v3174, %v3474
    %v3530 = vadd.f32 %v3178, %v3478
    %v3531 = vadd.f32 %v3180, %v3480
    %v3532 = vadd.f32 %v3182, %v3482
    %v3533 = vadd.f32 %v3184, %v3484
    %v3534 = vmul.f32 %v3526, 3.0
    %v3535 = vmul.f32 %v3527, 3.0
    %v3536 = vmul.f32 %v3528, 3.0
    %v3537 = vmul.f32 %v3529, 3.0
    %v3538 = vmul.f32 %v3530, 3.0
    %v3539 = vmul.f32 %v3531, 3.0
    %v3540 = vmul.f32 %v3532, 3.0
    %v3541 = vmul.f32 %v3533, 3.0
    %v3542 = vadd.f32 %v2900, %v3534
    %v3543 = vadd.f32 %v2902, %v3535
    %v3544 = vadd.f32 %v2904, %v3536
    %v3545 = vadd.f32 %v2906, %v3537
    %v3546 = vadd.f32 %v2910, %v3538
    %v3547 = vadd.f32 %v2912, %v3539
    %v3548 = vadd.f32 %v2914, %v3540
    %v3549 = vadd.f32 %v2916, %v3541
    %v3550 = vmul.f32 %v3542, 0.03125
    %v3551 = vmul.f32 %v3543, 0.03125
    %v3552 = vmul.f32 %v3544, 0.03125
    %v3553 = vmul.f32 %v3545, 0.03125
    %v3554 = vmul.f32 %v3546, 0.03125
    %v3555 = vmul.f32 %v3547, 0.03125
    %v3556 = vmul.f32 %v3548, 0.03125
    %v3557 = vmul.f32 %v3549, 0.03125
    %v3558 = vadd.f32 %v2674, %v3550
    %v3559 = vadd.f32 %v2675, %v3551
    %v3560 = vadd.f32 %v2676, %v3552
    %v3561 = vadd.f32 %v2677, %v3553
    %v3562 = vadd.f32 %v2678, %v3554
    %v3563 = vadd.f32 %v2679, %v3555
    %v3564 = vadd.f32 %v2680, %v3556
    %v3565 = vadd.f32 %v2681, %v3557
    %v3566 = vsub.f32 %v2782, %v3034
    %v3567 = vsub.f32 %v2784, %v3036
    %v3568 = vsub.f32 %v2786, %v3038
    %v3569 = vsub.f32 %v2788, %v3040
    %v3570 = vsub.f32 %v2792, %v3044
    %v3571 = vsub.f32 %v2794, %v3046
    %v3572 = vsub.f32 %v2796, %v3048
    %v3573 = vsub.f32 %v2798, %v3050
    %v3574 = vadd.f32 %v3566, %v3318
    %v3575 = vadd.f32 %v3567, %v3320
    %v3576 = vadd.f32 %v3568, %v3322
    %v3577 = vadd.f32 %v3569, %v3324
    %v3578 = vadd.f32 %v3570, %v3328
    %v3579 = vadd.f32 %v3571, %v3330
    %v3580 = vadd.f32 %v3572, %v3332
    %v3581 = vadd.f32 %v3573, %v3334
    %v3582 = vmul.f32 %v3574, 0.25
    %v3583 = vmul.f32 %v3575, 0.25
    %v3584 = vmul.f32 %v3576, 0.25
    %v3585 = vmul.f32 %v3577, 0.25
    %v3586 = vmul.f32 %v3578, 0.25
    %v3587 = vmul.f32 %v3579, 0.25
    %v3588 = vmul.f32 %v3580, 0.25
    %v3589 = vmul.f32 %v3581, 0.25
    %v3590 = vadd.f32 %v2658, %v3582
    %v3591 = vadd.f32 %v2659, %v3583
    %v3592 = vadd.f32 %v2660, %v3584
    %v3593 = vadd.f32 %v2661, %v3585
    %v3594 = vadd.f32 %v2662, %v3586
    %v3595 = vadd.f32 %v2663, %v3587
    %v3596 = vadd.f32 %v2664, %v3588
    %v3597 = vadd.f32 %v2665, %v3589
    %v3598 = vsub.f32 %v2900, %v3168
    %v3599 = vsub.f32 %v2902, %v3170
    %v3600 = vsub.f32 %v2904, %v3172
    %v3601 = vsub.f32 %v2906, %v3174
    %v3602 = vsub.f32 %v2910, %v3178
    %v3603 = vsub.f32 %v2912, %v3180
    %v3604 = vsub.f32 %v2914, %v3182
    %v3605 = vsub.f32 %v2916, %v3184
    %v3606 = vadd.f32 %v3598, %v3468
    %v3607 = vadd.f32 %v3599, %v3470
    %v3608 = vadd.f32 %v3600, %v3472
    %v3609 = vadd.f32 %v3601, %v3474
    %v3610 = vadd.f32 %v3602, %v3478
    %v3611 = vadd.f32 %v3603, %v3480
    %v3612 = vadd.f32 %v3604, %v3482
    %v3613 = vadd.f32 %v3605, %v3484
    %v3614 = vmul.f32 %v3606, 0.25
    %v3615 = vmul.f32 %v3607, 0.25
    %v3616 = vmul.f32 %v3608, 0.25
    %v3617 = vmul.f32 %v3609, 0.25
    %v3618 = vmul.f32 %v3610, 0.25
    %v3619 = vmul.f32 %v3611, 0.25
    %v3620 = vmul.f32 %v3612, 0.25
    %v3621 = vmul.f32 %v3613, 0.25
    %v3622 = vadd.f32 %v2674, %v3614
    %v3623 = vadd.f32 %v2675, %v3615
    %v3624 = vadd.f32 %v2676, %v3616
    %v3625 = vadd.f32 %v2677, %v3617
    %v3626 = vadd.f32 %v2678, %v3618
    %v3627 = vadd.f32 %v2679, %v3619
    %v3628 = vadd.f32 %v2680, %v3620
    %v3629 = vadd.f32 %v2681, %v3621
    %v3630 = vpack.c.bf16 %v3592, %v3590
    %v3631 = vpack.c.bf16 %v3593, %v3591
    %v3632 = vpack.c.bf16 %v3596, %v3594
    %v3633 = vpack.c.bf16 %v3597, %v3595
    %v3635 = vsel %vm173, %v3631, 0
    %v3638 = vsel %vm173, %v3633, 0
    %3640 = vmatprep.subr.bf16.mxu0 0
    %3641 = vmatpush1.bf16.msra.mxu0 %v156
    %3642 = vmatprep.subr.bf16.mxu0 0
    %3643 = vmatpush1.bf16.msra.mxu0 %v155
    %3644 = vmatprep.subr.bf16.mxu0 0
    %3645 = vmatpush1.bf16.msra.mxu0 %v154
    %3646 = vmatprep.subr.bf16.mxu0 0
    %3647 = vmatpush1.bf16.msra.mxu0 %v153
    %3648 = vmatprep.subr.bf16.mxu0 0
    %3649 = vmatpush1.bf16.msra.mxu0 %v152
    %3650 = vmatprep.subr.bf16.mxu0 0
    %3651 = vmatpush1.bf16.msra.mxu0 %v151
    %3652 = vmatprep.subr.bf16.mxu0 0
    %3653 = vmatpush1.bf16.msra.mxu0 %v150
    %3654 = vmatprep.subr.bf16.mxu0 0
    %3655 = vmatpush1.bf16.msra.mxu0 %v149
    %3656 = vmatprep.subr.bf16.mxu0 0
    %3657 = vmatpush2.bf16.msra.mxu0 0
    %3658 = vmatprep.subr.bf16.mxu0 0
    %3659 = vmatpush2.bf16.msra.mxu0 0
    %3660 = vmatprep.subr.bf16.mxu0 0
    %3661 = vmatpush2.bf16.msra.mxu0 0
    %3662 = vmatprep.subr.bf16.mxu0 0
    %3663 = vmatpush2.bf16.msra.mxu0 0
    %3664 = vmatprep.subr.bf16.mxu0 0
    %3665 = vmatpush2.bf16.msra.mxu0 %v160
    %3666 = vmatprep.subr.bf16.mxu0 0
    %3667 = vmatpush2.bf16.msra.mxu0 %v159
    %3668 = vmatprep.subr.bf16.mxu0 0
    %3669 = vmatpush2.bf16.msra.mxu0 %v158
    %3670 = vmatprep.subr.bf16.mxu0 0
    %3671 = vmatpush2.bf16.msra.mxu0 %v157
    %3672 = vmatprep.mubr.bf16.mxu0 %v3635
    %3673 = vmatmul.mubr.bf16.gmra.mxu0 %v3630
    %v3674 = vpop.f32.mrf.mxu0
    %v3675 = vadd.f32 %v67, %v3674
    %v3676 = vpop.f32.mrf.mxu0
    %v3677 = vpop.f32.mrf.mxu0
    %v3678 = vadd.f32 %v67, %v3677
    %v3679 = vpop.f32.mrf.mxu0
    %3680 = vmatprep.mubr.bf16.mxu0 %v3638
    %3681 = vmatmul.mubr.bf16.gmra.mxu0 %v3632
    %v3682 = vpop.f32.mrf.mxu0
    %v3683 = vadd.f32 %v67, %v3682
    %v3684 = vpop.f32.mrf.mxu0
    %v3685 = vpop.f32.mrf.mxu0
    %v3686 = vadd.f32 %v67, %v3685
    %v3687 = vpop.f32.mrf.mxu0
    %3688 = vdwg.mxu0
    %v3689 = vmax.f32 %v3675, 0.0
    %v3690 = vmax.f32 %v3678, 0.0
    %v3691 = vmax.f32 %v3683, 0.0
    %v3692 = vmax.f32 %v3686, 0.0
    %v3693 = vpack.c.bf16 %v3690, %v3689
    %v3694 = vpack.c.bf16 %v3692, %v3691
    %3695 = vmatprep.subr.bf16.mxu0 %v298
    %3696 = vmatpush1.bf16.msra.mxu0 %v297
    %3697 = vmatprep.subr.bf16.mxu0 %v296
    %3698 = vmatpush1.bf16.msra.mxu0 %v295
    %3699 = vmatprep.subr.bf16.mxu0 %v294
    %3700 = vmatpush1.bf16.msra.mxu0 %v293
    %3701 = vmatprep.subr.bf16.mxu0 %v292
    %3702 = vmatpush1.bf16.msra.mxu0 %v291
    %3703 = vmatprep.subr.bf16.mxu0 %v290
    %3704 = vmatpush1.bf16.msra.mxu0 %v289
    %3705 = vmatprep.subr.bf16.mxu0 %v288
    %3706 = vmatpush1.bf16.msra.mxu0 %v287
    %3707 = vmatprep.subr.bf16.mxu0 %v286
    %3708 = vmatpush1.bf16.msra.mxu0 %v285
    %3709 = vmatprep.subr.bf16.mxu0 %v284
    %3710 = vmatpush1.bf16.msra.mxu0 %v283
    %3711 = vmatprep.subr.bf16.mxu0 0
    %3712 = vmatpush2.bf16.msra.mxu0 0
    %3713 = vmatprep.subr.bf16.mxu0 0
    %3714 = vmatpush2.bf16.msra.mxu0 0
    %3715 = vmatprep.subr.bf16.mxu0 0
    %3716 = vmatpush2.bf16.msra.mxu0 0
    %3717 = vmatprep.subr.bf16.mxu0 0
    %3718 = vmatpush2.bf16.msra.mxu0 0
    %3719 = vmatprep.subr.bf16.mxu0 0
    %3720 = vmatpush2.bf16.msra.mxu0 0
    %3721 = vmatprep.subr.bf16.mxu0 0
    %3722 = vmatpush2.bf16.msra.mxu0 0
    %3723 = vmatprep.subr.bf16.mxu0 0
    %3724 = vmatpush2.bf16.msra.mxu0 0
    %3725 = vmatprep.subr.bf16.mxu0 0
    %3726 = vmatpush2.bf16.msra.mxu0 0
    %3727 = vmatprep.mubr.bf16.mxu0 0
    %3728 = vmatmul.mubr.bf16.gmra.mxu0 %v3693
    %v3729 = vpop.f32.mrf.mxu0
    %v3730 = vadd.f32 %v74, %v3729
    %v3731 = vpop.f32.mrf.mxu0
    %v3732 = vadd.f32 %v78, %v3731
    %v3733 = vpop.f32.mrf.mxu0
    %v3734 = vadd.f32 %v74, %v3733
    %v3735 = vpop.f32.mrf.mxu0
    %v3736 = vadd.f32 %v78, %v3735
    %3737 = vmatprep.mubr.bf16.mxu0 0
    %3738 = vmatmul.mubr.bf16.gmra.mxu0 %v3694
    %v3739 = vpop.f32.mrf.mxu0
    %v3740 = vadd.f32 %v74, %v3739
    %v3741 = vpop.f32.mrf.mxu0
    %v3742 = vadd.f32 %v78, %v3741
    %v3743 = vpop.f32.mrf.mxu0
    %v3744 = vadd.f32 %v74, %v3743
    %v3745 = vpop.f32.mrf.mxu0
    %v3746 = vadd.f32 %v78, %v3745
    %3747 = vdwg.mxu0
    %v3748 = vpack.c.bf16 %v3624, %v3622
    %v3749 = vpack.c.bf16 %v3625, %v3623
    %v3750 = vpack.c.bf16 %v3628, %v3626
    %v3751 = vpack.c.bf16 %v3629, %v3627
    %v3753 = vsel %vm173, %v3749, 0
    %v3756 = vsel %vm173, %v3751, 0
    %3758 = vmatprep.subr.bf16.mxu0 0
    %3759 = vmatpush1.bf16.msra.mxu0 %v156
    %3760 = vmatprep.subr.bf16.mxu0 0
    %3761 = vmatpush1.bf16.msra.mxu0 %v155
    %3762 = vmatprep.subr.bf16.mxu0 0
    %3763 = vmatpush1.bf16.msra.mxu0 %v154
    %3764 = vmatprep.subr.bf16.mxu0 0
    %3765 = vmatpush1.bf16.msra.mxu0 %v153
    %3766 = vmatprep.subr.bf16.mxu0 0
    %3767 = vmatpush1.bf16.msra.mxu0 %v152
    %3768 = vmatprep.subr.bf16.mxu0 0
    %3769 = vmatpush1.bf16.msra.mxu0 %v151
    %3770 = vmatprep.subr.bf16.mxu0 0
    %3771 = vmatpush1.bf16.msra.mxu0 %v150
    %3772 = vmatprep.subr.bf16.mxu0 0
    %3773 = vmatpush1.bf16.msra.mxu0 %v149
    %3774 = vmatprep.subr.bf16.mxu0 0
    %3775 = vmatpush2.bf16.msra.mxu0 0
    %3776 = vmatprep.subr.bf16.mxu0 0
    %3777 = vmatpush2.bf16.msra.mxu0 0
    %3778 = vmatprep.subr.bf16.mxu0 0
    %3779 = vmatpush2.bf16.msra.mxu0 0
    %3780 = vmatprep.subr.bf16.mxu0 0
    %3781 = vmatpush2.bf16.msra.mxu0 0
    %3782 = vmatprep.subr.bf16.mxu0 0
    %3783 = vmatpush2.bf16.msra.mxu0 %v160
    %3784 = vmatprep.subr.bf16.mxu0 0
    %3785 = vmatpush2.bf16.msra.mxu0 %v159
    %3786 = vmatprep.subr.bf16.mxu0 0
    %3787 = vmatpush2.bf16.msra.mxu0 %v158
    %3788 = vmatprep.subr.bf16.mxu0 0
    %3789 = vmatpush2.bf16.msra.mxu0 %v157
    %3790 = vmatprep.mubr.bf16.mxu0 %v3753
    %3791 = vmatmul.mubr.bf16.gmra.mxu0 %v3748
    %v3792 = vpop.f32.mrf.mxu0
    %v3793 = vadd.f32 %v67, %v3792
    %v3794 = vpop.f32.mrf.mxu0
    %v3795 = vpop.f32.mrf.mxu0
    %v3796 = vadd.f32 %v67, %v3795
    %v3797 = vpop.f32.mrf.mxu0
    %3798 = vmatprep.mubr.bf16.mxu0 %v3756
    %3799 = vmatmul.mubr.bf16.gmra.mxu0 %v3750
    %v3800 = vpop.f32.mrf.mxu0
    %v3801 = vadd.f32 %v67, %v3800
    %v3802 = vpop.f32.mrf.mxu0
    %v3803 = vpop.f32.mrf.mxu0
    %v3804 = vadd.f32 %v67, %v3803
    %v3805 = vpop.f32.mrf.mxu0
    %3806 = vdwg.mxu0
    %v3807 = vmax.f32 %v3793, 0.0
    %v3808 = vmax.f32 %v3796, 0.0
    %v3809 = vmax.f32 %v3801, 0.0
    %v3810 = vmax.f32 %v3804, 0.0
    %v3811 = vpack.c.bf16 %v3808, %v3807
    %v3812 = vpack.c.bf16 %v3810, %v3809
    %3813 = vmatprep.subr.bf16.mxu0 %v298
    %3814 = vmatpush1.bf16.msra.mxu0 %v297
    %3815 = vmatprep.subr.bf16.mxu0 %v296
    %3816 = vmatpush1.bf16.msra.mxu0 %v295
    %3817 = vmatprep.subr.bf16.mxu0 %v294
    %3818 = vmatpush1.bf16.msra.mxu0 %v293
    %3819 = vmatprep.subr.bf16.mxu0 %v292
    %3820 = vmatpush1.bf16.msra.mxu0 %v291
    %3821 = vmatprep.subr.bf16.mxu0 %v290
    %3822 = vmatpush1.bf16.msra.mxu0 %v289
    %3823 = vmatprep.subr.bf16.mxu0 %v288
    %3824 = vmatpush1.bf16.msra.mxu0 %v287
    %3825 = vmatprep.subr.bf16.mxu0 %v286
    %3826 = vmatpush1.bf16.msra.mxu0 %v285
    %3827 = vmatprep.subr.bf16.mxu0 %v284
    %3828 = vmatpush1.bf16.msra.mxu0 %v283
    %3829 = vmatprep.subr.bf16.mxu0 0
    %3830 = vmatpush2.bf16.msra.mxu0 0
    %3831 = vmatprep.subr.bf16.mxu0 0
    %3832 = vmatpush2.bf16.msra.mxu0 0
    %3833 = vmatprep.subr.bf16.mxu0 0
    %3834 = vmatpush2.bf16.msra.mxu0 0
    %3835 = vmatprep.subr.bf16.mxu0 0
    %3836 = vmatpush2.bf16.msra.mxu0 0
    %3837 = vmatprep.subr.bf16.mxu0 0
    %3838 = vmatpush2.bf16.msra.mxu0 0
    %3839 = vmatprep.subr.bf16.mxu0 0
    %3840 = vmatpush2.bf16.msra.mxu0 0
    %3841 = vmatprep.subr.bf16.mxu0 0
    %3842 = vmatpush2.bf16.msra.mxu0 0
    %3843 = vmatprep.subr.bf16.mxu0 0
    %3844 = vmatpush2.bf16.msra.mxu0 0
    %3845 = vmatprep.mubr.bf16.mxu0 0
    %3846 = vmatmul.mubr.bf16.gmra.mxu0 %v3811
    %v3847 = vpop.f32.mrf.mxu0
    %v3848 = vadd.f32 %v74, %v3847
    %v3849 = vpop.f32.mrf.mxu0
    %v3850 = vadd.f32 %v78, %v3849
    %v3851 = vpop.f32.mrf.mxu0
    %v3852 = vadd.f32 %v74, %v3851
    %v3853 = vpop.f32.mrf.mxu0
    %v3854 = vadd.f32 %v78, %v3853
    %3855 = vmatprep.mubr.bf16.mxu0 0
    %3856 = vmatmul.mubr.bf16.gmra.mxu0 %v3812
    %v3857 = vpop.f32.mrf.mxu0
    %v3858 = vadd.f32 %v74, %v3857
    %v3859 = vpop.f32.mrf.mxu0
    %v3860 = vadd.f32 %v78, %v3859
    %v3861 = vpop.f32.mrf.mxu0
    %v3862 = vadd.f32 %v74, %v3861
    %v3863 = vpop.f32.mrf.mxu0
    %v3864 = vadd.f32 %v78, %v3863
    %3865 = vdwg.mxu0
    %v3866 = vmul.f32 %v3730, 0.03125
    %v3867 = vmul.f32 %v3732, 0.03125
    %v3868 = vmul.f32 %v3734, 0.03125
    %v3869 = vmul.f32 %v3736, 0.03125
    %v3870 = vmul.f32 %v3740, 0.03125
    %v3871 = vmul.f32 %v3742, 0.03125
    %v3872 = vmul.f32 %v3744, 0.03125
    %v3873 = vmul.f32 %v3746, 0.03125
    %v3874 = vadd.f32 %v3518, %v3866
    %v3875 = vadd.f32 %v3519, %v3867
    %v3876 = vadd.f32 %v3520, %v3868
    %v3877 = vadd.f32 %v3521, %v3869
    %v3878 = vadd.f32 %v3522, %v3870
    %v3879 = vadd.f32 %v3523, %v3871
    %v3880 = vadd.f32 %v3524, %v3872
    %v3881 = vadd.f32 %v3525, %v3873
    %v3882 = vmul.f32 %v3848, 0.03125
    %v3883 = vmul.f32 %v3850, 0.03125
    %v3884 = vmul.f32 %v3852, 0.03125
    %v3885 = vmul.f32 %v3854, 0.03125
    %v3886 = vmul.f32 %v3858, 0.03125
    %v3887 = vmul.f32 %v3860, 0.03125
    %v3888 = vmul.f32 %v3862, 0.03125
    %v3889 = vmul.f32 %v3864, 0.03125
    %v3890 = vadd.f32 %v3558, %v3882
    %v3891 = vadd.f32 %v3559, %v3883
    %v3892 = vadd.f32 %v3560, %v3884
    %v3893 = vadd.f32 %v3561, %v3885
    %v3894 = vadd.f32 %v3562, %v3886
    %v3895 = vadd.f32 %v3563, %v3887
    %v3896 = vadd.f32 %v3564, %v3888
    %v3897 = vadd.f32 %v3565, %v3889
    %v3898 = vpack.c.bf16 %v3876, %v3874
    %v3899 = vpack.c.bf16 %v3877, %v3875
    %v3900 = vpack.c.bf16 %v3880, %v3878
    %v3901 = vpack.c.bf16 %v3881, %v3879
    %v3903 = vsel %vm173, %v3899, 0
    %v3906 = vsel %vm173, %v3901, 0
    %3908 = vmatprep.subr.bf16.mxu0 0
    %3909 = vmatpush1.bf16.msra.mxu0 %v156
    %3910 = vmatprep.subr.bf16.mxu0 0
    %3911 = vmatpush1.bf16.msra.mxu0 %v155
    %3912 = vmatprep.subr.bf16.mxu0 0
    %3913 = vmatpush1.bf16.msra.mxu0 %v154
    %3914 = vmatprep.subr.bf16.mxu0 0
    %3915 = vmatpush1.bf16.msra.mxu0 %v153
    %3916 = vmatprep.subr.bf16.mxu0 0
    %3917 = vmatpush1.bf16.msra.mxu0 %v152
    %3918 = vmatprep.subr.bf16.mxu0 0
    %3919 = vmatpush1.bf16.msra.mxu0 %v151
    %3920 = vmatprep.subr.bf16.mxu0 0
    %3921 = vmatpush1.bf16.msra.mxu0 %v150
    %3922 = vmatprep.subr.bf16.mxu0 0
    %3923 = vmatpush1.bf16.msra.mxu0 %v149
    %3924 = vmatprep.subr.bf16.mxu0 0
    %3925 = vmatpush2.bf16.msra.mxu0 0
    %3926 = vmatprep.subr.bf16.mxu0 0
    %3927 = vmatpush2.bf16.msra.mxu0 0
    %3928 = vmatprep.subr.bf16.mxu0 0
    %3929 = vmatpush2.bf16.msra.mxu0 0
    %3930 = vmatprep.subr.bf16.mxu0 0
    %3931 = vmatpush2.bf16.msra.mxu0 0
    %3932 = vmatprep.subr.bf16.mxu0 0
    %3933 = vmatpush2.bf16.msra.mxu0 %v160
    %3934 = vmatprep.subr.bf16.mxu0 0
    %3935 = vmatpush2.bf16.msra.mxu0 %v159
    %3936 = vmatprep.subr.bf16.mxu0 0
    %3937 = vmatpush2.bf16.msra.mxu0 %v158
    %3938 = vmatprep.subr.bf16.mxu0 0
    %3939 = vmatpush2.bf16.msra.mxu0 %v157
    %3940 = vmatprep.mubr.bf16.mxu0 %v3903
    %3941 = vmatmul.mubr.bf16.gmra.mxu0 %v3898
    %v3942 = vpop.f32.mrf.mxu0
    %v3943 = vadd.f32 %v67, %v3942
    %v3944 = vpop.f32.mrf.mxu0
    %v3945 = vpop.f32.mrf.mxu0
    %v3946 = vadd.f32 %v67, %v3945
    %v3947 = vpop.f32.mrf.mxu0
    %3948 = vmatprep.mubr.bf16.mxu0 %v3906
    %3949 = vmatmul.mubr.bf16.gmra.mxu0 %v3900
    %v3950 = vpop.f32.mrf.mxu0
    %v3951 = vadd.f32 %v67, %v3950
    %v3952 = vpop.f32.mrf.mxu0
    %v3953 = vpop.f32.mrf.mxu0
    %v3954 = vadd.f32 %v67, %v3953
    %v3955 = vpop.f32.mrf.mxu0
    %3956 = vdwg.mxu0
    %v3957 = vmax.f32 %v3943, 0.0
    %v3958 = vmax.f32 %v3946, 0.0
    %v3959 = vmax.f32 %v3951, 0.0
    %v3960 = vmax.f32 %v3954, 0.0
    %v3961 = vpack.c.bf16 %v3958, %v3957
    %v3962 = vpack.c.bf16 %v3960, %v3959
    %3963 = vmatprep.subr.bf16.mxu0 %v298
    %3964 = vmatpush1.bf16.msra.mxu0 %v297
    %3965 = vmatprep.subr.bf16.mxu0 %v296
    %3966 = vmatpush1.bf16.msra.mxu0 %v295
    %3967 = vmatprep.subr.bf16.mxu0 %v294
    %3968 = vmatpush1.bf16.msra.mxu0 %v293
    %3969 = vmatprep.subr.bf16.mxu0 %v292
    %3970 = vmatpush1.bf16.msra.mxu0 %v291
    %3971 = vmatprep.subr.bf16.mxu0 %v290
    %3972 = vmatpush1.bf16.msra.mxu0 %v289
    %3973 = vmatprep.subr.bf16.mxu0 %v288
    %3974 = vmatpush1.bf16.msra.mxu0 %v287
    %3975 = vmatprep.subr.bf16.mxu0 %v286
    %3976 = vmatpush1.bf16.msra.mxu0 %v285
    %3977 = vmatprep.subr.bf16.mxu0 %v284
    %3978 = vmatpush1.bf16.msra.mxu0 %v283
    %3979 = vmatprep.subr.bf16.mxu0 0
    %3980 = vmatpush2.bf16.msra.mxu0 0
    %3981 = vmatprep.subr.bf16.mxu0 0
    %3982 = vmatpush2.bf16.msra.mxu0 0
    %3983 = vmatprep.subr.bf16.mxu0 0
    %3984 = vmatpush2.bf16.msra.mxu0 0
    %3985 = vmatprep.subr.bf16.mxu0 0
    %3986 = vmatpush2.bf16.msra.mxu0 0
    %3987 = vmatprep.subr.bf16.mxu0 0
    %3988 = vmatpush2.bf16.msra.mxu0 0
    %3989 = vmatprep.subr.bf16.mxu0 0
    %3990 = vmatpush2.bf16.msra.mxu0 0
    %3991 = vmatprep.subr.bf16.mxu0 0
    %3992 = vmatpush2.bf16.msra.mxu0 0
    %3993 = vmatprep.subr.bf16.mxu0 0
    %3994 = vmatpush2.bf16.msra.mxu0 0
    %3995 = vmatprep.mubr.bf16.mxu0 0
    %3996 = vmatmul.mubr.bf16.gmra.mxu0 %v3961
    %v3997 = vpop.f32.mrf.mxu0
    %v3998 = vadd.f32 %v74, %v3997
    %v3999 = vpop.f32.mrf.mxu0
    %v4000 = vadd.f32 %v78, %v3999
    %v4001 = vpop.f32.mrf.mxu0
    %v4002 = vadd.f32 %v74, %v4001
    %v4003 = vpop.f32.mrf.mxu0
    %v4004 = vadd.f32 %v78, %v4003
    %4005 = vmatprep.mubr.bf16.mxu0 0
    %4006 = vmatmul.mubr.bf16.gmra.mxu0 %v3962
    %v4007 = vpop.f32.mrf.mxu0
    %v4008 = vadd.f32 %v74, %v4007
    %v4009 = vpop.f32.mrf.mxu0
    %v4010 = vadd.f32 %v78, %v4009
    %v4011 = vpop.f32.mrf.mxu0
    %v4012 = vadd.f32 %v74, %v4011
    %v4013 = vpop.f32.mrf.mxu0
    %v4014 = vadd.f32 %v78, %v4013
    %4015 = vdwg.mxu0
    %v4016 = vpack.c.bf16 %v3892, %v3890
    %v4017 = vpack.c.bf16 %v3893, %v3891
    %v4018 = vpack.c.bf16 %v3896, %v3894
    %v4019 = vpack.c.bf16 %v3897, %v3895
    %v4021 = vsel %vm173, %v4017, 0
    %v4024 = vsel %vm173, %v4019, 0
    %4026 = vmatprep.subr.bf16.mxu0 0
    %4027 = vmatpush1.bf16.msra.mxu0 %v156
    %4028 = vmatprep.subr.bf16.mxu0 0
    %4029 = vmatpush1.bf16.msra.mxu0 %v155
    %4030 = vmatprep.subr.bf16.mxu0 0
    %4031 = vmatpush1.bf16.msra.mxu0 %v154
    %4032 = vmatprep.subr.bf16.mxu0 0
    %4033 = vmatpush1.bf16.msra.mxu0 %v153
    %4034 = vmatprep.subr.bf16.mxu0 0
    %4035 = vmatpush1.bf16.msra.mxu0 %v152
    %4036 = vmatprep.subr.bf16.mxu0 0
    %4037 = vmatpush1.bf16.msra.mxu0 %v151
    %4038 = vmatprep.subr.bf16.mxu0 0
    %4039 = vmatpush1.bf16.msra.mxu0 %v150
    %4040 = vmatprep.subr.bf16.mxu0 0
    %4041 = vmatpush1.bf16.msra.mxu0 %v149
    %4042 = vmatprep.subr.bf16.mxu0 0
    %4043 = vmatpush2.bf16.msra.mxu0 0
    %4044 = vmatprep.subr.bf16.mxu0 0
    %4045 = vmatpush2.bf16.msra.mxu0 0
    %4046 = vmatprep.subr.bf16.mxu0 0
    %4047 = vmatpush2.bf16.msra.mxu0 0
    %4048 = vmatprep.subr.bf16.mxu0 0
    %4049 = vmatpush2.bf16.msra.mxu0 0
    %4050 = vmatprep.subr.bf16.mxu0 0
    %4051 = vmatpush2.bf16.msra.mxu0 %v160
    %4052 = vmatprep.subr.bf16.mxu0 0
    %4053 = vmatpush2.bf16.msra.mxu0 %v159
    %4054 = vmatprep.subr.bf16.mxu0 0
    %4055 = vmatpush2.bf16.msra.mxu0 %v158
    %4056 = vmatprep.subr.bf16.mxu0 0
    %4057 = vmatpush2.bf16.msra.mxu0 %v157
    %4058 = vmatprep.mubr.bf16.mxu0 %v4021
    %4059 = vmatmul.mubr.bf16.gmra.mxu0 %v4016
    %v4060 = vpop.f32.mrf.mxu0
    %v4061 = vadd.f32 %v67, %v4060
    %v4062 = vpop.f32.mrf.mxu0
    %v4063 = vpop.f32.mrf.mxu0
    %v4064 = vadd.f32 %v67, %v4063
    %v4065 = vpop.f32.mrf.mxu0
    %4066 = vmatprep.mubr.bf16.mxu0 %v4024
    %4067 = vmatmul.mubr.bf16.gmra.mxu0 %v4018
    %v4068 = vpop.f32.mrf.mxu0
    %v4069 = vadd.f32 %v67, %v4068
    %v4070 = vpop.f32.mrf.mxu0
    %v4071 = vpop.f32.mrf.mxu0
    %v4072 = vadd.f32 %v67, %v4071
    %v4073 = vpop.f32.mrf.mxu0
    %4074 = vdwg.mxu0
    %v4075 = vmax.f32 %v4061, 0.0
    %v4076 = vmax.f32 %v4064, 0.0
    %v4077 = vmax.f32 %v4069, 0.0
    %v4078 = vmax.f32 %v4072, 0.0
    %v4079 = vpack.c.bf16 %v4076, %v4075
    %v4080 = vpack.c.bf16 %v4078, %v4077
    %4081 = vmatprep.subr.bf16.mxu0 %v298
    %4082 = vmatpush1.bf16.msra.mxu0 %v297
    %4083 = vmatprep.subr.bf16.mxu0 %v296
    %4084 = vmatpush1.bf16.msra.mxu0 %v295
    %4085 = vmatprep.subr.bf16.mxu0 %v294
    %4086 = vmatpush1.bf16.msra.mxu0 %v293
    %4087 = vmatprep.subr.bf16.mxu0 %v292
    %4088 = vmatpush1.bf16.msra.mxu0 %v291
    %4089 = vmatprep.subr.bf16.mxu0 %v290
    %4090 = vmatpush1.bf16.msra.mxu0 %v289
    %4091 = vmatprep.subr.bf16.mxu0 %v288
    %4092 = vmatpush1.bf16.msra.mxu0 %v287
    %4093 = vmatprep.subr.bf16.mxu0 %v286
    %4094 = vmatpush1.bf16.msra.mxu0 %v285
    %4095 = vmatprep.subr.bf16.mxu0 %v284
    %4096 = vmatpush1.bf16.msra.mxu0 %v283
    %4097 = vmatprep.subr.bf16.mxu0 0
    %4098 = vmatpush2.bf16.msra.mxu0 0
    %4099 = vmatprep.subr.bf16.mxu0 0
    %4100 = vmatpush2.bf16.msra.mxu0 0
    %4101 = vmatprep.subr.bf16.mxu0 0
    %4102 = vmatpush2.bf16.msra.mxu0 0
    %4103 = vmatprep.subr.bf16.mxu0 0
    %4104 = vmatpush2.bf16.msra.mxu0 0
    %4105 = vmatprep.subr.bf16.mxu0 0
    %4106 = vmatpush2.bf16.msra.mxu0 0
    %4107 = vmatprep.subr.bf16.mxu0 0
    %4108 = vmatpush2.bf16.msra.mxu0 0
    %4109 = vmatprep.subr.bf16.mxu0 0
    %4110 = vmatpush2.bf16.msra.mxu0 0
    %4111 = vmatprep.subr.bf16.mxu0 0
    %4112 = vmatpush2.bf16.msra.mxu0 0
    %4113 = vmatprep.mubr.bf16.mxu0 0
    %4114 = vmatmul.mubr.bf16.gmra.mxu0 %v4079
    %v4115 = vpop.f32.mrf.mxu0
    %v4116 = vadd.f32 %v74, %v4115
    %v4117 = vpop.f32.mrf.mxu0
    %v4118 = vadd.f32 %v78, %v4117
    %v4119 = vpop.f32.mrf.mxu0
    %v4120 = vadd.f32 %v74, %v4119
    %v4121 = vpop.f32.mrf.mxu0
    %v4122 = vadd.f32 %v78, %v4121
    %4123 = vmatprep.mubr.bf16.mxu0 0
    %4124 = vmatmul.mubr.bf16.gmra.mxu0 %v4080
    %v4125 = vpop.f32.mrf.mxu0
    %v4126 = vadd.f32 %v74, %v4125
    %v4127 = vpop.f32.mrf.mxu0
    %v4128 = vadd.f32 %v78, %v4127
    %v4129 = vpop.f32.mrf.mxu0
    %v4130 = vadd.f32 %v74, %v4129
    %v4131 = vpop.f32.mrf.mxu0
    %v4132 = vadd.f32 %v78, %v4131
    %4133 = vdwg.mxu0
    %v4134 = vmul.f32 %v3998, 0.083333336
    %v4135 = vmul.f32 %v4000, 0.083333336
    %v4136 = vmul.f32 %v4002, 0.083333336
    %v4137 = vmul.f32 %v4004, 0.083333336
    %v4138 = vmul.f32 %v4008, 0.083333336
    %v4139 = vmul.f32 %v4010, 0.083333336
    %v4140 = vmul.f32 %v4012, 0.083333336
    %v4141 = vmul.f32 %v4014, 0.083333336
    %v4142 = vadd.f32 %v3874, %v4134
    %v4143 = vadd.f32 %v3875, %v4135
    %v4144 = vadd.f32 %v3876, %v4136
    %v4145 = vadd.f32 %v3877, %v4137
    %v4146 = vadd.f32 %v3878, %v4138
    %v4147 = vadd.f32 %v3879, %v4139
    %v4148 = vadd.f32 %v3880, %v4140
    %v4149 = vadd.f32 %v3881, %v4141
    %v4150 = vpack.c.bf16 %v4144, %v4142
    %v4151 = vpack.c.bf16 %v4145, %v4143
    %v4152 = vpack.c.bf16 %v4148, %v4146
    %v4153 = vpack.c.bf16 %v4149, %v4147
    %v4155 = vsel %vm173, %v4151, 0
    %v4158 = vsel %vm173, %v4153, 0
    %4160 = vmatprep.subr.bf16.mxu0 0
    %4161 = vmatpush1.bf16.msra.mxu0 %v156
    %4162 = vmatprep.subr.bf16.mxu0 0
    %4163 = vmatpush1.bf16.msra.mxu0 %v155
    %4164 = vmatprep.subr.bf16.mxu0 0
    %4165 = vmatpush1.bf16.msra.mxu0 %v154
    %4166 = vmatprep.subr.bf16.mxu0 0
    %4167 = vmatpush1.bf16.msra.mxu0 %v153
    %4168 = vmatprep.subr.bf16.mxu0 0
    %4169 = vmatpush1.bf16.msra.mxu0 %v152
    %4170 = vmatprep.subr.bf16.mxu0 0
    %4171 = vmatpush1.bf16.msra.mxu0 %v151
    %4172 = vmatprep.subr.bf16.mxu0 0
    %4173 = vmatpush1.bf16.msra.mxu0 %v150
    %4174 = vmatprep.subr.bf16.mxu0 0
    %4175 = vmatpush1.bf16.msra.mxu0 %v149
    %4176 = vmatprep.subr.bf16.mxu0 0
    %4177 = vmatpush2.bf16.msra.mxu0 0
    %4178 = vmatprep.subr.bf16.mxu0 0
    %4179 = vmatpush2.bf16.msra.mxu0 0
    %4180 = vmatprep.subr.bf16.mxu0 0
    %4181 = vmatpush2.bf16.msra.mxu0 0
    %4182 = vmatprep.subr.bf16.mxu0 0
    %4183 = vmatpush2.bf16.msra.mxu0 0
    %4184 = vmatprep.subr.bf16.mxu0 0
    %4185 = vmatpush2.bf16.msra.mxu0 %v160
    %4186 = vmatprep.subr.bf16.mxu0 0
    %4187 = vmatpush2.bf16.msra.mxu0 %v159
    %4188 = vmatprep.subr.bf16.mxu0 0
    %4189 = vmatpush2.bf16.msra.mxu0 %v158
    %4190 = vmatprep.subr.bf16.mxu0 0
    %4191 = vmatpush2.bf16.msra.mxu0 %v157
    %4192 = vmatprep.mubr.bf16.mxu0 %v4155
    %4193 = vmatmul.mubr.bf16.gmra.mxu0 %v4150
    %v4194 = vpop.f32.mrf.mxu0
    %v4195 = vadd.f32 %v67, %v4194
    %v4196 = vpop.f32.mrf.mxu0
    %v4197 = vpop.f32.mrf.mxu0
    %v4198 = vadd.f32 %v67, %v4197
    %v4199 = vpop.f32.mrf.mxu0
    %4200 = vmatprep.mubr.bf16.mxu0 %v4158
    %4201 = vmatmul.mubr.bf16.gmra.mxu0 %v4152
    %v4202 = vpop.f32.mrf.mxu0
    %v4203 = vadd.f32 %v67, %v4202
    %v4204 = vpop.f32.mrf.mxu0
    %v4205 = vpop.f32.mrf.mxu0
    %v4206 = vadd.f32 %v67, %v4205
    %v4207 = vpop.f32.mrf.mxu0
    %4208 = vdwg.mxu0
    %v4209 = vmax.f32 %v4195, 0.0
    %v4210 = vmax.f32 %v4198, 0.0
    %v4211 = vmax.f32 %v4203, 0.0
    %v4212 = vmax.f32 %v4206, 0.0
    %v4213 = vpack.c.bf16 %v4210, %v4209
    %v4214 = vpack.c.bf16 %v4212, %v4211
    %4215 = vmatprep.subr.bf16.mxu0 %v298
    %4216 = vmatpush1.bf16.msra.mxu0 %v297
    %4217 = vmatprep.subr.bf16.mxu0 %v296
    %4218 = vmatpush1.bf16.msra.mxu0 %v295
    %4219 = vmatprep.subr.bf16.mxu0 %v294
    %4220 = vmatpush1.bf16.msra.mxu0 %v293
    %4221 = vmatprep.subr.bf16.mxu0 %v292
    %4222 = vmatpush1.bf16.msra.mxu0 %v291
    %4223 = vmatprep.subr.bf16.mxu0 %v290
    %4224 = vmatpush1.bf16.msra.mxu0 %v289
    %4225 = vmatprep.subr.bf16.mxu0 %v288
    %4226 = vmatpush1.bf16.msra.mxu0 %v287
    %4227 = vmatprep.subr.bf16.mxu0 %v286
    %4228 = vmatpush1.bf16.msra.mxu0 %v285
    %4229 = vmatprep.subr.bf16.mxu0 %v284
    %4230 = vmatpush1.bf16.msra.mxu0 %v283
    %4231 = vmatprep.subr.bf16.mxu0 0
    %4232 = vmatpush2.bf16.msra.mxu0 0
    %4233 = vmatprep.subr.bf16.mxu0 0
    %4234 = vmatpush2.bf16.msra.mxu0 0
    %4235 = vmatprep.subr.bf16.mxu0 0
    %4236 = vmatpush2.bf16.msra.mxu0 0
    %4237 = vmatprep.subr.bf16.mxu0 0
    %4238 = vmatpush2.bf16.msra.mxu0 0
    %4239 = vmatprep.subr.bf16.mxu0 0
    %4240 = vmatpush2.bf16.msra.mxu0 0
    %4241 = vmatprep.subr.bf16.mxu0 0
    %4242 = vmatpush2.bf16.msra.mxu0 0
    %4243 = vmatprep.subr.bf16.mxu0 0
    %4244 = vmatpush2.bf16.msra.mxu0 0
    %4245 = vmatprep.subr.bf16.mxu0 0
    %4246 = vmatpush2.bf16.msra.mxu0 0
    %4247 = vmatprep.mubr.bf16.mxu0 0
    %4248 = vmatmul.mubr.bf16.gmra.mxu0 %v4213
    %v4249 = vpop.f32.mrf.mxu0
    %v4250 = vadd.f32 %v74, %v4249
    %v4251 = vpop.f32.mrf.mxu0
    %v4252 = vadd.f32 %v78, %v4251
    %v4253 = vpop.f32.mrf.mxu0
    %v4254 = vadd.f32 %v74, %v4253
    %v4255 = vpop.f32.mrf.mxu0
    %v4256 = vadd.f32 %v78, %v4255
    %4257 = vmatprep.mubr.bf16.mxu0 0
    %4258 = vmatmul.mubr.bf16.gmra.mxu0 %v4214
    %v4259 = vpop.f32.mrf.mxu0
    %v4260 = vadd.f32 %v74, %v4259
    %v4261 = vpop.f32.mrf.mxu0
    %v4262 = vadd.f32 %v78, %v4261
    %v4263 = vpop.f32.mrf.mxu0
    %v4264 = vadd.f32 %v74, %v4263
    %v4265 = vpop.f32.mrf.mxu0
    %v4266 = vadd.f32 %v78, %v4265
    %4267 = vdwg.mxu0
    %v4268 = vmul.f32 %v4116, 0.083333336
    %v4269 = vmul.f32 %v4118, 0.083333336
    %v4270 = vmul.f32 %v4120, 0.083333336
    %v4271 = vmul.f32 %v4122, 0.083333336
    %v4272 = vmul.f32 %v4126, 0.083333336
    %v4273 = vmul.f32 %v4128, 0.083333336
    %v4274 = vmul.f32 %v4130, 0.083333336
    %v4275 = vmul.f32 %v4132, 0.083333336
    %v4276 = vadd.f32 %v3890, %v4268
    %v4277 = vadd.f32 %v3891, %v4269
    %v4278 = vadd.f32 %v3892, %v4270
    %v4279 = vadd.f32 %v3893, %v4271
    %v4280 = vadd.f32 %v3894, %v4272
    %v4281 = vadd.f32 %v3895, %v4273
    %v4282 = vadd.f32 %v3896, %v4274
    %v4283 = vadd.f32 %v3897, %v4275
    %v4284 = vpack.c.bf16 %v4278, %v4276
    %v4285 = vpack.c.bf16 %v4279, %v4277
    %v4286 = vpack.c.bf16 %v4282, %v4280
    %v4287 = vpack.c.bf16 %v4283, %v4281
    %v4289 = vsel %vm173, %v4285, 0
    %v4292 = vsel %vm173, %v4287, 0
    %4294 = vmatprep.subr.bf16.mxu0 0
    %4295 = vmatpush1.bf16.msra.mxu0 %v156
    %4296 = vmatprep.subr.bf16.mxu0 0
    %4297 = vmatpush1.bf16.msra.mxu0 %v155
    %4298 = vmatprep.subr.bf16.mxu0 0
    %4299 = vmatpush1.bf16.msra.mxu0 %v154
    %4300 = vmatprep.subr.bf16.mxu0 0
    %4301 = vmatpush1.bf16.msra.mxu0 %v153
    %4302 = vmatprep.subr.bf16.mxu0 0
    %4303 = vmatpush1.bf16.msra.mxu0 %v152
    %4304 = vmatprep.subr.bf16.mxu0 0
    %4305 = vmatpush1.bf16.msra.mxu0 %v151
    %4306 = vmatprep.subr.bf16.mxu0 0
    %4307 = vmatpush1.bf16.msra.mxu0 %v150
    %4308 = vmatprep.subr.bf16.mxu0 0
    %4309 = vmatpush1.bf16.msra.mxu0 %v149
    %4310 = vmatprep.subr.bf16.mxu0 0
    %4311 = vmatpush2.bf16.msra.mxu0 0
    %4312 = vmatprep.subr.bf16.mxu0 0
    %4313 = vmatpush2.bf16.msra.mxu0 0
    %4314 = vmatprep.subr.bf16.mxu0 0
    %4315 = vmatpush2.bf16.msra.mxu0 0
    %4316 = vmatprep.subr.bf16.mxu0 0
    %4317 = vmatpush2.bf16.msra.mxu0 0
    %4318 = vmatprep.subr.bf16.mxu0 0
    %4319 = vmatpush2.bf16.msra.mxu0 %v160
    %4320 = vmatprep.subr.bf16.mxu0 0
    %4321 = vmatpush2.bf16.msra.mxu0 %v159
    %4322 = vmatprep.subr.bf16.mxu0 0
    %4323 = vmatpush2.bf16.msra.mxu0 %v158
    %4324 = vmatprep.subr.bf16.mxu0 0
    %4325 = vmatpush2.bf16.msra.mxu0 %v157
    %4326 = vmatprep.mubr.bf16.mxu0 %v4289
    %4327 = vmatmul.mubr.bf16.gmra.mxu0 %v4284
    %v4328 = vpop.f32.mrf.mxu0
    %v4329 = vadd.f32 %v67, %v4328
    %v4330 = vpop.f32.mrf.mxu0
    %v4331 = vpop.f32.mrf.mxu0
    %v4332 = vadd.f32 %v67, %v4331
    %v4333 = vpop.f32.mrf.mxu0
    %4334 = vmatprep.mubr.bf16.mxu0 %v4292
    %4335 = vmatmul.mubr.bf16.gmra.mxu0 %v4286
    %v4336 = vpop.f32.mrf.mxu0
    %v4337 = vadd.f32 %v67, %v4336
    %v4338 = vpop.f32.mrf.mxu0
    %v4339 = vpop.f32.mrf.mxu0
    %v4340 = vadd.f32 %v67, %v4339
    %v4341 = vpop.f32.mrf.mxu0
    %4342 = vdwg.mxu0
    %v4343 = vmax.f32 %v4329, 0.0
    %v4344 = vmax.f32 %v4332, 0.0
    %v4345 = vmax.f32 %v4337, 0.0
    %v4346 = vmax.f32 %v4340, 0.0
    %v4347 = vpack.c.bf16 %v4344, %v4343
    %v4348 = vpack.c.bf16 %v4346, %v4345
    %4349 = vmatprep.subr.bf16.mxu0 %v298
    %4350 = vmatpush1.bf16.msra.mxu0 %v297
    %4351 = vmatprep.subr.bf16.mxu0 %v296
    %4352 = vmatpush1.bf16.msra.mxu0 %v295
    %4353 = vmatprep.subr.bf16.mxu0 %v294
    %4354 = vmatpush1.bf16.msra.mxu0 %v293
    %4355 = vmatprep.subr.bf16.mxu0 %v292
    %4356 = vmatpush1.bf16.msra.mxu0 %v291
    %4357 = vmatprep.subr.bf16.mxu0 %v290
    %4358 = vmatpush1.bf16.msra.mxu0 %v289
    %4359 = vmatprep.subr.bf16.mxu0 %v288
    %4360 = vmatpush1.bf16.msra.mxu0 %v287
    %4361 = vmatprep.subr.bf16.mxu0 %v286
    %4362 = vmatpush1.bf16.msra.mxu0 %v285
    %4363 = vmatprep.subr.bf16.mxu0 %v284
    %4364 = vmatpush1.bf16.msra.mxu0 %v283
    %4365 = vmatprep.subr.bf16.mxu0 0
    %4366 = vmatpush2.bf16.msra.mxu0 0
    %4367 = vmatprep.subr.bf16.mxu0 0
    %4368 = vmatpush2.bf16.msra.mxu0 0
    %4369 = vmatprep.subr.bf16.mxu0 0
    %4370 = vmatpush2.bf16.msra.mxu0 0
    %4371 = vmatprep.subr.bf16.mxu0 0
    %4372 = vmatpush2.bf16.msra.mxu0 0
    %4373 = vmatprep.subr.bf16.mxu0 0
    %4374 = vmatpush2.bf16.msra.mxu0 0
    %4375 = vmatprep.subr.bf16.mxu0 0
    %4376 = vmatpush2.bf16.msra.mxu0 0
    %4377 = vmatprep.subr.bf16.mxu0 0
    %4378 = vmatpush2.bf16.msra.mxu0 0
    %4379 = vmatprep.subr.bf16.mxu0 0
    %4380 = vmatpush2.bf16.msra.mxu0 0
    %4381 = vmatprep.mubr.bf16.mxu0 0
    %4382 = vmatmul.mubr.bf16.gmra.mxu0 %v4347
    %v4383 = vpop.f32.mrf.mxu0
    %v4384 = vadd.f32 %v74, %v4383
    %v4385 = vpop.f32.mrf.mxu0
    %v4386 = vadd.f32 %v78, %v4385
    %v4387 = vpop.f32.mrf.mxu0
    %v4388 = vadd.f32 %v74, %v4387
    %v4389 = vpop.f32.mrf.mxu0
    %v4390 = vadd.f32 %v78, %v4389
    %4391 = vmatprep.mubr.bf16.mxu0 0
    %4392 = vmatmul.mubr.bf16.gmra.mxu0 %v4348
    %v4393 = vpop.f32.mrf.mxu0
    %v4394 = vadd.f32 %v74, %v4393
    %v4395 = vpop.f32.mrf.mxu0
    %v4396 = vadd.f32 %v78, %v4395
    %v4397 = vpop.f32.mrf.mxu0
    %v4398 = vadd.f32 %v74, %v4397
    %v4399 = vpop.f32.mrf.mxu0
    %v4400 = vadd.f32 %v78, %v4399
    %4401 = vdwg.mxu0
    %v4402 = vmul.f32 %v3998, 0.33333334
    %v4403 = vmul.f32 %v4000, 0.33333334
    %v4404 = vmul.f32 %v4002, 0.33333334
    %v4405 = vmul.f32 %v4004, 0.33333334
    %v4406 = vmul.f32 %v4008, 0.33333334
    %v4407 = vmul.f32 %v4010, 0.33333334
    %v4408 = vmul.f32 %v4012, 0.33333334
    %v4409 = vmul.f32 %v4014, 0.33333334
    %v4410 = vsub.f32 %v4250, %v4402
    %v4411 = vsub.f32 %v4252, %v4403
    %v4412 = vsub.f32 %v4254, %v4404
    %v4413 = vsub.f32 %v4256, %v4405
    %v4414 = vsub.f32 %v4260, %v4406
    %v4415 = vsub.f32 %v4262, %v4407
    %v4416 = vsub.f32 %v4264, %v4408
    %v4417 = vsub.f32 %v4266, %v4409
    %v4418 = vmul.f32 %v4410, 0.25
    %v4419 = vmul.f32 %v4411, 0.25
    %v4420 = vmul.f32 %v4412, 0.25
    %v4421 = vmul.f32 %v4413, 0.25
    %v4422 = vmul.f32 %v4414, 0.25
    %v4423 = vmul.f32 %v4415, 0.25
    %v4424 = vmul.f32 %v4416, 0.25
    %v4425 = vmul.f32 %v4417, 0.25
    %v4426 = vadd.f32 %v3874, %v4418
    %v4427 = vadd.f32 %v3875, %v4419
    %v4428 = vadd.f32 %v3876, %v4420
    %v4429 = vadd.f32 %v3877, %v4421
    %v4430 = vadd.f32 %v3878, %v4422
    %v4431 = vadd.f32 %v3879, %v4423
    %v4432 = vadd.f32 %v3880, %v4424
    %v4433 = vadd.f32 %v3881, %v4425
    %v4434 = vpack.c.bf16 %v4428, %v4426
    %v4435 = vpack.c.bf16 %v4429, %v4427
    %v4436 = vpack.c.bf16 %v4432, %v4430
    %v4437 = vpack.c.bf16 %v4433, %v4431
    %v4439 = vsel %vm173, %v4435, 0
    %v4442 = vsel %vm173, %v4437, 0
    %4444 = vmatprep.subr.bf16.mxu0 0
    %4445 = vmatpush1.bf16.msra.mxu0 %v156
    %4446 = vmatprep.subr.bf16.mxu0 0
    %4447 = vmatpush1.bf16.msra.mxu0 %v155
    %4448 = vmatprep.subr.bf16.mxu0 0
    %4449 = vmatpush1.bf16.msra.mxu0 %v154
    %4450 = vmatprep.subr.bf16.mxu0 0
    %4451 = vmatpush1.bf16.msra.mxu0 %v153
    %4452 = vmatprep.subr.bf16.mxu0 0
    %4453 = vmatpush1.bf16.msra.mxu0 %v152
    %4454 = vmatprep.subr.bf16.mxu0 0
    %4455 = vmatpush1.bf16.msra.mxu0 %v151
    %4456 = vmatprep.subr.bf16.mxu0 0
    %4457 = vmatpush1.bf16.msra.mxu0 %v150
    %4458 = vmatprep.subr.bf16.mxu0 0
    %4459 = vmatpush1.bf16.msra.mxu0 %v149
    %4460 = vmatprep.subr.bf16.mxu0 0
    %4461 = vmatpush2.bf16.msra.mxu0 0
    %4462 = vmatprep.subr.bf16.mxu0 0
    %4463 = vmatpush2.bf16.msra.mxu0 0
    %4464 = vmatprep.subr.bf16.mxu0 0
    %4465 = vmatpush2.bf16.msra.mxu0 0
    %4466 = vmatprep.subr.bf16.mxu0 0
    %4467 = vmatpush2.bf16.msra.mxu0 0
    %4468 = vmatprep.subr.bf16.mxu0 0
    %4469 = vmatpush2.bf16.msra.mxu0 %v160
    %4470 = vmatprep.subr.bf16.mxu0 0
    %4471 = vmatpush2.bf16.msra.mxu0 %v159
    %4472 = vmatprep.subr.bf16.mxu0 0
    %4473 = vmatpush2.bf16.msra.mxu0 %v158
    %4474 = vmatprep.subr.bf16.mxu0 0
    %4475 = vmatpush2.bf16.msra.mxu0 %v157
    %4476 = vmatprep.mubr.bf16.mxu0 %v4439
    %4477 = vmatmul.mubr.bf16.gmra.mxu0 %v4434
    %v4478 = vpop.f32.mrf.mxu0
    %v4479 = vadd.f32 %v67, %v4478
    %v4480 = vpop.f32.mrf.mxu0
    %v4481 = vpop.f32.mrf.mxu0
    %v4482 = vadd.f32 %v67, %v4481
    %v4483 = vpop.f32.mrf.mxu0
    %4484 = vmatprep.mubr.bf16.mxu0 %v4442
    %4485 = vmatmul.mubr.bf16.gmra.mxu0 %v4436
    %v4486 = vpop.f32.mrf.mxu0
    %v4487 = vadd.f32 %v67, %v4486
    %v4488 = vpop.f32.mrf.mxu0
    %v4489 = vpop.f32.mrf.mxu0
    %v4490 = vadd.f32 %v67, %v4489
    %v4491 = vpop.f32.mrf.mxu0
    %4492 = vdwg.mxu0
    %v4493 = vmax.f32 %v4479, 0.0
    %v4494 = vmax.f32 %v4482, 0.0
    %v4495 = vmax.f32 %v4487, 0.0
    %v4496 = vmax.f32 %v4490, 0.0
    %v4497 = vpack.c.bf16 %v4494, %v4493
    %v4498 = vpack.c.bf16 %v4496, %v4495
    %4499 = vmatprep.subr.bf16.mxu0 %v298
    %4500 = vmatpush1.bf16.msra.mxu0 %v297
    %4501 = vmatprep.subr.bf16.mxu0 %v296
    %4502 = vmatpush1.bf16.msra.mxu0 %v295
    %4503 = vmatprep.subr.bf16.mxu0 %v294
    %4504 = vmatpush1.bf16.msra.mxu0 %v293
    %4505 = vmatprep.subr.bf16.mxu0 %v292
    %4506 = vmatpush1.bf16.msra.mxu0 %v291
    %4507 = vmatprep.subr.bf16.mxu0 %v290
    %4508 = vmatpush1.bf16.msra.mxu0 %v289
    %4509 = vmatprep.subr.bf16.mxu0 %v288
    %4510 = vmatpush1.bf16.msra.mxu0 %v287
    %4511 = vmatprep.subr.bf16.mxu0 %v286
    %4512 = vmatpush1.bf16.msra.mxu0 %v285
    %4513 = vmatprep.subr.bf16.mxu0 %v284
    %4514 = vmatpush1.bf16.msra.mxu0 %v283
    %4515 = vmatprep.subr.bf16.mxu0 0
    %4516 = vmatpush2.bf16.msra.mxu0 0
    %4517 = vmatprep.subr.bf16.mxu0 0
    %4518 = vmatpush2.bf16.msra.mxu0 0
    %4519 = vmatprep.subr.bf16.mxu0 0
    %4520 = vmatpush2.bf16.msra.mxu0 0
    %4521 = vmatprep.subr.bf16.mxu0 0
    %4522 = vmatpush2.bf16.msra.mxu0 0
    %4523 = vmatprep.subr.bf16.mxu0 0
    %4524 = vmatpush2.bf16.msra.mxu0 0
    %4525 = vmatprep.subr.bf16.mxu0 0
    %4526 = vmatpush2.bf16.msra.mxu0 0
    %4527 = vmatprep.subr.bf16.mxu0 0
    %4528 = vmatpush2.bf16.msra.mxu0 0
    %4529 = vmatprep.subr.bf16.mxu0 0
    %4530 = vmatpush2.bf16.msra.mxu0 0
    %4531 = vmatprep.mubr.bf16.mxu0 0
    %4532 = vmatmul.mubr.bf16.gmra.mxu0 %v4497
    %v4533 = vpop.f32.mrf.mxu0
    %v4534 = vadd.f32 %v74, %v4533
    %v4535 = vpop.f32.mrf.mxu0
    %v4536 = vadd.f32 %v78, %v4535
    %v4537 = vpop.f32.mrf.mxu0
    %v4538 = vadd.f32 %v74, %v4537
    %v4539 = vpop.f32.mrf.mxu0
    %v4540 = vadd.f32 %v78, %v4539
    %4541 = vmatprep.mubr.bf16.mxu0 0
    %4542 = vmatmul.mubr.bf16.gmra.mxu0 %v4498
    %v4543 = vpop.f32.mrf.mxu0
    %v4544 = vadd.f32 %v74, %v4543
    %v4545 = vpop.f32.mrf.mxu0
    %v4546 = vadd.f32 %v78, %v4545
    %v4547 = vpop.f32.mrf.mxu0
    %v4548 = vadd.f32 %v74, %v4547
    %v4549 = vpop.f32.mrf.mxu0
    %v4550 = vadd.f32 %v78, %v4549
    %4551 = vdwg.mxu0
    %v4552 = vmul.f32 %v4116, 0.33333334
    %v4553 = vmul.f32 %v4118, 0.33333334
    %v4554 = vmul.f32 %v4120, 0.33333334
    %v4555 = vmul.f32 %v4122, 0.33333334
    %v4556 = vmul.f32 %v4126, 0.33333334
    %v4557 = vmul.f32 %v4128, 0.33333334
    %v4558 = vmul.f32 %v4130, 0.33333334
    %v4559 = vmul.f32 %v4132, 0.33333334
    %v4560 = vsub.f32 %v4384, %v4552
    %v4561 = vsub.f32 %v4386, %v4553
    %v4562 = vsub.f32 %v4388, %v4554
    %v4563 = vsub.f32 %v4390, %v4555
    %v4564 = vsub.f32 %v4394, %v4556
    %v4565 = vsub.f32 %v4396, %v4557
    %v4566 = vsub.f32 %v4398, %v4558
    %v4567 = vsub.f32 %v4400, %v4559
    %v4568 = vmul.f32 %v4560, 0.25
    %v4569 = vmul.f32 %v4561, 0.25
    %v4570 = vmul.f32 %v4562, 0.25
    %v4571 = vmul.f32 %v4563, 0.25
    %v4572 = vmul.f32 %v4564, 0.25
    %v4573 = vmul.f32 %v4565, 0.25
    %v4574 = vmul.f32 %v4566, 0.25
    %v4575 = vmul.f32 %v4567, 0.25
    %v4576 = vadd.f32 %v3890, %v4568
    %v4577 = vadd.f32 %v3891, %v4569
    %v4578 = vadd.f32 %v3892, %v4570
    %v4579 = vadd.f32 %v3893, %v4571
    %v4580 = vadd.f32 %v3894, %v4572
    %v4581 = vadd.f32 %v3895, %v4573
    %v4582 = vadd.f32 %v3896, %v4574
    %v4583 = vadd.f32 %v3897, %v4575
    %v4584 = vpack.c.bf16 %v4578, %v4576
    %v4585 = vpack.c.bf16 %v4579, %v4577
    %v4586 = vpack.c.bf16 %v4582, %v4580
    %v4587 = vpack.c.bf16 %v4583, %v4581
    %v4589 = vsel %vm173, %v4585, 0
    %v4592 = vsel %vm173, %v4587, 0
    %4594 = vmatprep.subr.bf16.mxu0 0
    %4595 = vmatpush1.bf16.msra.mxu0 %v156
    %4596 = vmatprep.subr.bf16.mxu0 0
    %4597 = vmatpush1.bf16.msra.mxu0 %v155
    %4598 = vmatprep.subr.bf16.mxu0 0
    %4599 = vmatpush1.bf16.msra.mxu0 %v154
    %4600 = vmatprep.subr.bf16.mxu0 0
    %4601 = vmatpush1.bf16.msra.mxu0 %v153
    %4602 = vmatprep.subr.bf16.mxu0 0
    %4603 = vmatpush1.bf16.msra.mxu0 %v152
    %4604 = vmatprep.subr.bf16.mxu0 0
    %4605 = vmatpush1.bf16.msra.mxu0 %v151
    %4606 = vmatprep.subr.bf16.mxu0 0
    %4607 = vmatpush1.bf16.msra.mxu0 %v150
    %4608 = vmatprep.subr.bf16.mxu0 0
    %4609 = vmatpush1.bf16.msra.mxu0 %v149
    %4610 = vmatprep.subr.bf16.mxu0 0
    %4611 = vmatpush2.bf16.msra.mxu0 0
    %4612 = vmatprep.subr.bf16.mxu0 0
    %4613 = vmatpush2.bf16.msra.mxu0 0
    %4614 = vmatprep.subr.bf16.mxu0 0
    %4615 = vmatpush2.bf16.msra.mxu0 0
    %4616 = vmatprep.subr.bf16.mxu0 0
    %4617 = vmatpush2.bf16.msra.mxu0 0
    %4618 = vmatprep.subr.bf16.mxu0 0
    %4619 = vmatpush2.bf16.msra.mxu0 %v160
    %4620 = vmatprep.subr.bf16.mxu0 0
    %4621 = vmatpush2.bf16.msra.mxu0 %v159
    %4622 = vmatprep.subr.bf16.mxu0 0
    %4623 = vmatpush2.bf16.msra.mxu0 %v158
    %4624 = vmatprep.subr.bf16.mxu0 0
    %4625 = vmatpush2.bf16.msra.mxu0 %v157
    %4626 = vmatprep.mubr.bf16.mxu0 %v4589
    %4627 = vmatmul.mubr.bf16.gmra.mxu0 %v4584
    %v4628 = vpop.f32.mrf.mxu0
    %v4629 = vadd.f32 %v67, %v4628
    %v4630 = vpop.f32.mrf.mxu0
    %v4631 = vpop.f32.mrf.mxu0
    %v4632 = vadd.f32 %v67, %v4631
    %v4633 = vpop.f32.mrf.mxu0
    %4634 = vmatprep.mubr.bf16.mxu0 %v4592
    %4635 = vmatmul.mubr.bf16.gmra.mxu0 %v4586
    %v4636 = vpop.f32.mrf.mxu0
    %v4637 = vadd.f32 %v67, %v4636
    %v4638 = vpop.f32.mrf.mxu0
    %v4639 = vpop.f32.mrf.mxu0
    %v4640 = vadd.f32 %v67, %v4639
    %v4641 = vpop.f32.mrf.mxu0
    %4642 = vdwg.mxu0
    %v4643 = vmax.f32 %v4629, 0.0
    %v4644 = vmax.f32 %v4632, 0.0
    %v4645 = vmax.f32 %v4637, 0.0
    %v4646 = vmax.f32 %v4640, 0.0
    %v4647 = vpack.c.bf16 %v4644, %v4643
    %v4648 = vpack.c.bf16 %v4646, %v4645
    %4649 = vmatprep.subr.bf16.mxu0 %v298
    %4650 = vmatpush1.bf16.msra.mxu0 %v297
    %4651 = vmatprep.subr.bf16.mxu0 %v296
    %4652 = vmatpush1.bf16.msra.mxu0 %v295
    %4653 = vmatprep.subr.bf16.mxu0 %v294
    %4654 = vmatpush1.bf16.msra.mxu0 %v293
    %4655 = vmatprep.subr.bf16.mxu0 %v292
    %4656 = vmatpush1.bf16.msra.mxu0 %v291
    %4657 = vmatprep.subr.bf16.mxu0 %v290
    %4658 = vmatpush1.bf16.msra.mxu0 %v289
    %4659 = vmatprep.subr.bf16.mxu0 %v288
    %4660 = vmatpush1.bf16.msra.mxu0 %v287
    %4661 = vmatprep.subr.bf16.mxu0 %v286
    %4662 = vmatpush1.bf16.msra.mxu0 %v285
    %4663 = vmatprep.subr.bf16.mxu0 %v284
    %4664 = vmatpush1.bf16.msra.mxu0 %v283
    %4665 = vmatprep.subr.bf16.mxu0 0
    %4666 = vmatpush2.bf16.msra.mxu0 0
    %4667 = vmatprep.subr.bf16.mxu0 0
    %4668 = vmatpush2.bf16.msra.mxu0 0
    %4669 = vmatprep.subr.bf16.mxu0 0
    %4670 = vmatpush2.bf16.msra.mxu0 0
    %4671 = vmatprep.subr.bf16.mxu0 0
    %4672 = vmatpush2.bf16.msra.mxu0 0
    %4673 = vmatprep.subr.bf16.mxu0 0
    %4674 = vmatpush2.bf16.msra.mxu0 0
    %4675 = vmatprep.subr.bf16.mxu0 0
    %4676 = vmatpush2.bf16.msra.mxu0 0
    %4677 = vmatprep.subr.bf16.mxu0 0
    %4678 = vmatpush2.bf16.msra.mxu0 0
    %4679 = vmatprep.subr.bf16.mxu0 0
    %4680 = vmatpush2.bf16.msra.mxu0 0
    %4681 = vmatprep.mubr.bf16.mxu0 0
    %4682 = vmatmul.mubr.bf16.gmra.mxu0 %v4647
    %v4683 = vpop.f32.mrf.mxu0
    %v4684 = vadd.f32 %v74, %v4683
    %v4685 = vpop.f32.mrf.mxu0
    %v4686 = vadd.f32 %v78, %v4685
    %v4687 = vpop.f32.mrf.mxu0
    %v4688 = vadd.f32 %v74, %v4687
    %v4689 = vpop.f32.mrf.mxu0
    %v4690 = vadd.f32 %v78, %v4689
    %4691 = vmatprep.mubr.bf16.mxu0 0
    %4692 = vmatmul.mubr.bf16.gmra.mxu0 %v4648
    %v4693 = vpop.f32.mrf.mxu0
    %v4694 = vadd.f32 %v74, %v4693
    %v4695 = vpop.f32.mrf.mxu0
    %v4696 = vadd.f32 %v78, %v4695
    %v4697 = vpop.f32.mrf.mxu0
    %v4698 = vadd.f32 %v74, %v4697
    %v4699 = vpop.f32.mrf.mxu0
    %v4700 = vadd.f32 %v78, %v4699
    %4701 = vdwg.mxu0
    %v4702 = vadd.f32 %v4250, %v4534
    %v4703 = vadd.f32 %v4252, %v4536
    %v4704 = vadd.f32 %v4254, %v4538
    %v4705 = vadd.f32 %v4256, %v4540
    %v4706 = vadd.f32 %v4260, %v4544
    %v4707 = vadd.f32 %v4262, %v4546
    %v4708 = vadd.f32 %v4264, %v4548
    %v4709 = vadd.f32 %v4266, %v4550
    %v4710 = vmul.f32 %v4702, 3.0
    %v4711 = vmul.f32 %v4703, 3.0
    %v4712 = vmul.f32 %v4704, 3.0
    %v4713 = vmul.f32 %v4705, 3.0
    %v4714 = vmul.f32 %v4706, 3.0
    %v4715 = vmul.f32 %v4707, 3.0
    %v4716 = vmul.f32 %v4708, 3.0
    %v4717 = vmul.f32 %v4709, 3.0
    %v4718 = vadd.f32 %v3998, %v4710
    %v4719 = vadd.f32 %v4000, %v4711
    %v4720 = vadd.f32 %v4002, %v4712
    %v4721 = vadd.f32 %v4004, %v4713
    %v4722 = vadd.f32 %v4008, %v4714
    %v4723 = vadd.f32 %v4010, %v4715
    %v4724 = vadd.f32 %v4012, %v4716
    %v4725 = vadd.f32 %v4014, %v4717
    %v4726 = vmul.f32 %v4718, 0.03125
    %v4727 = vmul.f32 %v4719, 0.03125
    %v4728 = vmul.f32 %v4720, 0.03125
    %v4729 = vmul.f32 %v4721, 0.03125
    %v4730 = vmul.f32 %v4722, 0.03125
    %v4731 = vmul.f32 %v4723, 0.03125
    %v4732 = vmul.f32 %v4724, 0.03125
    %v4733 = vmul.f32 %v4725, 0.03125
    %v4734 = vadd.f32 %v3874, %v4726
    %v4735 = vadd.f32 %v3875, %v4727
    %v4736 = vadd.f32 %v3876, %v4728
    %v4737 = vadd.f32 %v3877, %v4729
    %v4738 = vadd.f32 %v3878, %v4730
    %v4739 = vadd.f32 %v3879, %v4731
    %v4740 = vadd.f32 %v3880, %v4732
    %v4741 = vadd.f32 %v3881, %v4733
    %v4742 = vadd.f32 %v4384, %v4684
    %v4743 = vadd.f32 %v4386, %v4686
    %v4744 = vadd.f32 %v4388, %v4688
    %v4745 = vadd.f32 %v4390, %v4690
    %v4746 = vadd.f32 %v4394, %v4694
    %v4747 = vadd.f32 %v4396, %v4696
    %v4748 = vadd.f32 %v4398, %v4698
    %v4749 = vadd.f32 %v4400, %v4700
    %v4750 = vmul.f32 %v4742, 3.0
    %v4751 = vmul.f32 %v4743, 3.0
    %v4752 = vmul.f32 %v4744, 3.0
    %v4753 = vmul.f32 %v4745, 3.0
    %v4754 = vmul.f32 %v4746, 3.0
    %v4755 = vmul.f32 %v4747, 3.0
    %v4756 = vmul.f32 %v4748, 3.0
    %v4757 = vmul.f32 %v4749, 3.0
    %v4758 = vadd.f32 %v4116, %v4750
    %v4759 = vadd.f32 %v4118, %v4751
    %v4760 = vadd.f32 %v4120, %v4752
    %v4761 = vadd.f32 %v4122, %v4753
    %v4762 = vadd.f32 %v4126, %v4754
    %v4763 = vadd.f32 %v4128, %v4755
    %v4764 = vadd.f32 %v4130, %v4756
    %v4765 = vadd.f32 %v4132, %v4757
    %v4766 = vmul.f32 %v4758, 0.03125
    %v4767 = vmul.f32 %v4759, 0.03125
    %v4768 = vmul.f32 %v4760, 0.03125
    %v4769 = vmul.f32 %v4761, 0.03125
    %v4770 = vmul.f32 %v4762, 0.03125
    %v4771 = vmul.f32 %v4763, 0.03125
    %v4772 = vmul.f32 %v4764, 0.03125
    %v4773 = vmul.f32 %v4765, 0.03125
    %v4774 = vadd.f32 %v3890, %v4766
    %v4775 = vadd.f32 %v3891, %v4767
    %v4776 = vadd.f32 %v3892, %v4768
    %v4777 = vadd.f32 %v3893, %v4769
    %v4778 = vadd.f32 %v3894, %v4770
    %v4779 = vadd.f32 %v3895, %v4771
    %v4780 = vadd.f32 %v3896, %v4772
    %v4781 = vadd.f32 %v3897, %v4773
    %v4782 = vsub.f32 %v3998, %v4250
    %v4783 = vsub.f32 %v4000, %v4252
    %v4784 = vsub.f32 %v4002, %v4254
    %v4785 = vsub.f32 %v4004, %v4256
    %v4786 = vsub.f32 %v4008, %v4260
    %v4787 = vsub.f32 %v4010, %v4262
    %v4788 = vsub.f32 %v4012, %v4264
    %v4789 = vsub.f32 %v4014, %v4266
    %v4790 = vadd.f32 %v4782, %v4534
    %v4791 = vadd.f32 %v4783, %v4536
    %v4792 = vadd.f32 %v4784, %v4538
    %v4793 = vadd.f32 %v4785, %v4540
    %v4794 = vadd.f32 %v4786, %v4544
    %v4795 = vadd.f32 %v4787, %v4546
    %v4796 = vadd.f32 %v4788, %v4548
    %v4797 = vadd.f32 %v4789, %v4550
    %v4798 = vmul.f32 %v4790, 0.25
    %v4799 = vmul.f32 %v4791, 0.25
    %v4800 = vmul.f32 %v4792, 0.25
    %v4801 = vmul.f32 %v4793, 0.25
    %v4802 = vmul.f32 %v4794, 0.25
    %v4803 = vmul.f32 %v4795, 0.25
    %v4804 = vmul.f32 %v4796, 0.25
    %v4805 = vmul.f32 %v4797, 0.25
    %v4806 = vadd.f32 %v3874, %v4798
    %v4807 = vadd.f32 %v3875, %v4799
    %v4808 = vadd.f32 %v3876, %v4800
    %v4809 = vadd.f32 %v3877, %v4801
    %v4810 = vadd.f32 %v3878, %v4802
    %v4811 = vadd.f32 %v3879, %v4803
    %v4812 = vadd.f32 %v3880, %v4804
    %v4813 = vadd.f32 %v3881, %v4805
    %v4814 = vsub.f32 %v4116, %v4384
    %v4815 = vsub.f32 %v4118, %v4386
    %v4816 = vsub.f32 %v4120, %v4388
    %v4817 = vsub.f32 %v4122, %v4390
    %v4818 = vsub.f32 %v4126, %v4394
    %v4819 = vsub.f32 %v4128, %v4396
    %v4820 = vsub.f32 %v4130, %v4398
    %v4821 = vsub.f32 %v4132, %v4400
    %v4822 = vadd.f32 %v4814, %v4684
    %v4823 = vadd.f32 %v4815, %v4686
    %v4824 = vadd.f32 %v4816, %v4688
    %v4825 = vadd.f32 %v4817, %v4690
    %v4826 = vadd.f32 %v4818, %v4694
    %v4827 = vadd.f32 %v4819, %v4696
    %v4828 = vadd.f32 %v4820, %v4698
    %v4829 = vadd.f32 %v4821, %v4700
    %v4830 = vmul.f32 %v4822, 0.25
    %v4831 = vmul.f32 %v4823, 0.25
    %v4832 = vmul.f32 %v4824, 0.25
    %v4833 = vmul.f32 %v4825, 0.25
    %v4834 = vmul.f32 %v4826, 0.25
    %v4835 = vmul.f32 %v4827, 0.25
    %v4836 = vmul.f32 %v4828, 0.25
    %v4837 = vmul.f32 %v4829, 0.25
    %v4838 = vadd.f32 %v3890, %v4830
    %v4839 = vadd.f32 %v3891, %v4831
    %v4840 = vadd.f32 %v3892, %v4832
    %v4841 = vadd.f32 %v3893, %v4833
    %v4842 = vadd.f32 %v3894, %v4834
    %v4843 = vadd.f32 %v3895, %v4835
    %v4844 = vadd.f32 %v3896, %v4836
    %v4845 = vadd.f32 %v3897, %v4837
    %v4846 = vpack.c.bf16 %v4808, %v4806
    %v4847 = vpack.c.bf16 %v4809, %v4807
    %v4848 = vpack.c.bf16 %v4812, %v4810
    %v4849 = vpack.c.bf16 %v4813, %v4811
    %v4851 = vsel %vm173, %v4847, 0
    %v4854 = vsel %vm173, %v4849, 0
    %4856 = vmatprep.subr.bf16.mxu0 0
    %4857 = vmatpush1.bf16.msra.mxu0 %v156
    %4858 = vmatprep.subr.bf16.mxu0 0
    %4859 = vmatpush1.bf16.msra.mxu0 %v155
    %4860 = vmatprep.subr.bf16.mxu0 0
    %4861 = vmatpush1.bf16.msra.mxu0 %v154
    %4862 = vmatprep.subr.bf16.mxu0 0
    %4863 = vmatpush1.bf16.msra.mxu0 %v153
    %4864 = vmatprep.subr.bf16.mxu0 0
    %4865 = vmatpush1.bf16.msra.mxu0 %v152
    %4866 = vmatprep.subr.bf16.mxu0 0
    %4867 = vmatpush1.bf16.msra.mxu0 %v151
    %4868 = vmatprep.subr.bf16.mxu0 0
    %4869 = vmatpush1.bf16.msra.mxu0 %v150
    %4870 = vmatprep.subr.bf16.mxu0 0
    %4871 = vmatpush1.bf16.msra.mxu0 %v149
    %4872 = vmatprep.subr.bf16.mxu0 0
    %4873 = vmatpush2.bf16.msra.mxu0 0
    %4874 = vmatprep.subr.bf16.mxu0 0
    %4875 = vmatpush2.bf16.msra.mxu0 0
    %4876 = vmatprep.subr.bf16.mxu0 0
    %4877 = vmatpush2.bf16.msra.mxu0 0
    %4878 = vmatprep.subr.bf16.mxu0 0
    %4879 = vmatpush2.bf16.msra.mxu0 0
    %4880 = vmatprep.subr.bf16.mxu0 0
    %4881 = vmatpush2.bf16.msra.mxu0 %v160
    %4882 = vmatprep.subr.bf16.mxu0 0
    %4883 = vmatpush2.bf16.msra.mxu0 %v159
    %4884 = vmatprep.subr.bf16.mxu0 0
    %4885 = vmatpush2.bf16.msra.mxu0 %v158
    %4886 = vmatprep.subr.bf16.mxu0 0
    %4887 = vmatpush2.bf16.msra.mxu0 %v157
    %4888 = vmatprep.mubr.bf16.mxu0 %v4851
    %4889 = vmatmul.mubr.bf16.gmra.mxu0 %v4846
    %v4890 = vpop.f32.mrf.mxu0
    %v4891 = vadd.f32 %v67, %v4890
    %v4892 = vpop.f32.mrf.mxu0
    %v4893 = vpop.f32.mrf.mxu0
    %v4894 = vadd.f32 %v67, %v4893
    %v4895 = vpop.f32.mrf.mxu0
    %4896 = vmatprep.mubr.bf16.mxu0 %v4854
    %4897 = vmatmul.mubr.bf16.gmra.mxu0 %v4848
    %v4898 = vpop.f32.mrf.mxu0
    %v4899 = vadd.f32 %v67, %v4898
    %v4900 = vpop.f32.mrf.mxu0
    %v4901 = vpop.f32.mrf.mxu0
    %v4902 = vadd.f32 %v67, %v4901
    %v4903 = vpop.f32.mrf.mxu0
    %4904 = vdwg.mxu0
    %v4905 = vmax.f32 %v4891, 0.0
    %v4906 = vmax.f32 %v4894, 0.0
    %v4907 = vmax.f32 %v4899, 0.0
    %v4908 = vmax.f32 %v4902, 0.0
    %v4909 = vpack.c.bf16 %v4906, %v4905
    %v4910 = vpack.c.bf16 %v4908, %v4907
    %4911 = vmatprep.subr.bf16.mxu0 %v298
    %4912 = vmatpush1.bf16.msra.mxu0 %v297
    %4913 = vmatprep.subr.bf16.mxu0 %v296
    %4914 = vmatpush1.bf16.msra.mxu0 %v295
    %4915 = vmatprep.subr.bf16.mxu0 %v294
    %4916 = vmatpush1.bf16.msra.mxu0 %v293
    %4917 = vmatprep.subr.bf16.mxu0 %v292
    %4918 = vmatpush1.bf16.msra.mxu0 %v291
    %4919 = vmatprep.subr.bf16.mxu0 %v290
    %4920 = vmatpush1.bf16.msra.mxu0 %v289
    %4921 = vmatprep.subr.bf16.mxu0 %v288
    %4922 = vmatpush1.bf16.msra.mxu0 %v287
    %4923 = vmatprep.subr.bf16.mxu0 %v286
    %4924 = vmatpush1.bf16.msra.mxu0 %v285
    %4925 = vmatprep.subr.bf16.mxu0 %v284
    %4926 = vmatpush1.bf16.msra.mxu0 %v283
    %4927 = vmatprep.subr.bf16.mxu0 0
    %4928 = vmatpush2.bf16.msra.mxu0 0
    %4929 = vmatprep.subr.bf16.mxu0 0
    %4930 = vmatpush2.bf16.msra.mxu0 0
    %4931 = vmatprep.subr.bf16.mxu0 0
    %4932 = vmatpush2.bf16.msra.mxu0 0
    %4933 = vmatprep.subr.bf16.mxu0 0
    %4934 = vmatpush2.bf16.msra.mxu0 0
    %4935 = vmatprep.subr.bf16.mxu0 0
    %4936 = vmatpush2.bf16.msra.mxu0 0
    %4937 = vmatprep.subr.bf16.mxu0 0
    %4938 = vmatpush2.bf16.msra.mxu0 0
    %4939 = vmatprep.subr.bf16.mxu0 0
    %4940 = vmatpush2.bf16.msra.mxu0 0
    %4941 = vmatprep.subr.bf16.mxu0 0
    %4942 = vmatpush2.bf16.msra.mxu0 0
    %4943 = vmatprep.mubr.bf16.mxu0 0
    %4944 = vmatmul.mubr.bf16.gmra.mxu0 %v4909
    %v4945 = vpop.f32.mrf.mxu0
    %v4946 = vadd.f32 %v74, %v4945
    %v4947 = vpop.f32.mrf.mxu0
    %v4948 = vadd.f32 %v78, %v4947
    %v4949 = vpop.f32.mrf.mxu0
    %v4950 = vadd.f32 %v74, %v4949
    %v4951 = vpop.f32.mrf.mxu0
    %v4952 = vadd.f32 %v78, %v4951
    %4953 = vmatprep.mubr.bf16.mxu0 0
    %4954 = vmatmul.mubr.bf16.gmra.mxu0 %v4910
    %v4955 = vpop.f32.mrf.mxu0
    %v4956 = vadd.f32 %v74, %v4955
    %v4957 = vpop.f32.mrf.mxu0
    %v4958 = vadd.f32 %v78, %v4957
    %v4959 = vpop.f32.mrf.mxu0
    %v4960 = vadd.f32 %v74, %v4959
    %v4961 = vpop.f32.mrf.mxu0
    %v4962 = vadd.f32 %v78, %v4961
    %4963 = vdwg.mxu0
    %v4964 = vpack.c.bf16 %v4840, %v4838
    %v4965 = vpack.c.bf16 %v4841, %v4839
    %v4966 = vpack.c.bf16 %v4844, %v4842
    %v4967 = vpack.c.bf16 %v4845, %v4843
    %v4969 = vsel %vm173, %v4965, 0
    %v4972 = vsel %vm173, %v4967, 0
    %4974 = vmatprep.subr.bf16.mxu0 0
    %4975 = vmatpush1.bf16.msra.mxu0 %v156
    %4976 = vmatprep.subr.bf16.mxu0 0
    %4977 = vmatpush1.bf16.msra.mxu0 %v155
    %4978 = vmatprep.subr.bf16.mxu0 0
    %4979 = vmatpush1.bf16.msra.mxu0 %v154
    %4980 = vmatprep.subr.bf16.mxu0 0
    %4981 = vmatpush1.bf16.msra.mxu0 %v153
    %4982 = vmatprep.subr.bf16.mxu0 0
    %4983 = vmatpush1.bf16.msra.mxu0 %v152
    %4984 = vmatprep.subr.bf16.mxu0 0
    %4985 = vmatpush1.bf16.msra.mxu0 %v151
    %4986 = vmatprep.subr.bf16.mxu0 0
    %4987 = vmatpush1.bf16.msra.mxu0 %v150
    %4988 = vmatprep.subr.bf16.mxu0 0
    %4989 = vmatpush1.bf16.msra.mxu0 %v149
    %4990 = vmatprep.subr.bf16.mxu0 0
    %4991 = vmatpush2.bf16.msra.mxu0 0
    %4992 = vmatprep.subr.bf16.mxu0 0
    %4993 = vmatpush2.bf16.msra.mxu0 0
    %4994 = vmatprep.subr.bf16.mxu0 0
    %4995 = vmatpush2.bf16.msra.mxu0 0
    %4996 = vmatprep.subr.bf16.mxu0 0
    %4997 = vmatpush2.bf16.msra.mxu0 0
    %4998 = vmatprep.subr.bf16.mxu0 0
    %4999 = vmatpush2.bf16.msra.mxu0 %v160
    %5000 = vmatprep.subr.bf16.mxu0 0
    %5001 = vmatpush2.bf16.msra.mxu0 %v159
    %5002 = vmatprep.subr.bf16.mxu0 0
    %5003 = vmatpush2.bf16.msra.mxu0 %v158
    %5004 = vmatprep.subr.bf16.mxu0 0
    %5005 = vmatpush2.bf16.msra.mxu0 %v157
    %5006 = vmatprep.mubr.bf16.mxu0 %v4969
    %5007 = vmatmul.mubr.bf16.gmra.mxu0 %v4964
    %v5008 = vpop.f32.mrf.mxu0
    %v5009 = vadd.f32 %v67, %v5008
    %v5010 = vpop.f32.mrf.mxu0
    %v5011 = vpop.f32.mrf.mxu0
    %v5012 = vadd.f32 %v67, %v5011
    %v5013 = vpop.f32.mrf.mxu0
    %5014 = vmatprep.mubr.bf16.mxu0 %v4972
    %5015 = vmatmul.mubr.bf16.gmra.mxu0 %v4966
    %v5016 = vpop.f32.mrf.mxu0
    %v5017 = vadd.f32 %v67, %v5016
    %v5018 = vpop.f32.mrf.mxu0
    %v5019 = vpop.f32.mrf.mxu0
    %v5020 = vadd.f32 %v67, %v5019
    %v5021 = vpop.f32.mrf.mxu0
    %5022 = vdwg.mxu0
    %v5023 = vmax.f32 %v5009, 0.0
    %v5024 = vmax.f32 %v5012, 0.0
    %v5025 = vmax.f32 %v5017, 0.0
    %v5026 = vmax.f32 %v5020, 0.0
    %v5027 = vpack.c.bf16 %v5024, %v5023
    %v5028 = vpack.c.bf16 %v5026, %v5025
    %5029 = vmatprep.subr.bf16.mxu0 %v298
    %5030 = vmatpush1.bf16.msra.mxu0 %v297
    %5031 = vmatprep.subr.bf16.mxu0 %v296
    %5032 = vmatpush1.bf16.msra.mxu0 %v295
    %5033 = vmatprep.subr.bf16.mxu0 %v294
    %5034 = vmatpush1.bf16.msra.mxu0 %v293
    %5035 = vmatprep.subr.bf16.mxu0 %v292
    %5036 = vmatpush1.bf16.msra.mxu0 %v291
    %5037 = vmatprep.subr.bf16.mxu0 %v290
    %5038 = vmatpush1.bf16.msra.mxu0 %v289
    %5039 = vmatprep.subr.bf16.mxu0 %v288
    %5040 = vmatpush1.bf16.msra.mxu0 %v287
    %5041 = vmatprep.subr.bf16.mxu0 %v286
    %5042 = vmatpush1.bf16.msra.mxu0 %v285
    %5043 = vmatprep.subr.bf16.mxu0 %v284
    %5044 = vmatpush1.bf16.msra.mxu0 %v283
    %5045 = vmatprep.subr.bf16.mxu0 0
    %5046 = vmatpush2.bf16.msra.mxu0 0
    %5047 = vmatprep.subr.bf16.mxu0 0
    %5048 = vmatpush2.bf16.msra.mxu0 0
    %5049 = vmatprep.subr.bf16.mxu0 0
    %5050 = vmatpush2.bf16.msra.mxu0 0
    %5051 = vmatprep.subr.bf16.mxu0 0
    %5052 = vmatpush2.bf16.msra.mxu0 0
    %5053 = vmatprep.subr.bf16.mxu0 0
    %5054 = vmatpush2.bf16.msra.mxu0 0
    %5055 = vmatprep.subr.bf16.mxu0 0
    %5056 = vmatpush2.bf16.msra.mxu0 0
    %5057 = vmatprep.subr.bf16.mxu0 0
    %5058 = vmatpush2.bf16.msra.mxu0 0
    %5059 = vmatprep.subr.bf16.mxu0 0
    %5060 = vmatpush2.bf16.msra.mxu0 0
    %5061 = vmatprep.mubr.bf16.mxu0 0
    %5062 = vmatmul.mubr.bf16.gmra.mxu0 %v5027
    %v5063 = vpop.f32.mrf.mxu0
    %v5064 = vadd.f32 %v74, %v5063
    %v5065 = vpop.f32.mrf.mxu0
    %v5066 = vadd.f32 %v78, %v5065
    %v5067 = vpop.f32.mrf.mxu0
    %v5068 = vadd.f32 %v74, %v5067
    %v5069 = vpop.f32.mrf.mxu0
    %v5070 = vadd.f32 %v78, %v5069
    %5071 = vmatprep.mubr.bf16.mxu0 0
    %5072 = vmatmul.mubr.bf16.gmra.mxu0 %v5028
    %v5073 = vpop.f32.mrf.mxu0
    %v5074 = vadd.f32 %v74, %v5073
    %v5075 = vpop.f32.mrf.mxu0
    %v5076 = vadd.f32 %v78, %v5075
    %v5077 = vpop.f32.mrf.mxu0
    %v5078 = vadd.f32 %v74, %v5077
    %v5079 = vpop.f32.mrf.mxu0
    %v5080 = vadd.f32 %v78, %v5079
    %5081 = vdwg.mxu0
    %v5082 = vmul.f32 %v4946, 0.03125
    %v5083 = vmul.f32 %v4948, 0.03125
    %v5084 = vmul.f32 %v4950, 0.03125
    %v5085 = vmul.f32 %v4952, 0.03125
    %v5086 = vmul.f32 %v4956, 0.03125
    %v5087 = vmul.f32 %v4958, 0.03125
    %v5088 = vmul.f32 %v4960, 0.03125
    %v5089 = vmul.f32 %v4962, 0.03125
    %v5090 = vadd.f32 %v4734, %v5082
    %v5091 = vadd.f32 %v4735, %v5083
    %v5092 = vadd.f32 %v4736, %v5084
    %v5093 = vadd.f32 %v4737, %v5085
    %v5094 = vadd.f32 %v4738, %v5086
    %v5095 = vadd.f32 %v4739, %v5087
    %v5096 = vadd.f32 %v4740, %v5088
    %v5097 = vadd.f32 %v4741, %v5089
    %v5098 = vmul.f32 %v5064, 0.03125
    %v5099 = vmul.f32 %v5066, 0.03125
    %v5100 = vmul.f32 %v5068, 0.03125
    %v5101 = vmul.f32 %v5070, 0.03125
    %v5102 = vmul.f32 %v5074, 0.03125
    %v5103 = vmul.f32 %v5076, 0.03125
    %v5104 = vmul.f32 %v5078, 0.03125
    %v5105 = vmul.f32 %v5080, 0.03125
    %v5106 = vadd.f32 %v4774, %v5098
    %v5107 = vadd.f32 %v4775, %v5099
    %v5108 = vadd.f32 %v4776, %v5100
    %v5109 = vadd.f32 %v4777, %v5101
    %v5110 = vadd.f32 %v4778, %v5102
    %v5111 = vadd.f32 %v4779, %v5103
    %v5112 = vadd.f32 %v4780, %v5104
    %v5113 = vadd.f32 %v4781, %v5105
    %5114 = vst [vmem:[#allocation2] sm:$0xff] %v5090
    %5115 = vst.msk [vmem:[#allocation2 + $0x8] sm:$0xff] %vm173, %v5091
    %5116 = vst [vmem:[#allocation2 + $0x10] sm:$0xff] %v5092
    %5117 = vst.msk [vmem:[#allocation2 + $0x18] sm:$0xff] %vm173, %v5093
    %5118 = vst [vmem:[#allocation2 + $0x20] sm:$0xff] %v5094
    %5119 = vst.msk [vmem:[#allocation2 + $0x28] sm:$0xff] %vm173, %v5095
    %5120 = vst [vmem:[#allocation2 + $0x30] sm:$0xff] %v5096
    %5121 = vst.msk [vmem:[#allocation2 + $0x38] sm:$0xff] %vm173, %v5097
    %5122 = vst [vmem:[#allocation2 + $0x40] sm:$0xff] %v5106
    %5123 = vst.msk [vmem:[#allocation2 + $0x48] sm:$0xff] %vm173, %v5107
    %5124 = vst [vmem:[#allocation2 + $0x50] sm:$0xff] %v5108
    %5125 = vst.msk [vmem:[#allocation2 + $0x58] sm:$0xff] %vm173, %v5109
    %5126 = vst [vmem:[#allocation2 + $0x60] sm:$0xff] %v5110
    %5127 = vst.msk [vmem:[#allocation2 + $0x68] sm:$0xff] %vm173, %v5111
    %5128 = vst [vmem:[#allocation2 + $0x70] sm:$0xff] %v5112
    %5129 = vst.msk [vmem:[#allocation2 + $0x78] sm:$0xff] %vm173, %v5113
    // Predicated region
    $region22: #{tpu_custom_call.1} parent=1 // pred_check
      _
    $region23: #{tpu_custom_call.1} parent=1 // pred_check_branch
      %5131 = sbr.rel (0) target = $region25
    $region24: #{tpu_custom_call.1} parent=1 // pred_region
      %s5133 = ssub.s32 2048, 2048
      %5134 = vsyncadd [#allocation3], %s5133
      %s5135 = sshll.u32 [#allocation2], 4
      %s5136 = int_to_ptr.vmem [resolvable:$true] %s5135
      %5141 = dma.vmem_to_hbm [thread:$0]  %s5136, 2048, %s5, [#allocation3], 256, 256, 16
    $region25: #{tpu_custom_call.1} parent=1 // pred_fallthru
      _
    // Predicated region
    $region26: #{tpu_custom_call.1} parent=1 // pred_check
      _
    $region27: #{tpu_custom_call.1} parent=1 // pred_check_branch
      %5143 = sbr.rel (0) target = $region29
    $region28: #{tpu_custom_call.1} parent=1 // pred_region
      %5144 = dma.done [#allocation3], 2048
    $region29: #{tpu_custom_call.1} parent=1 // pred_fallthru
      _
    %5145 = vsyncpa [#allocation3], 1

</llo_original>
